<compile_context>
chip_gen: v7x
topology: tpu7x:2x2x1
jax: 0.10.0
libtpu: 0.0.40
codegen_flags: <defaults>
</compile_context>

<pallas_src>
from functools import partial

import jax
import jax.numpy as jnp
from jax import lax
from jax.experimental import pallas as pl
from jax.experimental.pallas import tpu as pltpu

EPS = 1e-5


# ----------------------------- Pallas kernels ------------------------------

def _conv_bn_kernel(x_ref, w_ref, b_ref, o_ref, acc_ref, *, offsets, cin, relu):
    """One padded depth-slice of the input per grid step; grid axis 2 = depth tap.

    x_ref:  (P, Cin)          bf16   flattened, padded (H,W) plane for depth d*s+kd
    w_ref:  (KH*KW*Cin, Cout) bf16   weight rows for this depth tap (BN scale folded)
    b_ref:  (1, Cout)         f32    BN bias
    o_ref:  (R, Cout)                output rows (R = Ho*Wp, incl. discarded cols)
    acc_ref:(R, Cout)         f32    accumulator held across the kd axis
    """
    kd = pl.program_id(2)

    @pl.when(kd == 0)
    def _init():
        acc_ref[...] = jnp.zeros_like(acc_ref)

    R = acc_ref.shape[0]
    acc = acc_ref[...]
    for t, off in enumerate(offsets):                     # static (kh, kw) taps
        a = x_ref[off:off + R, :]                         # (R, Cin)    unit-stride
        w = w_ref[t * cin:(t + 1) * cin, :]               # (Cin, Cout)
        acc = acc + jnp.dot(a, w, preferred_element_type=jnp.float32)
    acc_ref[...] = acc

    @pl.when(kd == pl.num_programs(2) - 1)
    def _finalize():
        y = acc_ref[...] + b_ref[...]                     # f32 epilogue
        if relu:
            y = jnp.maximum(y, 0.0)
        o_ref[...] = y.astype(o_ref.dtype)


def _deconv_redir_kernel(x_ref, xph_ref, w_ref, wr_ref, b_ref, o_ref, acc_ref,
                         *, offsets, cin):
    """Sub-pixel (8-phase) deconv + BN3 fused with the 1x1x1 redir conv + BNr,
    add and ReLU.  Grid axis 2 = depth tap (size 2).

    x_ref:   (P, 2C)      bf16  padded y2 plane for depth d+kd
    xph_ref: (R, 8C)      bf16  phase-rearranged residual input x
    w_ref:   (4*2C, 8C)   bf16  sub-pixel deconv weights for this depth tap
    wr_ref:  (8C, 8C)     bf16  kron(I8, Wr) redir weights (BNr scale folded)
    b_ref:   (1, 8C)      f32   tile(b3 + br, 8)
    """
    kd = pl.program_id(2)

    @pl.when(kd == 0)
    def _init():
        # redir 1x1x1 conv initializes the accumulator (added exactly once).
        acc_ref[...] = jnp.dot(xph_ref[...], wr_ref[...],
                               preferred_element_type=jnp.float32)

    R = acc_ref.shape[0]
    acc = acc_ref[...]
    for t, off in enumerate(offsets):
        a = x_ref[off:off + R, :]
        w = w_ref[t * cin:(t + 1) * cin, :]
        acc = acc + jnp.dot(a, w, preferred_element_type=jnp.float32)
    acc_ref[...] = acc

    @pl.when(kd == pl.num_programs(2) - 1)
    def _finalize():
        o_ref[...] = jnp.maximum(acc_ref[...] + b_ref[...], 0.0).astype(o_ref.dtype)


# ------------------------------- JAX glue -----------------------------------

def bn_fold(gamma, beta, mean, var):
    scale = gamma / jnp.sqrt(var + EPS)
    bias = beta - mean * scale
    return scale.astype(jnp.float32), bias.astype(jnp.float32)


def _plane_layout(H, W, pad_lo, pad_hi, K, stride):
    Hp = H + pad_lo + pad_hi
    Wp = W + pad_lo + pad_hi
    Ho = (Hp - K) // stride + 1
    Wo = (Wp - K) // stride + 1
    R = Ho * Wp                       # output rows; cols [Wo, Wp) per row are garbage
    offsets = [kh * Wp + kw for kh in range(K) for kw in range(K)]
    P = max(Hp * Wp, max(offsets) + stride * (R - 1) + 1)
    return Hp, Wp, Ho, Wo, R, offsets, P


def _to_planes(x, pad_lo, pad_hi, P, dtype):
    """(N, D, H, W, C) -> zero-padded, plane-flattened (N, Dp, P, C)."""
    xp = jnp.pad(x, ((0, 0), (pad_lo, pad_hi), (pad_lo, pad_hi),
                     (pad_lo, pad_hi), (0, 0)))
    N, Dp, Hp, Wp, C = xp.shape
    planes = xp.reshape(N, Dp, Hp * Wp, C)
    if P > Hp * Wp:
        planes = jnp.pad(planes, ((0, 0), (0, 0), (0, P - Hp * Wp), (0, 0)))
    return planes.astype(dtype)


def fused_conv3d_bn_relu(x, w_pt, bn, *, stride, pad, relu, out_dtype):
    """Conv3d (PyTorch weight (Cout,Cin,K,K,K)) + folded BN (+ReLU), fused im2col."""
    N, D, H, W, Cin = x.shape
    Cout, _, K, _, _ = w_pt.shape
    Hp, Wp, Ho, Wo, R, offsets, P = _plane_layout(H, W, pad, pad, K, stride)
    Do = (D + 2 * pad - K) // stride + 1

    planes = _to_planes(x, pad, pad, P, jnp.bfloat16)
    if stride == 2:
        # De-interleave plane rows so every stride-2 tap becomes a unit-stride slice.
        even = planes[:, :, 0::2, :]
        odd = planes[:, :, 1::2, :]
        E = even.shape[2]
        planes = jnp.concatenate([even, odd], axis=2)
        offsets = [(o // 2) if (o % 2 == 0) else (E + o // 2) for o in offsets]
    P = planes.shape[2]

    scale, bias = bn_fold(*bn)
    wm = jnp.transpose(w_pt, (2, 3, 4, 1, 0)).reshape(K, K * K * Cin, Cout)
    wm = (wm * scale[None, None, :]).astype(jnp.bfloat16)   # fold BN scale
    bias2 = bias.reshape(1, Cout)

    out = pl.pallas_call(
        partial(_conv_bn_kernel, offsets=tuple(offsets), cin=Cin, relu=relu),
        out_shape=jax.ShapeDtypeStruct((N, Do, R, Cout), out_dtype),
        grid_spec=pltpu.PrefetchScalarGridSpec(
            num_scalar_prefetch=0,
            grid=(N, Do, K),
            in_specs=[
                pl.BlockSpec((None, None, P, Cin),
                             lambda n, d, kd: (n, d * stride + kd, 0, 0)),
                pl.BlockSpec((None, K * K * Cin, Cout),
                             lambda n, d, kd: (kd, 0, 0)),
                pl.BlockSpec((1, Cout), lambda n, d, kd: (0, 0)),
            ],
            out_specs=pl.BlockSpec((None, None, R, Cout),
                                   lambda n, d, kd: (n, d, 0, 0)),
            scratch_shapes=[pltpu.VMEM((R, Cout), jnp.float32)],
        ),
        compiler_params=pltpu.CompilerParams(
            dimension_semantics=("parallel", "parallel", "arbitrary")),
    )(planes, wm, bias2)

    return out.reshape(N, Do, Ho, Wp, Cout)[:, :, :, :Wo, :]


def fused_deconv_redir_relu(y2, x, wt, bn3, wr_pt, bnr):
    """relu( BN3(ConvTranspose3d(y2)) + BNr(1x1x1 conv(x)) ), fully fused."""
    N, D1, H1, W1, Cin2 = y2.shape
    C = x.shape[-1]
    Cp = 8 * C                                    # 8 output phases * C channels
    K = 2                                         # sub-pixel taps per dim
    Hp, Wp, Ho, Wo, R, offsets, P = _plane_layout(H1, W1, 0, 1, K, 1)

    planes = _to_planes(y2, 0, 1, P, jnp.bfloat16)

    # Sub-pixel deconv weight:  Wd[td,(th,tw,cin),(pd,ph,pw,cout)] = wt[cin,cout,k]
    # with k = p + 1 - 2*t (valid taps only); BN3 scale folded into columns.
    s3, b3 = bn_fold(*bn3)
    Wd = jnp.zeros((2, 2, 2, Cin2, 2, 2, 2, C), jnp.float32)
    for td in range(2):
        for th in range(2):
            for tw in range(2):
                for pd in range(2):
                    for ph in range(2):
                        for pw in range(2):
                            kd = pd + 1 - 2 * td
                            kh = ph + 1 - 2 * th
                            kw = pw + 1 - 2 * tw
                            if 0 <= kd < 3 and 0 <= kh < 3 and 0 <= kw < 3:
                                Wd = Wd.at[td, th, tw, :, pd, ph, pw, :].set(
                                    wt[:, :, kd, kh, kw])
    Wd = (Wd.reshape(2, 4 * Cin2, Cp) * jnp.tile(s3, 8)[None, None, :]
          ).astype(jnp.bfloat16)

    # redir 1x1x1 conv as a block-diagonal (per-phase) matrix, BNr scale folded.
    sr, br = bn_fold(*bnr)
    wr_m = jnp.transpose(wr_pt[:, :, 0, 0, 0])            # (Cin=C, Cout=C)
    wr_blk = jnp.kron(jnp.eye(8, dtype=jnp.float32),
                      wr_m * sr[None, :]).astype(jnp.bfloat16)

    bias = jnp.tile(b3 + br, 8).reshape(1, Cp)

    # x rearranged into the 8 output phases, row-aligned with the deconv output.
    xph = x.reshape(N, D1, 2, H1, 2, W1, 2, C).transpose(0, 1, 3, 5, 2, 4, 6, 7)
    xph = xph.reshape(N, D1, H1, W1, Cp)
    xph = jnp.pad(xph, ((0, 0), (0, 0), (0, 0), (0, Wp - W1), (0, 0)))
    xph = xph.reshape(N, D1, R, Cp).astype(jnp.bfloat16)

    out = pl.pallas_call(
        partial(_deconv_redir_kernel, offsets=tuple(offsets), cin=Cin2),
        out_shape=jax.ShapeDtypeStruct((N, D1, R, Cp), jnp.float32),
        grid_spec=pltpu.PrefetchScalarGridSpec(
            num_scalar_prefetch=0,
            grid=(N, D1, K),
            in_specs=[
                pl.BlockSpec((None, None, P, Cin2),
                             lambda n, d, kd: (n, d + kd, 0, 0)),
                pl.BlockSpec((None, None, R, Cp),
                             lambda n, d, kd: (n, d, 0, 0)),
                pl.BlockSpec((None, 4 * Cin2, Cp),
                             lambda n, d, kd: (kd, 0, 0)),
                pl.BlockSpec((Cp, Cp), lambda n, d, kd: (0, 0)),
                pl.BlockSpec((1, Cp), lambda n, d, kd: (0, 0)),
            ],
            out_specs=pl.BlockSpec((None, None, R, Cp),
                                   lambda n, d, kd: (n, d, 0, 0)),
            scratch_shapes=[pltpu.VMEM((R, Cp), jnp.float32)],
        ),
        compiler_params=pltpu.CompilerParams(
            dimension_semantics=("parallel", "parallel", "arbitrary")),
    )(planes, xph, Wd, wr_blk, bias)

    # un-shuffle the 8 phases back into the doubled spatial resolution.
    out = out.reshape(N, D1, H1, Wp, 2, 2, 2, C)[:, :, :, :W1]
    out = out.transpose(0, 1, 4, 2, 5, 3, 6, 7)
    return out.reshape(N, 2 * D1, 2 * H1, 2 * W1, C)


def multi_aggregation_forward(x_ndhwc, params):
    # conv1: Conv3d(C, 2C, 3, stride=2, pad=1) + BN + ReLU
    y1 = fused_conv3d_bn_relu(x_ndhwc, params["w1"], params["bn1"],
                              stride=2, pad=1, relu=True, out_dtype=jnp.bfloat16)
    # conv2: Conv3d(2C, 2C, 3, stride=1, pad=1) + BN + ReLU
    y2 = fused_conv3d_bn_relu(y1, params["w2"], params["bn2"],
                              stride=1, pad=1, relu=True, out_dtype=jnp.bfloat16)
    # conv3: ConvTranspose3d(2C, C, 3, s=2, p=1, op=1) + BN, redir 1x1x1 + BN,
    #        add + ReLU — all fused in one kernel (sub-pixel decomposition).
    return fused_deconv_redir_relu(y2, x_ndhwc, params["w3"], params["bn3"],
                                   params["wr"], params["bnr"])


# ------------------------ pure-JAX reference (for check) --------------------

def ref_forward(x, params):
    dn = ("NDHWC", "DHWIO", "NDHWC")

    def conv(x, w_pt, stride, pad):
        w = jnp.transpose(w_pt, (2, 3, 4, 1, 0))  # (K,K,K,Cin,Cout)
        return lax.conv_general_dilated(x, w, (stride,) * 3, [(pad, pad)] * 3,
                                        dimension_numbers=dn)

    def bn(y, g, b, m, v):
        return (y - m) / jnp.sqrt(v + EPS) * g + b

    y1 = jax.nn.relu(bn(conv(x, params["w1"], 2, 1), *params["bn1"]))
    y2 = jax.nn.relu(bn(conv(y1, params["w2"], 1, 1), *params["bn2"]))

    wt = params["w3"]  # (Cin, Cout, K, K, K)
    w3_dhwio = jnp.transpose(jnp.flip(wt, axis=(2, 3, 4)), (2, 3, 4, 0, 1))
    y3 = lax.conv_general_dilated(y2, w3_dhwio, (1, 1, 1),
                                  [(1, 2), (1, 2), (1, 2)],
                                  lhs_dilation=(2, 2, 2), dimension_numbers=dn)
    y3 = bn(y3, *params["bn3"])
    yr = bn(conv(x, params["wr"], 1, 0), *params["bnr"])
    return jax.nn.relu(y3 + yr)


# --------------------------------- main --------------------------------------

def make_params(key, C):
    ks = jax.random.split(key, 24)

    def winit(k, shape):
        fan_in = 1
        for s in shape[1:]:
            fan_in *= s
        return jax.random.normal(k, shape, jnp.float32) / jnp.sqrt(fan_in)

    def bninit(k0, k1, k2, k3, ch):
        gamma = 1.0 + 0.1 * jax.random.normal(k0, (ch,), jnp.float32)
        beta = 0.1 * jax.random.normal(k1, (ch,), jnp.float32)
        mean = 0.1 * jax.random.normal(k2, (ch,), jnp.float32)
        var = 1.0 + 0.1 * jax.random.uniform(k3, (ch,), jnp.float32)
        return (gamma, beta, mean, var)

    return {
        "w1": winit(ks[0], (2 * C, C, 3, 3, 3)),
        "bn1": bninit(ks[1], ks[2], ks[3], ks[4], 2 * C),
        "w2": winit(ks[5], (2 * C, 2 * C, 3, 3, 3)),
        "bn2": bninit(ks[6], ks[7], ks[8], ks[9], 2 * C),
        # ConvTranspose3d weight layout: (in_channels=2C, out_channels=C, 3,3,3)
        "w3": winit(ks[10], (2 * C, C, 3, 3, 3)),
        "bn3": bninit(ks[11], ks[12], ks[13], ks[14], C),
        "wr": winit(ks[15], (C, C, 1, 1, 1)),
        "bnr": bninit(ks[16], ks[17], ks[18], ks[19], C),
    }


if __name__ == "__main__":
    key = jax.random.PRNGKey(0)
    kx, kp = jax.random.split(key)

    N, C, D, H, W = 2, 4, 8, 8, 8
    x_ncdhw = jax.random.normal(kx, (N, C, D, H, W), jnp.float32)  # PyTorch layout
    x_ndhwc = jnp.transpose(x_ncdhw, (0, 2, 3, 4, 1))              # kernel layout

    params = make_params(kp, C)

    out = jax.jit(multi_aggregation_forward)(x_ndhwc, params)
    out = jax.block_until_ready(out)

    ref = jax.block_until_ready(ref_forward(x_ndhwc, params))
    assert out.shape == (N, D, H, W, C)
    max_err = float(jnp.max(jnp.abs(out - ref)))
    # bf16 matmul operands (f32 accumulation / f32 epilogue) vs f32 reference.
    assert max_err < 5e-2, f"mismatch vs reference: {max_err}"

    print("KERNEL_OK")
</pallas_src>

<mosaic_0001>
module attributes {stable_mosaic.version = 11 : i64} {
  func.func @_conv_bn_kernel(%arg0: i32, %arg1: i32, %arg2: i32, %arg3: memref<1x1x101x4xbf16, #tpu.memory_space<vmem>>, %arg4: memref<1x36x8xbf16, #tpu.memory_space<vmem>>, %arg5: memref<1x8xf32, #tpu.memory_space<vmem>>, %arg6: memref<1x1x40x8xbf16, #tpu.memory_space<vmem>>, %arg7: memref<40x8xf32, #tpu.memory_space<vmem>>) attributes {dimension_semantics = [#tpu.dimension_semantics<parallel>, #tpu.dimension_semantics<parallel>, #tpu.dimension_semantics<arbitrary>], iteration_bounds = array<i64: 2, 4, 3>, scalar_prefetch = 0 : i64, scratch_operands = 1 : i64, tpu.core_type = #tpu.core_type<tc>, window_params = [{transform_indices = @transform_0, window_bounds = array<i64: 1, 1, 101, 4>}, {transform_indices = @transform_1, window_bounds = array<i64: 1, 36, 8>}, {pipeline_mode = #tpu.pipeline_mode<synchronous>, transform_indices = @transform_2, window_bounds = array<i64: 1, 8>}, {transform_indices = @transform_3, window_bounds = array<i64: 1, 1, 40, 8>}]} {
    %c0_i32 = arith.constant 0 : i32
    %0 = arith.cmpi eq, %arg2, %c0_i32 : i32
    %1 = arith.extui %0 : i1 to i32
    %c0_i32_0 = arith.constant 0 : i32
    %2 = arith.cmpi ne, %1, %c0_i32_0 : i32
    scf.if %2 {
      %cst_60 = arith.constant 0.000000e+00 : f32
      %62 = vector.broadcast %cst_60 : f32 to vector<40x8xf32>
      %c0_61 = arith.constant 0 : index
      %c0_62 = arith.constant 0 : index
      %63 = vector.load %arg7[%c0_61, %c0_62] : memref<40x8xf32, #tpu.memory_space<vmem>>, vector<40x8xf32>
      tpu.vector_store %arg7[%c0_61, %c0_62], %62 {strides = array<i32>} : memref<40x8xf32, #tpu.memory_space<vmem>>, vector<40x8xf32>,
    } else {
    }
    %c0 = arith.constant 0 : index
    %c0_1 = arith.constant 0 : index
    %3 = vector.load %arg7[%c0, %c0_1] : memref<40x8xf32, #tpu.memory_space<vmem>>, vector<40x8xf32>
    %c0_2 = arith.constant 0 : index
    %c0_3 = arith.constant 0 : index
    %c0_4 = arith.constant 0 : index
    %c0_5 = arith.constant 0 : index
    %4 = vector.load %arg3[%c0_2, %c0_3, %c0_4, %c0_5] : memref<1x1x101x4xbf16, #tpu.memory_space<vmem>>, vector<1x1x40x4xbf16>
    %5 = vector.shape_cast %4 : vector<1x1x40x4xbf16> to vector<40x4xbf16>
    %c0_6 = arith.constant 0 : index
    %c0_7 = arith.constant 0 : index
    %c0_8 = arith.constant 0 : index
    %6 = vector.load %arg4[%c0_6, %c0_7, %c0_8] : memref<1x36x8xbf16, #tpu.memory_space<vmem>>, vector<1x4x8xbf16>
    %7 = vector.shape_cast %6 : vector<1x4x8xbf16> to vector<4x8xbf16>
    %cst = arith.constant dense<0.000000e+00> : vector<40x8xf32>
    %8 = tpu.matmul %5, %7, %cst {dimension_numbers = #tpu.dot_dimension_numbers<[1], [0], [0], [1], [0, 0, 1, 1], [], []>} : vector<40x4xbf16>, vector<4x8xbf16>, vector<40x8xf32> -> vector<40x8xf32>
    %9 = arith.addf %3, %8 : vector<40x8xf32>
    %c0_9 = arith.constant 0 : index
    %c0_10 = arith.constant 0 : index
    %c51 = arith.constant 51 : index
    %c0_11 = arith.constant 0 : index
    %10 = vector.load %arg3[%c0_9, %c0_10, %c51, %c0_11] : memref<1x1x101x4xbf16, #tpu.memory_space<vmem>>, vector<1x1x40x4xbf16>
    %11 = vector.shape_cast %10 : vector<1x1x40x4xbf16> to vector<40x4xbf16>
    %c0_12 = arith.constant 0 : index
    %c4 = arith.constant 4 : index
    %c0_13 = arith.constant 0 : index
    %12 = vector.load %arg4[%c0_12, %c4, %c0_13] : memref<1x36x8xbf16, #tpu.memory_space<vmem>>, vector<1x4x8xbf16>
    %13 = vector.shape_cast %12 : vector<1x4x8xbf16> to vector<4x8xbf16>
    %cst_14 = arith.constant dense<0.000000e+00> : vector<40x8xf32>
    %14 = tpu.matmul %11, %13, %cst_14 {dimension_numbers = #tpu.dot_dimension_numbers<[1], [0], [0], [1], [0, 0, 1, 1], [], []>} : vector<40x4xbf16>, vector<4x8xbf16>, vector<40x8xf32> -> vector<40x8xf32>
    %15 = arith.addf %9, %14 : vector<40x8xf32>
    %c0_15 = arith.constant 0 : index
    %c0_16 = arith.constant 0 : index
    %c1 = arith.constant 1 : index
    %c0_17 = arith.constant 0 : index
    %16 = vector.load %arg3[%c0_15, %c0_16, %c1, %c0_17] : memref<1x1x101x4xbf16, #tpu.memory_space<vmem>>, vector<1x1x40x4xbf16>
    %17 = vector.shape_cast %16 : vector<1x1x40x4xbf16> to vector<40x4xbf16>
    %c0_18 = arith.constant 0 : index
    %c8 = arith.constant 8 : index
    %c0_19 = arith.constant 0 : index
    %18 = vector.load %arg4[%c0_18, %c8, %c0_19] : memref<1x36x8xbf16, #tpu.memory_space<vmem>>, vector<1x4x8xbf16>
    %19 = vector.shape_cast %18 : vector<1x4x8xbf16> to vector<4x8xbf16>
    %cst_20 = arith.constant dense<0.000000e+00> : vector<40x8xf32>
    %20 = tpu.matmul %17, %19, %cst_20 {dimension_numbers = #tpu.dot_dimension_numbers<[1], [0], [0], [1], [0, 0, 1, 1], [], []>} : vector<40x4xbf16>, vector<4x8xbf16>, vector<40x8xf32> -> vector<40x8xf32>
    %21 = arith.addf %15, %20 : vector<40x8xf32>
    %c0_21 = arith.constant 0 : index
    %c0_22 = arith.constant 0 : index
    %c5 = arith.constant 5 : index
    %c0_23 = arith.constant 0 : index
    %22 = vector.load %arg3[%c0_21, %c0_22, %c5, %c0_23] : memref<1x1x101x4xbf16, #tpu.memory_space<vmem>>, vector<1x1x40x4xbf16>
    %23 = vector.shape_cast %22 : vector<1x1x40x4xbf16> to vector<40x4xbf16>
    %c0_24 = arith.constant 0 : index
    %c12 = arith.constant 12 : index
    %c0_25 = arith.constant 0 : index
    %24 = vector.load %arg4[%c0_24, %c12, %c0_25] : memref<1x36x8xbf16, #tpu.memory_space<vmem>>, vector<1x4x8xbf16>
    %25 = vector.shape_cast %24 : vector<1x4x8xbf16> to vector<4x8xbf16>
    %cst_26 = arith.constant dense<0.000000e+00> : vector<40x8xf32>
    %26 = tpu.matmul %23, %25, %cst_26 {dimension_numbers = #tpu.dot_dimension_numbers<[1], [0], [0], [1], [0, 0, 1, 1], [], []>} : vector<40x4xbf16>, vector<4x8xbf16>, vector<40x8xf32> -> vector<40x8xf32>
    %27 = arith.addf %21, %26 : vector<40x8xf32>
    %c0_27 = arith.constant 0 : index
    %c0_28 = arith.constant 0 : index
    %c56 = arith.constant 56 : index
    %c0_29 = arith.constant 0 : index
    %28 = vector.load %arg3[%c0_27, %c0_28, %c56, %c0_29] : memref<1x1x101x4xbf16, #tpu.memory_space<vmem>>, vector<1x1x40x4xbf16>
    %29 = vector.shape_cast %28 : vector<1x1x40x4xbf16> to vector<40x4xbf16>
    %c0_30 = arith.constant 0 : index
    %c16 = arith.constant 16 : index
    %c0_31 = arith.constant 0 : index
    %30 = vector.load %arg4[%c0_30, %c16, %c0_31] : memref<1x36x8xbf16, #tpu.memory_space<vmem>>, vector<1x4x8xbf16>
    %31 = vector.shape_cast %30 : vector<1x4x8xbf16> to vector<4x8xbf16>
    %cst_32 = arith.constant dense<0.000000e+00> : vector<40x8xf32>
    %32 = tpu.matmul %29, %31, %cst_32 {dimension_numbers = #tpu.dot_dimension_numbers<[1], [0], [0], [1], [0, 0, 1, 1], [], []>} : vector<40x4xbf16>, vector<4x8xbf16>, vector<40x8xf32> -> vector<40x8xf32>
    %33 = arith.addf %27, %32 : vector<40x8xf32>
    %c0_33 = arith.constant 0 : index
    %c0_34 = arith.constant 0 : index
    %c6 = arith.constant 6 : index
    %c0_35 = arith.constant 0 : index
    %34 = vector.load %arg3[%c0_33, %c0_34, %c6, %c0_35] : memref<1x1x101x4xbf16, #tpu.memory_space<vmem>>, vector<1x1x40x4xbf16>
    %35 = vector.shape_cast %34 : vector<1x1x40x4xbf16> to vector<40x4xbf16>
    %c0_36 = arith.constant 0 : index
    %c20 = arith.constant 20 : index
    %c0_37 = arith.constant 0 : index
    %36 = vector.load %arg4[%c0_36, %c20, %c0_37] : memref<1x36x8xbf16, #tpu.memory_space<vmem>>, vector<1x4x8xbf16>
    %37 = vector.shape_cast %36 : vector<1x4x8xbf16> to vector<4x8xbf16>
    %cst_38 = arith.constant dense<0.000000e+00> : vector<40x8xf32>
    %38 = tpu.matmul %35, %37, %cst_38 {dimension_numbers = #tpu.dot_dimension_numbers<[1], [0], [0], [1], [0, 0, 1, 1], [], []>} : vector<40x4xbf16>, vector<4x8xbf16>, vector<40x8xf32> -> vector<40x8xf32>
    %39 = arith.addf %33, %38 : vector<40x8xf32>
    %c0_39 = arith.constant 0 : index
    %c0_40 = arith.constant 0 : index
    %c10 = arith.constant 10 : index
    %c0_41 = arith.constant 0 : index
    %40 = vector.load %arg3[%c0_39, %c0_40, %c10, %c0_41] : memref<1x1x101x4xbf16, #tpu.memory_space<vmem>>, vector<1x1x40x4xbf16>
    %41 = vector.shape_cast %40 : vector<1x1x40x4xbf16> to vector<40x4xbf16>
    %c0_42 = arith.constant 0 : index
    %c24 = arith.constant 24 : index
    %c0_43 = arith.constant 0 : index
    %42 = vector.load %arg4[%c0_42, %c24, %c0_43] : memref<1x36x8xbf16, #tpu.memory_space<vmem>>, vector<1x4x8xbf16>
    %43 = vector.shape_cast %42 : vector<1x4x8xbf16> to vector<4x8xbf16>
    %cst_44 = arith.constant dense<0.000000e+00> : vector<40x8xf32>
    %44 = tpu.matmul %41, %43, %cst_44 {dimension_numbers = #tpu.dot_dimension_numbers<[1], [0], [0], [1], [0, 0, 1, 1], [], []>} : vector<40x4xbf16>, vector<4x8xbf16>, vector<40x8xf32> -> vector<40x8xf32>
    %45 = arith.addf %39, %44 : vector<40x8xf32>
    %c0_45 = arith.constant 0 : index
    %c0_46 = arith.constant 0 : index
    %c61 = arith.constant 61 : index
    %c0_47 = arith.constant 0 : index
    %46 = vector.load %arg3[%c0_45, %c0_46, %c61, %c0_47] : memref<1x1x101x4xbf16, #tpu.memory_space<vmem>>, vector<1x1x40x4xbf16>
    %47 = vector.shape_cast %46 : vector<1x1x40x4xbf16> to vector<40x4xbf16>
    %c0_48 = arith.constant 0 : index
    %c28 = arith.constant 28 : index
    %c0_49 = arith.constant 0 : index
    %48 = vector.load %arg4[%c0_48, %c28, %c0_49] : memref<1x36x8xbf16, #tpu.memory_space<vmem>>, vector<1x4x8xbf16>
    %49 = vector.shape_cast %48 : vector<1x4x8xbf16> to vector<4x8xbf16>
    %cst_50 = arith.constant dense<0.000000e+00> : vector<40x8xf32>
    %50 = tpu.matmul %47, %49, %cst_50 {dimension_numbers = #tpu.dot_dimension_numbers<[1], [0], [0], [1], [0, 0, 1, 1], [], []>} : vector<40x4xbf16>, vector<4x8xbf16>, vector<40x8xf32> -> vector<40x8xf32>
    %51 = arith.addf %45, %50 : vector<40x8xf32>
    %c0_51 = arith.constant 0 : index
    %c0_52 = arith.constant 0 : index
    %c11 = arith.constant 11 : index
    %c0_53 = arith.constant 0 : index
    %52 = vector.load %arg3[%c0_51, %c0_52, %c11, %c0_53] : memref<1x1x101x4xbf16, #tpu.memory_space<vmem>>, vector<1x1x40x4xbf16>
    %53 = vector.shape_cast %52 : vector<1x1x40x4xbf16> to vector<40x4xbf16>
    %c0_54 = arith.constant 0 : index
    %c32 = arith.constant 32 : index
    %c0_55 = arith.constant 0 : index
    %54 = vector.load %arg4[%c0_54, %c32, %c0_55] : memref<1x36x8xbf16, #tpu.memory_space<vmem>>, vector<1x4x8xbf16>
    %55 = vector.shape_cast %54 : vector<1x4x8xbf16> to vector<4x8xbf16>
    %cst_56 = arith.constant dense<0.000000e+00> : vector<40x8xf32>
    %56 = tpu.matmul %53, %55, %cst_56 {dimension_numbers = #tpu.dot_dimension_numbers<[1], [0], [0], [1], [0, 0, 1, 1], [], []>} : vector<40x4xbf16>, vector<4x8xbf16>, vector<40x8xf32> -> vector<40x8xf32>
    %57 = arith.addf %51, %56 : vector<40x8xf32>
    %c0_57 = arith.constant 0 : index
    %c0_58 = arith.constant 0 : index
    %58 = vector.load %arg7[%c0_57, %c0_58] : memref<40x8xf32, #tpu.memory_space<vmem>>, vector<40x8xf32>
    tpu.vector_store %arg7[%c0_57, %c0_58], %57 {strides = array<i32>} : memref<40x8xf32, #tpu.memory_space<vmem>>, vector<40x8xf32>,
    %c2_i32 = arith.constant 2 : i32
    %59 = arith.cmpi eq, %arg2, %c2_i32 : i32
    %60 = arith.extui %59 : i1 to i32
    %c0_i32_59 = arith.constant 0 : i32
    %61 = arith.cmpi ne, %60, %c0_i32_59 : i32
    scf.if %61 {
      %c0_60 = arith.constant 0 : index
      %c0_61 = arith.constant 0 : index
      %62 = vector.load %arg7[%c0_60, %c0_61] : memref<40x8xf32, #tpu.memory_space<vmem>>, vector<40x8xf32>
      %c0_62 = arith.constant 0 : index
      %c0_63 = arith.constant 0 : index
      %63 = vector.load %arg5[%c0_62, %c0_63] : memref<1x8xf32, #tpu.memory_space<vmem>>, vector<1x8xf32>
      %64 = vector.broadcast %63 : vector<1x8xf32> to vector<40x8xf32>
      %65 = arith.addf %62, %64 : vector<40x8xf32>
      %cst_64 = arith.constant 0.000000e+00 : f32
      %66 = vector.broadcast %cst_64 : f32 to vector<40x8xf32>
      %67 = arith.maximumf %65, %66 : vector<40x8xf32>
      %68 = arith.truncf %67 : vector<40x8xf32> to vector<40x8xbf16>
      %c0_65 = arith.constant 0 : index
      %c0_66 = arith.constant 0 : index
      %c0_67 = arith.constant 0 : index
      %c0_68 = arith.constant 0 : index
      %69 = vector.load %arg6[%c0_65, %c0_66, %c0_67, %c0_68] : memref<1x1x40x8xbf16, #tpu.memory_space<vmem>>, vector<1x1x40x8xbf16>
      %70 = vector.shape_cast %69 : vector<1x1x40x8xbf16> to vector<40x8xbf16>
      %71 = vector.shape_cast %68 : vector<40x8xbf16> to vector<1x1x40x8xbf16>
      tpu.vector_store %arg6[%c0_65, %c0_66, %c0_67, %c0_68], %71 {strides = array<i32>} : memref<1x1x40x8xbf16, #tpu.memory_space<vmem>>, vector<1x1x40x8xbf16>,
    } else {
    }
    return
  }
  func.func @transform_0(%arg0: i32, %arg1: i32, %arg2: i32) -> (i32, i32, i32, i32) {
    %c2_i32 = arith.constant 2 : i32
    %0 = arith.muli %arg1, %c2_i32 : i32
    %1 = arith.addi %0, %arg2 : i32
    %c0_i32 = arith.constant 0 : i32
    %c0_i32_0 = arith.constant 0 : i32
    %c0_i32_1 = arith.constant 0 : i32
    return %arg0, %1, %c0_i32, %c0_i32_0 : i32, i32, i32, i32
  }
  func.func @transform_1(%arg0: i32, %arg1: i32, %arg2: i32) -> (i32, i32, i32) {
    %c0_i32 = arith.constant 0 : i32
    %c0_i32_0 = arith.constant 0 : i32
    %c0_i32_1 = arith.constant 0 : i32
    return %arg2, %c0_i32, %c0_i32_0 : i32, i32, i32
  }
  func.func @transform_2(%arg0: i32, %arg1: i32, %arg2: i32) -> (i32, i32) {
    %c0_i32 = arith.constant 0 : i32
    %c0_i32_0 = arith.constant 0 : i32
    %c0_i32_1 = arith.constant 0 : i32
    return %c0_i32, %c0_i32_0 : i32, i32
  }
  func.func @transform_3(%arg0: i32, %arg1: i32, %arg2: i32) -> (i32, i32, i32, i32) {
    %c0_i32 = arith.constant 0 : i32
    %c0_i32_0 = arith.constant 0 : i32
    %c0_i32_1 = arith.constant 0 : i32
    return %arg0, %arg1, %c0_i32, %c0_i32_0 : i32, i32, i32, i32
  }
}

module attributes {stable_mosaic.version = 11 : i64} {
  func.func @_conv_bn_kernel(%arg0: i32, %arg1: i32, %arg2: i32, %arg3: memref<1x1x38x8xbf16, #tpu.memory_space<vmem>>, %arg4: memref<1x72x8xbf16, #tpu.memory_space<vmem>>, %arg5: memref<1x8xf32, #tpu.memory_space<vmem>>, %arg6: memref<1x1x24x8xbf16, #tpu.memory_space<vmem>>, %arg7: memref<24x8xf32, #tpu.memory_space<vmem>>) attributes {dimension_semantics = [#tpu.dimension_semantics<parallel>, #tpu.dimension_semantics<parallel>, #tpu.dimension_semantics<arbitrary>], iteration_bounds = array<i64: 2, 4, 3>, scalar_prefetch = 0 : i64, scratch_operands = 1 : i64, tpu.core_type = #tpu.core_type<tc>, window_params = [{transform_indices = @transform_0, window_bounds = array<i64: 1, 1, 38, 8>}, {transform_indices = @transform_1, window_bounds = array<i64: 1, 72, 8>}, {pipeline_mode = #tpu.pipeline_mode<synchronous>, transform_indices = @transform_2, window_bounds = array<i64: 1, 8>}, {transform_indices = @transform_3, window_bounds = array<i64: 1, 1, 24, 8>}]} {
    %c0_i32 = arith.constant 0 : i32
    %0 = arith.cmpi eq, %arg2, %c0_i32 : i32
    %1 = arith.extui %0 : i1 to i32
    %c0_i32_0 = arith.constant 0 : i32
    %2 = arith.cmpi ne, %1, %c0_i32_0 : i32
    scf.if %2 {
      %cst_61 = arith.constant 0.000000e+00 : f32
      %62 = vector.broadcast %cst_61 : f32 to vector<24x8xf32>
      %c0_62 = arith.constant 0 : index
      %c0_63 = arith.constant 0 : index
      %63 = vector.load %arg7[%c0_62, %c0_63] : memref<24x8xf32, #tpu.memory_space<vmem>>, vector<24x8xf32>
      tpu.vector_store %arg7[%c0_62, %c0_63], %62 {strides = array<i32>} : memref<24x8xf32, #tpu.memory_space<vmem>>, vector<24x8xf32>,
    } else {
    }
    %c0 = arith.constant 0 : index
    %c0_1 = arith.constant 0 : index
    %3 = vector.load %arg7[%c0, %c0_1] : memref<24x8xf32, #tpu.memory_space<vmem>>, vector<24x8xf32>
    %c0_2 = arith.constant 0 : index
    %c0_3 = arith.constant 0 : index
    %c0_4 = arith.constant 0 : index
    %c0_5 = arith.constant 0 : index
    %4 = vector.load %arg3[%c0_2, %c0_3, %c0_4, %c0_5] : memref<1x1x38x8xbf16, #tpu.memory_space<vmem>>, vector<1x1x24x8xbf16>
    %5 = vector.shape_cast %4 : vector<1x1x24x8xbf16> to vector<24x8xbf16>
    %c0_6 = arith.constant 0 : index
    %c0_7 = arith.constant 0 : index
    %c0_8 = arith.constant 0 : index
    %6 = vector.load %arg4[%c0_6, %c0_7, %c0_8] : memref<1x72x8xbf16, #tpu.memory_space<vmem>>, vector<1x8x8xbf16>
    %7 = vector.shape_cast %6 : vector<1x8x8xbf16> to vector<8x8xbf16>
    %cst = arith.constant dense<0.000000e+00> : vector<24x8xf32>
    %8 = tpu.matmul %5, %7, %cst {dimension_numbers = #tpu.dot_dimension_numbers<[1], [0], [0], [1], [0, 0, 1, 1], [], []>} : vector<24x8xbf16>, vector<8x8xbf16>, vector<24x8xf32> -> vector<24x8xf32>
    %9 = arith.addf %3, %8 : vector<24x8xf32>
    %c0_9 = arith.constant 0 : index
    %c0_10 = arith.constant 0 : index
    %c1 = arith.constant 1 : index
    %c0_11 = arith.constant 0 : index
    %10 = vector.load %arg3[%c0_9, %c0_10, %c1, %c0_11] : memref<1x1x38x8xbf16, #tpu.memory_space<vmem>>, vector<1x1x24x8xbf16>
    %11 = vector.shape_cast %10 : vector<1x1x24x8xbf16> to vector<24x8xbf16>
    %c0_12 = arith.constant 0 : index
    %c8 = arith.constant 8 : index
    %c0_13 = arith.constant 0 : index
    %12 = vector.load %arg4[%c0_12, %c8, %c0_13] : memref<1x72x8xbf16, #tpu.memory_space<vmem>>, vector<1x8x8xbf16>
    %13 = vector.shape_cast %12 : vector<1x8x8xbf16> to vector<8x8xbf16>
    %cst_14 = arith.constant dense<0.000000e+00> : vector<24x8xf32>
    %14 = tpu.matmul %11, %13, %cst_14 {dimension_numbers = #tpu.dot_dimension_numbers<[1], [0], [0], [1], [0, 0, 1, 1], [], []>} : vector<24x8xbf16>, vector<8x8xbf16>, vector<24x8xf32> -> vector<24x8xf32>
    %15 = arith.addf %9, %14 : vector<24x8xf32>
    %c0_15 = arith.constant 0 : index
    %c0_16 = arith.constant 0 : index
    %c2 = arith.constant 2 : index
    %c0_17 = arith.constant 0 : index
    %16 = vector.load %arg3[%c0_15, %c0_16, %c2, %c0_17] : memref<1x1x38x8xbf16, #tpu.memory_space<vmem>>, vector<1x1x24x8xbf16>
    %17 = vector.shape_cast %16 : vector<1x1x24x8xbf16> to vector<24x8xbf16>
    %c0_18 = arith.constant 0 : index
    %c16 = arith.constant 16 : index
    %c0_19 = arith.constant 0 : index
    %18 = vector.load %arg4[%c0_18, %c16, %c0_19] : memref<1x72x8xbf16, #tpu.memory_space<vmem>>, vector<1x8x8xbf16>
    %19 = vector.shape_cast %18 : vector<1x8x8xbf16> to vector<8x8xbf16>
    %cst_20 = arith.constant dense<0.000000e+00> : vector<24x8xf32>
    %20 = tpu.matmul %17, %19, %cst_20 {dimension_numbers = #tpu.dot_dimension_numbers<[1], [0], [0], [1], [0, 0, 1, 1], [], []>} : vector<24x8xbf16>, vector<8x8xbf16>, vector<24x8xf32> -> vector<24x8xf32>
    %21 = arith.addf %15, %20 : vector<24x8xf32>
    %c0_21 = arith.constant 0 : index
    %c0_22 = arith.constant 0 : index
    %c6 = arith.constant 6 : index
    %c0_23 = arith.constant 0 : index
    %22 = vector.load %arg3[%c0_21, %c0_22, %c6, %c0_23] : memref<1x1x38x8xbf16, #tpu.memory_space<vmem>>, vector<1x1x24x8xbf16>
    %23 = vector.shape_cast %22 : vector<1x1x24x8xbf16> to vector<24x8xbf16>
    %c0_24 = arith.constant 0 : index
    %c24 = arith.constant 24 : index
    %c0_25 = arith.constant 0 : index
    %24 = vector.load %arg4[%c0_24, %c24, %c0_25] : memref<1x72x8xbf16, #tpu.memory_space<vmem>>, vector<1x8x8xbf16>
    %25 = vector.shape_cast %24 : vector<1x8x8xbf16> to vector<8x8xbf16>
    %cst_26 = arith.constant dense<0.000000e+00> : vector<24x8xf32>
    %26 = tpu.matmul %23, %25, %cst_26 {dimension_numbers = #tpu.dot_dimension_numbers<[1], [0], [0], [1], [0, 0, 1, 1], [], []>} : vector<24x8xbf16>, vector<8x8xbf16>, vector<24x8xf32> -> vector<24x8xf32>
    %27 = arith.addf %21, %26 : vector<24x8xf32>
    %c0_27 = arith.constant 0 : index
    %c0_28 = arith.constant 0 : index
    %c7 = arith.constant 7 : index
    %c0_29 = arith.constant 0 : index
    %28 = vector.load %arg3[%c0_27, %c0_28, %c7, %c0_29] : memref<1x1x38x8xbf16, #tpu.memory_space<vmem>>, vector<1x1x24x8xbf16>
    %29 = vector.shape_cast %28 : vector<1x1x24x8xbf16> to vector<24x8xbf16>
    %c0_30 = arith.constant 0 : index
    %c32 = arith.constant 32 : index
    %c0_31 = arith.constant 0 : index
    %30 = vector.load %arg4[%c0_30, %c32, %c0_31] : memref<1x72x8xbf16, #tpu.memory_space<vmem>>, vector<1x8x8xbf16>
    %31 = vector.shape_cast %30 : vector<1x8x8xbf16> to vector<8x8xbf16>
    %cst_32 = arith.constant dense<0.000000e+00> : vector<24x8xf32>
    %32 = tpu.matmul %29, %31, %cst_32 {dimension_numbers = #tpu.dot_dimension_numbers<[1], [0], [0], [1], [0, 0, 1, 1], [], []>} : vector<24x8xbf16>, vector<8x8xbf16>, vector<24x8xf32> -> vector<24x8xf32>
    %33 = arith.addf %27, %32 : vector<24x8xf32>
    %c0_33 = arith.constant 0 : index
    %c0_34 = arith.constant 0 : index
    %c8_35 = arith.constant 8 : index
    %c0_36 = arith.constant 0 : index
    %34 = vector.load %arg3[%c0_33, %c0_34, %c8_35, %c0_36] : memref<1x1x38x8xbf16, #tpu.memory_space<vmem>>, vector<1x1x24x8xbf16>
    %35 = vector.shape_cast %34 : vector<1x1x24x8xbf16> to vector<24x8xbf16>
    %c0_37 = arith.constant 0 : index
    %c40 = arith.constant 40 : index
    %c0_38 = arith.constant 0 : index
    %36 = vector.load %arg4[%c0_37, %c40, %c0_38] : memref<1x72x8xbf16, #tpu.memory_space<vmem>>, vector<1x8x8xbf16>
    %37 = vector.shape_cast %36 : vector<1x8x8xbf16> to vector<8x8xbf16>
    %cst_39 = arith.constant dense<0.000000e+00> : vector<24x8xf32>
    %38 = tpu.matmul %35, %37, %cst_39 {dimension_numbers = #tpu.dot_dimension_numbers<[1], [0], [0], [1], [0, 0, 1, 1], [], []>} : vector<24x8xbf16>, vector<8x8xbf16>, vector<24x8xf32> -> vector<24x8xf32>
    %39 = arith.addf %33, %38 : vector<24x8xf32>
    %c0_40 = arith.constant 0 : index
    %c0_41 = arith.constant 0 : index
    %c12 = arith.constant 12 : index
    %c0_42 = arith.constant 0 : index
    %40 = vector.load %arg3[%c0_40, %c0_41, %c12, %c0_42] : memref<1x1x38x8xbf16, #tpu.memory_space<vmem>>, vector<1x1x24x8xbf16>
    %41 = vector.shape_cast %40 : vector<1x1x24x8xbf16> to vector<24x8xbf16>
    %c0_43 = arith.constant 0 : index
    %c48 = arith.constant 48 : index
    %c0_44 = arith.constant 0 : index
    %42 = vector.load %arg4[%c0_43, %c48, %c0_44] : memref<1x72x8xbf16, #tpu.memory_space<vmem>>, vector<1x8x8xbf16>
    %43 = vector.shape_cast %42 : vector<1x8x8xbf16> to vector<8x8xbf16>
    %cst_45 = arith.constant dense<0.000000e+00> : vector<24x8xf32>
    %44 = tpu.matmul %41, %43, %cst_45 {dimension_numbers = #tpu.dot_dimension_numbers<[1], [0], [0], [1], [0, 0, 1, 1], [], []>} : vector<24x8xbf16>, vector<8x8xbf16>, vector<24x8xf32> -> vector<24x8xf32>
    %45 = arith.addf %39, %44 : vector<24x8xf32>
    %c0_46 = arith.constant 0 : index
    %c0_47 = arith.constant 0 : index
    %c13 = arith.constant 13 : index
    %c0_48 = arith.constant 0 : index
    %46 = vector.load %arg3[%c0_46, %c0_47, %c13, %c0_48] : memref<1x1x38x8xbf16, #tpu.memory_space<vmem>>, vector<1x1x24x8xbf16>
    %47 = vector.shape_cast %46 : vector<1x1x24x8xbf16> to vector<24x8xbf16>
    %c0_49 = arith.constant 0 : index
    %c56 = arith.constant 56 : index
    %c0_50 = arith.constant 0 : index
    %48 = vector.load %arg4[%c0_49, %c56, %c0_50] : memref<1x72x8xbf16, #tpu.memory_space<vmem>>, vector<1x8x8xbf16>
    %49 = vector.shape_cast %48 : vector<1x8x8xbf16> to vector<8x8xbf16>
    %cst_51 = arith.constant dense<0.000000e+00> : vector<24x8xf32>
    %50 = tpu.matmul %47, %49, %cst_51 {dimension_numbers = #tpu.dot_dimension_numbers<[1], [0], [0], [1], [0, 0, 1, 1], [], []>} : vector<24x8xbf16>, vector<8x8xbf16>, vector<24x8xf32> -> vector<24x8xf32>
    %51 = arith.addf %45, %50 : vector<24x8xf32>
    %c0_52 = arith.constant 0 : index
    %c0_53 = arith.constant 0 : index
    %c14 = arith.constant 14 : index
    %c0_54 = arith.constant 0 : index
    %52 = vector.load %arg3[%c0_52, %c0_53, %c14, %c0_54] : memref<1x1x38x8xbf16, #tpu.memory_space<vmem>>, vector<1x1x24x8xbf16>
    %53 = vector.shape_cast %52 : vector<1x1x24x8xbf16> to vector<24x8xbf16>
    %c0_55 = arith.constant 0 : index
    %c64 = arith.constant 64 : index
    %c0_56 = arith.constant 0 : index
    %54 = vector.load %arg4[%c0_55, %c64, %c0_56] : memref<1x72x8xbf16, #tpu.memory_space<vmem>>, vector<1x8x8xbf16>
    %55 = vector.shape_cast %54 : vector<1x8x8xbf16> to vector<8x8xbf16>
    %cst_57 = arith.constant dense<0.000000e+00> : vector<24x8xf32>
    %56 = tpu.matmul %53, %55, %cst_57 {dimension_numbers = #tpu.dot_dimension_numbers<[1], [0], [0], [1], [0, 0, 1, 1], [], []>} : vector<24x8xbf16>, vector<8x8xbf16>, vector<24x8xf32> -> vector<24x8xf32>
    %57 = arith.addf %51, %56 : vector<24x8xf32>
    %c0_58 = arith.constant 0 : index
    %c0_59 = arith.constant 0 : index
    %58 = vector.load %arg7[%c0_58, %c0_59] : memref<24x8xf32, #tpu.memory_space<vmem>>, vector<24x8xf32>
    tpu.vector_store %arg7[%c0_58, %c0_59], %57 {strides = array<i32>} : memref<24x8xf32, #tpu.memory_space<vmem>>, vector<24x8xf32>,
    %c2_i32 = arith.constant 2 : i32
    %59 = arith.cmpi eq, %arg2, %c2_i32 : i32
    %60 = arith.extui %59 : i1 to i32
    %c0_i32_60 = arith.constant 0 : i32
    %61 = arith.cmpi ne, %60, %c0_i32_60 : i32
    scf.if %61 {
      %c0_61 = arith.constant 0 : index
      %c0_62 = arith.constant 0 : index
      %62 = vector.load %arg7[%c0_61, %c0_62] : memref<24x8xf32, #tpu.memory_space<vmem>>, vector<24x8xf32>
      %c0_63 = arith.constant 0 : index
      %c0_64 = arith.constant 0 : index
      %63 = vector.load %arg5[%c0_63, %c0_64] : memref<1x8xf32, #tpu.memory_space<vmem>>, vector<1x8xf32>
      %64 = vector.broadcast %63 : vector<1x8xf32> to vector<24x8xf32>
      %65 = arith.addf %62, %64 : vector<24x8xf32>
      %cst_65 = arith.constant 0.000000e+00 : f32
      %66 = vector.broadcast %cst_65 : f32 to vector<24x8xf32>
      %67 = arith.maximumf %65, %66 : vector<24x8xf32>
      %68 = arith.truncf %67 : vector<24x8xf32> to vector<24x8xbf16>
      %c0_66 = arith.constant 0 : index
      %c0_67 = arith.constant 0 : index
      %c0_68 = arith.constant 0 : index
      %c0_69 = arith.constant 0 : index
      %69 = vector.load %arg6[%c0_66, %c0_67, %c0_68, %c0_69] : memref<1x1x24x8xbf16, #tpu.memory_space<vmem>>, vector<1x1x24x8xbf16>
      %70 = vector.shape_cast %69 : vector<1x1x24x8xbf16> to vector<24x8xbf16>
      %71 = vector.shape_cast %68 : vector<24x8xbf16> to vector<1x1x24x8xbf16>
      tpu.vector_store %arg6[%c0_66, %c0_67, %c0_68, %c0_69], %71 {strides = array<i32>} : memref<1x1x24x8xbf16, #tpu.memory_space<vmem>>, vector<1x1x24x8xbf16>,
    } else {
    }
    return
  }
  func.func @transform_0(%arg0: i32, %arg1: i32, %arg2: i32) -> (i32, i32, i32, i32) {
    %c1_i32 = arith.constant 1 : i32
    %0 = arith.muli %arg1, %c1_i32 : i32
    %1 = arith.addi %0, %arg2 : i32
    %c0_i32 = arith.constant 0 : i32
    %c0_i32_0 = arith.constant 0 : i32
    %c0_i32_1 = arith.constant 0 : i32
    return %arg0, %1, %c0_i32, %c0_i32_0 : i32, i32, i32, i32
  }
  func.func @transform_1(%arg0: i32, %arg1: i32, %arg2: i32) -> (i32, i32, i32) {
    %c0_i32 = arith.constant 0 : i32
    %c0_i32_0 = arith.constant 0 : i32
    %c0_i32_1 = arith.constant 0 : i32
    return %arg2, %c0_i32, %c0_i32_0 : i32, i32, i32
  }
  func.func @transform_2(%arg0: i32, %arg1: i32, %arg2: i32) -> (i32, i32) {
    %c0_i32 = arith.constant 0 : i32
    %c0_i32_0 = arith.constant 0 : i32
    %c0_i32_1 = arith.constant 0 : i32
    return %c0_i32, %c0_i32_0 : i32, i32
  }
  func.func @transform_3(%arg0: i32, %arg1: i32, %arg2: i32) -> (i32, i32, i32, i32) {
    %c0_i32 = arith.constant 0 : i32
    %c0_i32_0 = arith.constant 0 : i32
    %c0_i32_1 = arith.constant 0 : i32
    return %arg0, %arg1, %c0_i32, %c0_i32_0 : i32, i32, i32, i32
  }
}

module attributes {stable_mosaic.version = 11 : i64} {
  func.func @_deconv_redir_kernel(%arg0: i32, %arg1: i32, %arg2: i32, %arg3: memref<1x1x26x8xbf16, #tpu.memory_space<vmem>>, %arg4: memref<1x1x20x32xbf16, #tpu.memory_space<vmem>>, %arg5: memref<1x32x32xbf16, #tpu.memory_space<vmem>>, %arg6: memref<32x32xbf16, #tpu.memory_space<vmem>>, %arg7: memref<1x32xf32, #tpu.memory_space<vmem>>, %arg8: memref<1x1x20x32xf32, #tpu.memory_space<vmem>>, %arg9: memref<20x32xf32, #tpu.memory_space<vmem>>) attributes {dimension_semantics = [#tpu.dimension_semantics<parallel>, #tpu.dimension_semantics<parallel>, #tpu.dimension_semantics<arbitrary>], iteration_bounds = array<i64: 2, 4, 2>, scalar_prefetch = 0 : i64, scratch_operands = 1 : i64, tpu.core_type = #tpu.core_type<tc>, window_params = [{transform_indices = @transform_0, window_bounds = array<i64: 1, 1, 26, 8>}, {transform_indices = @transform_1, window_bounds = array<i64: 1, 1, 20, 32>}, {transform_indices = @transform_2, window_bounds = array<i64: 1, 32, 32>}, {pipeline_mode = #tpu.pipeline_mode<synchronous>, transform_indices = @transform_3, window_bounds = array<i64: 32, 32>}, {pipeline_mode = #tpu.pipeline_mode<synchronous>, transform_indices = @transform_4, window_bounds = array<i64: 1, 32>}, {transform_indices = @transform_5, window_bounds = array<i64: 1, 1, 20, 32>}]} {
    %c0_i32 = arith.constant 0 : i32
    %0 = arith.cmpi eq, %arg2, %c0_i32 : i32
    %1 = arith.extui %0 : i1 to i32
    %c0_i32_0 = arith.constant 0 : i32
    %2 = arith.cmpi ne, %1, %c0_i32_0 : i32
    scf.if %2 {
      %c0_30 = arith.constant 0 : index
      %c0_31 = arith.constant 0 : index
      %c0_32 = arith.constant 0 : index
      %c0_33 = arith.constant 0 : index
      %32 = vector.load %arg4[%c0_30, %c0_31, %c0_32, %c0_33] : memref<1x1x20x32xbf16, #tpu.memory_space<vmem>>, vector<1x1x20x32xbf16>
      %33 = vector.shape_cast %32 : vector<1x1x20x32xbf16> to vector<20x32xbf16>
      %c0_34 = arith.constant 0 : index
      %c0_35 = arith.constant 0 : index
      %34 = vector.load %arg6[%c0_34, %c0_35] : memref<32x32xbf16, #tpu.memory_space<vmem>>, vector<32x32xbf16>
      %cst_36 = arith.constant dense<0.000000e+00> : vector<20x32xf32>
      %35 = tpu.matmul %33, %34, %cst_36 {dimension_numbers = #tpu.dot_dimension_numbers<[1], [0], [0], [1], [0, 0, 1, 1], [], []>} : vector<20x32xbf16>, vector<32x32xbf16>, vector<20x32xf32> -> vector<20x32xf32>
      %c0_37 = arith.constant 0 : index
      %c0_38 = arith.constant 0 : index
      %36 = vector.load %arg9[%c0_37, %c0_38] : memref<20x32xf32, #tpu.memory_space<vmem>>, vector<20x32xf32>
      tpu.vector_store %arg9[%c0_37, %c0_38], %35 {strides = array<i32>} : memref<20x32xf32, #tpu.memory_space<vmem>>, vector<20x32xf32>,
    } else {
    }
    %c0 = arith.constant 0 : index
    %c0_1 = arith.constant 0 : index
    %3 = vector.load %arg9[%c0, %c0_1] : memref<20x32xf32, #tpu.memory_space<vmem>>, vector<20x32xf32>
    %c0_2 = arith.constant 0 : index
    %c0_3 = arith.constant 0 : index
    %c0_4 = arith.constant 0 : index
    %c0_5 = arith.constant 0 : index
    %4 = vector.load %arg3[%c0_2, %c0_3, %c0_4, %c0_5] : memref<1x1x26x8xbf16, #tpu.memory_space<vmem>>, vector<1x1x20x8xbf16>
    %5 = vector.shape_cast %4 : vector<1x1x20x8xbf16> to vector<20x8xbf16>
    %c0_6 = arith.constant 0 : index
    %c0_7 = arith.constant 0 : index
    %c0_8 = arith.constant 0 : index
    %6 = vector.load %arg5[%c0_6, %c0_7, %c0_8] : memref<1x32x32xbf16, #tpu.memory_space<vmem>>, vector<1x8x32xbf16>
    %7 = vector.shape_cast %6 : vector<1x8x32xbf16> to vector<8x32xbf16>
    %cst = arith.constant dense<0.000000e+00> : vector<20x32xf32>
    %8 = tpu.matmul %5, %7, %cst {dimension_numbers = #tpu.dot_dimension_numbers<[1], [0], [0], [1], [0, 0, 1, 1], [], []>} : vector<20x8xbf16>, vector<8x32xbf16>, vector<20x32xf32> -> vector<20x32xf32>
    %9 = arith.addf %3, %8 : vector<20x32xf32>
    %c0_9 = arith.constant 0 : index
    %c0_10 = arith.constant 0 : index
    %c1 = arith.constant 1 : index
    %c0_11 = arith.constant 0 : index
    %10 = vector.load %arg3[%c0_9, %c0_10, %c1, %c0_11] : memref<1x1x26x8xbf16, #tpu.memory_space<vmem>>, vector<1x1x20x8xbf16>
    %11 = vector.shape_cast %10 : vector<1x1x20x8xbf16> to vector<20x8xbf16>
    %c0_12 = arith.constant 0 : index
    %c8 = arith.constant 8 : index
    %c0_13 = arith.constant 0 : index
    %12 = vector.load %arg5[%c0_12, %c8, %c0_13] : memref<1x32x32xbf16, #tpu.memory_space<vmem>>, vector<1x8x32xbf16>
    %13 = vector.shape_cast %12 : vector<1x8x32xbf16> to vector<8x32xbf16>
    %cst_14 = arith.constant dense<0.000000e+00> : vector<20x32xf32>
    %14 = tpu.matmul %11, %13, %cst_14 {dimension_numbers = #tpu.dot_dimension_numbers<[1], [0], [0], [1], [0, 0, 1, 1], [], []>} : vector<20x8xbf16>, vector<8x32xbf16>, vector<20x32xf32> -> vector<20x32xf32>
    %15 = arith.addf %9, %14 : vector<20x32xf32>
    %c0_15 = arith.constant 0 : index
    %c0_16 = arith.constant 0 : index
    %c5 = arith.constant 5 : index
    %c0_17 = arith.constant 0 : index
    %16 = vector.load %arg3[%c0_15, %c0_16, %c5, %c0_17] : memref<1x1x26x8xbf16, #tpu.memory_space<vmem>>, vector<1x1x20x8xbf16>
    %17 = vector.shape_cast %16 : vector<1x1x20x8xbf16> to vector<20x8xbf16>
    %c0_18 = arith.constant 0 : index
    %c16 = arith.constant 16 : index
    %c0_19 = arith.constant 0 : index
    %18 = vector.load %arg5[%c0_18, %c16, %c0_19] : memref<1x32x32xbf16, #tpu.memory_space<vmem>>, vector<1x8x32xbf16>
    %19 = vector.shape_cast %18 : vector<1x8x32xbf16> to vector<8x32xbf16>
    %cst_20 = arith.constant dense<0.000000e+00> : vector<20x32xf32>
    %20 = tpu.matmul %17, %19, %cst_20 {dimension_numbers = #tpu.dot_dimension_numbers<[1], [0], [0], [1], [0, 0, 1, 1], [], []>} : vector<20x8xbf16>, vector<8x32xbf16>, vector<20x32xf32> -> vector<20x32xf32>
    %21 = arith.addf %15, %20 : vector<20x32xf32>
    %c0_21 = arith.constant 0 : index
    %c0_22 = arith.constant 0 : index
    %c6 = arith.constant 6 : index
    %c0_23 = arith.constant 0 : index
    %22 = vector.load %arg3[%c0_21, %c0_22, %c6, %c0_23] : memref<1x1x26x8xbf16, #tpu.memory_space<vmem>>, vector<1x1x20x8xbf16>
    %23 = vector.shape_cast %22 : vector<1x1x20x8xbf16> to vector<20x8xbf16>
    %c0_24 = arith.constant 0 : index
    %c24 = arith.constant 24 : index
    %c0_25 = arith.constant 0 : index
    %24 = vector.load %arg5[%c0_24, %c24, %c0_25] : memref<1x32x32xbf16, #tpu.memory_space<vmem>>, vector<1x8x32xbf16>
    %25 = vector.shape_cast %24 : vector<1x8x32xbf16> to vector<8x32xbf16>
    %cst_26 = arith.constant dense<0.000000e+00> : vector<20x32xf32>
    %26 = tpu.matmul %23, %25, %cst_26 {dimension_numbers = #tpu.dot_dimension_numbers<[1], [0], [0], [1], [0, 0, 1, 1], [], []>} : vector<20x8xbf16>, vector<8x32xbf16>, vector<20x32xf32> -> vector<20x32xf32>
    %27 = arith.addf %21, %26 : vector<20x32xf32>
    %c0_27 = arith.constant 0 : index
    %c0_28 = arith.constant 0 : index
    %28 = vector.load %arg9[%c0_27, %c0_28] : memref<20x32xf32, #tpu.memory_space<vmem>>, vector<20x32xf32>
    tpu.vector_store %arg9[%c0_27, %c0_28], %27 {strides = array<i32>} : memref<20x32xf32, #tpu.memory_space<vmem>>, vector<20x32xf32>,
    %c1_i32 = arith.constant 1 : i32
    %29 = arith.cmpi eq, %arg2, %c1_i32 : i32
    %30 = arith.extui %29 : i1 to i32
    %c0_i32_29 = arith.constant 0 : i32
    %31 = arith.cmpi ne, %30, %c0_i32_29 : i32
    scf.if %31 {
      %c0_30 = arith.constant 0 : index
      %c0_31 = arith.constant 0 : index
      %32 = vector.load %arg9[%c0_30, %c0_31] : memref<20x32xf32, #tpu.memory_space<vmem>>, vector<20x32xf32>
      %c0_32 = arith.constant 0 : index
      %c0_33 = arith.constant 0 : index
      %33 = vector.load %arg7[%c0_32, %c0_33] : memref<1x32xf32, #tpu.memory_space<vmem>>, vector<1x32xf32>
      %34 = vector.broadcast %33 : vector<1x32xf32> to vector<20x32xf32>
      %35 = arith.addf %32, %34 : vector<20x32xf32>
      %cst_34 = arith.constant 0.000000e+00 : f32
      %36 = vector.broadcast %cst_34 : f32 to vector<20x32xf32>
      %37 = arith.maximumf %35, %36 : vector<20x32xf32>
      %c0_35 = arith.constant 0 : index
      %c0_36 = arith.constant 0 : index
      %c0_37 = arith.constant 0 : index
      %c0_38 = arith.constant 0 : index
      %38 = vector.load %arg8[%c0_35, %c0_36, %c0_37, %c0_38] : memref<1x1x20x32xf32, #tpu.memory_space<vmem>>, vector<1x1x20x32xf32>
      %39 = vector.shape_cast %38 : vector<1x1x20x32xf32> to vector<20x32xf32>
      %40 = vector.shape_cast %37 : vector<20x32xf32> to vector<1x1x20x32xf32>
      tpu.vector_store %arg8[%c0_35, %c0_36, %c0_37, %c0_38], %40 {strides = array<i32>} : memref<1x1x20x32xf32, #tpu.memory_space<vmem>>, vector<1x1x20x32xf32>,
    } else {
    }
    return
  }
  func.func @transform_0(%arg0: i32, %arg1: i32, %arg2: i32) -> (i32, i32, i32, i32) {
    %0 = arith.addi %arg1, %arg2 : i32
    %c0_i32 = arith.constant 0 : i32
    %c0_i32_0 = arith.constant 0 : i32
    %c0_i32_1 = arith.constant 0 : i32
    return %arg0, %0, %c0_i32, %c0_i32_0 : i32, i32, i32, i32
  }
  func.func @transform_1(%arg0: i32, %arg1: i32, %arg2: i32) -> (i32, i32, i32, i32) {
    %c0_i32 = arith.constant 0 : i32
    %c0_i32_0 = arith.constant 0 : i32
    %c0_i32_1 = arith.constant 0 : i32
    return %arg0, %arg1, %c0_i32, %c0_i32_0 : i32, i32, i32, i32
  }
  func.func @transform_2(%arg0: i32, %arg1: i32, %arg2: i32) -> (i32, i32, i32) {
    %c0_i32 = arith.constant 0 : i32
    %c0_i32_0 = arith.constant 0 : i32
    %c0_i32_1 = arith.constant 0 : i32
    return %arg2, %c0_i32, %c0_i32_0 : i32, i32, i32
  }
  func.func @transform_3(%arg0: i32, %arg1: i32, %arg2: i32) -> (i32, i32) {
    %c0_i32 = arith.constant 0 : i32
    %c0_i32_0 = arith.constant 0 : i32
    %c0_i32_1 = arith.constant 0 : i32
    return %c0_i32, %c0_i32_0 : i32, i32
  }
  func.func @transform_4(%arg0: i32, %arg1: i32, %arg2: i32) -> (i32, i32) {
    %c0_i32 = arith.constant 0 : i32
    %c0_i32_0 = arith.constant 0 : i32
    %c0_i32_1 = arith.constant 0 : i32
    return %c0_i32, %c0_i32_0 : i32, i32
  }
  func.func @transform_5(%arg0: i32, %arg1: i32, %arg2: i32) -> (i32, i32, i32, i32) {
    %c0_i32 = arith.constant 0 : i32
    %c0_i32_0 = arith.constant 0 : i32
    %c0_i32_1 = arith.constant 0 : i32
    return %arg0, %arg1, %c0_i32, %c0_i32_0 : i32, i32, i32, i32
  }
}

</mosaic_0001>

<llo_original>
// kernel: tile.18
$region0: #{tile.18}
  #allocation0 [shape = 's32[1]{0}', space=sflag, size = 0x4, scoped, tag = 'scoped memory for tile.18']
  %s0 = inlined_call_operand.vmem [shape: f32[4], index: 0, kind: input, shape index: {}]
  %s1 = inlined_call_operand.vmem [shape: f32[8,4], index: 1, kind: output, shape index: {}]
  // Predicated region
  $region2: #{tile.18} parent=0 // pred_check
    _
  $region3: #{tile.18} parent=0 // pred_check_branch
    %3 = sbr.rel (0) target = $region5
  $region4: #{tile.18} parent=0 // pred_region
    _
  $region5: #{tile.18} parent=0 // pred_fallthru
    _
  %v4 = vld [vmem:[%s0] ss:$0 sm:$0xff]
  %5 = vst [vmem:[%s1] sm:$0xff] %v4

// kernel: mul.46
$region0: #{mul.46}
  %s0 = inlined_call_operand.vmem [shape: f32[8,4], index: 0, kind: input, shape index: {}]
  %s1 = inlined_call_operand.vmem [shape: f32[32], index: 1, kind: output, shape index: {}]
  $region1: #{mul.46} parent=0
    #allocation0 [shape = 'u8[4096]{0}', space=vmem, size = 0x1000, scoped, tag = 'scoped mem for output reshape']
    %v2 = vld [vmem:[%s0] sm:$0x1]
    %vm3 = vcmask 31744
    %4 = vst.msk [vmem:[#allocation0] sm:$0x1] %vm3, %v2
    %s5 = scalar_lea.vmem %s0, 7
    %v6 = vld [vmem:[%s5] sm:$0x1]
    %7 = vrot.lane.b32.xlu0 %v6, 28
    %v8 = vpop.permute.xlu0 %7
    %vm9 = vcmask 261344
    %10 = vst.msk [vmem:[#allocation0] sm:$0x1] %vm9, %v8
    %s11 = scalar_lea.vmem %s0, 6
    %v12 = vld [vmem:[%s11] sm:$0x1]
    %13 = vrot.lane.b32.xlu0 %v12, 24
    %v14 = vpop.permute.xlu0 %13
    %vm15 = vcmask 228544
    %16 = vst.msk [vmem:[#allocation0] sm:$0x1] %vm15, %v14
    %s17 = scalar_lea.vmem %s0, 5
    %v18 = vld [vmem:[%s17] sm:$0x1]
    %19 = vrot.lane.b32.xlu0 %v18, 20
    %v20 = vpop.permute.xlu0 %19
    %vm21 = vcmask 195744
    %22 = vst.msk [vmem:[#allocation0] sm:$0x1] %vm21, %v20
    %s23 = scalar_lea.vmem %s0, 4
    %v24 = vld [vmem:[%s23] sm:$0x1]
    %25 = vrot.lane.b32.xlu0 %v24, 16
    %v26 = vpop.permute.xlu0 %25
    %vm27 = vcmask 162944
    %28 = vst.msk [vmem:[#allocation0] sm:$0x1] %vm27, %v26
    %s29 = scalar_lea.vmem %s0, 3
    %v30 = vld [vmem:[%s29] sm:$0x1]
    %31 = vrot.lane.b32.xlu0 %v30, 12
    %v32 = vpop.permute.xlu0 %31
    %vm33 = vcmask 130144
    %34 = vst.msk [vmem:[#allocation0] sm:$0x1] %vm33, %v32
    %s35 = scalar_lea.vmem %s0, 2
    %v36 = vld [vmem:[%s35] sm:$0x1]
    %37 = vrot.lane.b32.xlu0 %v36, 8
    %v38 = vpop.permute.xlu0 %37
    %vm39 = vcmask 97344
    %40 = vst.msk [vmem:[#allocation0] sm:$0x1] %vm39, %v38
    %s41 = scalar_lea.vmem %s0, 1
    %v42 = vld [vmem:[%s41] sm:$0x1]
    %43 = vrot.lane.b32.xlu0 %v42, 4
    %v44 = vpop.permute.xlu0 %43
    %vm45 = vcmask 64544
    %46 = vst.msk [vmem:[#allocation0] sm:$0x1] %vm45, %v44
    %s48 = sshllo.u32 0, 1
    %v50 = vld [vmem:[#allocation0] sm:%s48]
    %s51 = sshllo.u32 0, 1
    %52 = vst [vmem:[%s1] sm:%s51] %v50

// kernel: tile.19
$region0: #{tile.19}
  %s0 = inlined_call_operand.vmem [shape: f32[8,4], index: 0, kind: input, shape index: {}]
  %s1 = inlined_call_operand.vmem [shape: f32[1,32], index: 1, kind: output, shape index: {}]
  $region1: #{tile.19} parent=0
    #allocation0 [shape = 'u8[4096]{0}', space=vmem, size = 0x1000, scoped, tag = 'scoped mem for output reshape']
    %v2 = vld [vmem:[%s0] sm:$0x1]
    %vm3 = vcmask 31744
    %4 = vst.msk [vmem:[#allocation0] sm:$0x1] %vm3, %v2
    %s5 = scalar_lea.vmem %s0, 7
    %v6 = vld [vmem:[%s5] sm:$0x1]
    %7 = vrot.lane.b32.xlu0 %v6, 28
    %v8 = vpop.permute.xlu0 %7
    %vm9 = vcmask 261344
    %10 = vst.msk [vmem:[#allocation0] sm:$0x1] %vm9, %v8
    %s11 = scalar_lea.vmem %s0, 6
    %v12 = vld [vmem:[%s11] sm:$0x1]
    %13 = vrot.lane.b32.xlu0 %v12, 24
    %v14 = vpop.permute.xlu0 %13
    %vm15 = vcmask 228544
    %16 = vst.msk [vmem:[#allocation0] sm:$0x1] %vm15, %v14
    %s17 = scalar_lea.vmem %s0, 5
    %v18 = vld [vmem:[%s17] sm:$0x1]
    %19 = vrot.lane.b32.xlu0 %v18, 20
    %v20 = vpop.permute.xlu0 %19
    %vm21 = vcmask 195744
    %22 = vst.msk [vmem:[#allocation0] sm:$0x1] %vm21, %v20
    %s23 = scalar_lea.vmem %s0, 4
    %v24 = vld [vmem:[%s23] sm:$0x1]
    %25 = vrot.lane.b32.xlu0 %v24, 16
    %v26 = vpop.permute.xlu0 %25
    %vm27 = vcmask 162944
    %28 = vst.msk [vmem:[#allocation0] sm:$0x1] %vm27, %v26
    %s29 = scalar_lea.vmem %s0, 3
    %v30 = vld [vmem:[%s29] sm:$0x1]
    %31 = vrot.lane.b32.xlu0 %v30, 12
    %v32 = vpop.permute.xlu0 %31
    %vm33 = vcmask 130144
    %34 = vst.msk [vmem:[#allocation0] sm:$0x1] %vm33, %v32
    %s35 = scalar_lea.vmem %s0, 2
    %v36 = vld [vmem:[%s35] sm:$0x1]
    %37 = vrot.lane.b32.xlu0 %v36, 8
    %v38 = vpop.permute.xlu0 %37
    %vm39 = vcmask 97344
    %40 = vst.msk [vmem:[#allocation0] sm:$0x1] %vm39, %v38
    %s41 = scalar_lea.vmem %s0, 1
    %v42 = vld [vmem:[%s41] sm:$0x1]
    %43 = vrot.lane.b32.xlu0 %v42, 4
    %v44 = vpop.permute.xlu0 %43
    %vm45 = vcmask 64544
    %46 = vst.msk [vmem:[#allocation0] sm:$0x1] %vm45, %v44
    %s48 = sshllo.u32 0, 1
    %v50 = vld [vmem:[#allocation0] sm:%s48]
    %s51 = sshllo.u32 0, 1
    %52 = vst [vmem:[%s1] sm:%s51] %v50

// kernel: multi_aggregation_forward.3
$region0: #{multi_aggregation_forward.3}
  #allocation0 [shape = 'u32[]', space=smem, size = 0x4, offset = 0x4, fixed_abs, tag = 'smem constant byte address 0x4 - core index']
  #allocation1 [shape = 'u32[144,128]{1,0:T(1,128)}', space=vmem, size = 0x12000, scoped, tag = 'internal scratch']
  #allocation2 [shape = 'f32[40,8]{1,0:T(8,128)}', space=vmem, size = 0x5000, scoped, tag = 'scratch operand']
  %s0 = inlined_call_operand.vmem [shape: bf16[2,10,101,4], index: 0, kind: input, shape index: {}]
  %s1 = inlined_call_operand.vmem [shape: bf16[3,36,8], index: 1, kind: input, shape index: {}]
  %s2 = inlined_call_operand.vmem [shape: f32[1,8], index: 2, kind: input, shape index: {}]
  %s3 = inlined_call_operand.vmem [shape: bf16[2,4,40,8], index: 3, kind: output, shape index: {}]
  %s4 = sld [smem:[#allocation0]]
  $region53: #{multi_aggregation_forward.3} parent=0
    _
  %s6 = ssub.s32 1, %s4
  %s7 = scalar_select 0, %s6, %s4
  loop: start=0, step=1, limit=26
  $region2: #{multi_aggregation_forward.3} parent=0 // loop_pre_header
    _
  $region3: #{multi_aggregation_forward.3} parent=0 // loop_header
    %s9 = sphi 0, %s13
    %p10 = scmp.ge.s32.totalorder %s9, 26
    %s16 = sphi 0, %s35
    %s17 = sphi 0, %s31
    %s18 = sphi 0, %s27
    %s19 = sphi 0, %s16
    %s20 = sphi 0, %s17
    %s21 = sphi 0, %s18
    %s22 = sphi 0, %s19
    %s23 = sphi 0, %s20
    %s24 = sphi 0, %s21
    %s44 = sphi 0, %s46
    %s47 = sphi 0, %s44
    %s48 = sphi 0, %s47
    %s64 = sphi 0, %s48
    %s70 = sphi 0, %s72
    %s73 = sphi 0, %s70
    %s74 = sphi 0, %s73
    %s90 = sphi 0, %s74
    %s94 = sphi 0, %s94
    %s96 = sphi 0, %s94
    %s97 = sphi 0, %s96
    %s111 = sphi 0, %s97
    %s119 = sphi 0, %s121
    %s122 = sphi 0, %s119
    %s123 = sphi 0, %s122
    %s139 = sphi 0, %s123
  $region4: #{multi_aggregation_forward.3} parent=0 // loop_header_branch
    %12 = sbr.rel (%p10) target = $region8
  $region5: #{multi_aggregation_forward.3} parent=0 // loop_body
    %s14 = ssub.s32 %s9, 1
    %s15 = ssub.s32 %s9, 2
    %s25 = sadd.s32 1, %s18
    %p26 = scmp.ge.s32.totalorder %s25, 3
    %s27 = scalar_select %p26, 0, %s25
    %s28 = sadd.s32 1, %s17
    %s29 = scalar_select %p26, %s28, %s17
    %p30 = scmp.ge.s32.totalorder %s29, 4
    %s31 = scalar_select %p30, 0, %s29
    %s32 = sadd.s32 1, %s16
    %s33 = scalar_select %p30, %s32, %s16
    %p34 = scmp.ge.s32.totalorder %s33, 2
    %s35 = scalar_select %p34, 0, %s33
    %s36 = smul.u32 %s17, 2
    %s37 = sadd.s32 %s36, %s18
    %s38 = smul.u32 %s31, 2
    %s39 = sadd.s32 %s38, %s27
    %s40 = ssub.s32 %s16, %s35
    %s41 = ssub.s32 %s37, %s39
    %s42 = sor.u32 %s40, %s41
    %p43 = scmp.eq.s32.totalorder %s42, 0
    %s45 = sadd.s32 %s44, 1
    %s46 = scalar_select %p43, %s44, %s45
    %p49 = pneg %p43
    %p50 = scmp.eq.s32.totalorder %s9, 23
    %p51 = por %p49, %p50
    %p52 = scmp.ne.s32.totalorder %s44, %s47
    %p53 = scmp.eq.s32.totalorder %s9, 0
    %p54 = por %p52, %p53
    %p55 = scmp.ne.s32.totalorder %s44, %s47
    %p56 = scmp.eq.s32.totalorder %s14, 23
    %p57 = por %p55, %p56
    %p58 = scmp.ne.s32.totalorder %s47, %s48
    %p59 = scmp.eq.s32.totalorder %s14, 0
    %p60 = por %p58, %p59
    %p61 = scmp.ne.s32.totalorder %s47, %s48
    %p62 = scmp.eq.s32.totalorder %s15, 23
    %p63 = por %p61, %p62
    %p65 = scmp.ne.s32.totalorder %s48, %s64
    %p66 = scmp.eq.s32.totalorder %s15, 0
    %p67 = por %p65, %p66
    %s68 = ssub.s32 %s18, %s27
    %p69 = scmp.eq.s32.totalorder %s68, 0
    %s71 = sadd.s32 %s70, 1
    %s72 = scalar_select %p69, %s70, %s71
    %p75 = pneg %p69
    %p76 = scmp.eq.s32.totalorder %s9, 23
    %p77 = por %p75, %p76
    %p78 = scmp.ne.s32.totalorder %s70, %s73
    %p79 = scmp.eq.s32.totalorder %s9, 0
    %p80 = por %p78, %p79
    %p81 = scmp.ne.s32.totalorder %s70, %s73
    %p82 = scmp.eq.s32.totalorder %s14, 23
    %p83 = por %p81, %p82
    %p84 = scmp.ne.s32.totalorder %s73, %s74
    %p85 = scmp.eq.s32.totalorder %s14, 0
    %p86 = por %p84, %p85
    %p87 = scmp.ne.s32.totalorder %s73, %s74
    %p88 = scmp.eq.s32.totalorder %s15, 23
    %p89 = por %p87, %p88
    %p91 = scmp.ne.s32.totalorder %s74, %s90
    %p92 = scmp.eq.s32.totalorder %s15, 0
    %p93 = por %p91, %p92
    %s95 = sadd.s32 %s94, 1
    %p98 = scmp.eq.s32.totalorder %s9, 23
    %p99 = scmp.ne.s32.totalorder %s94, %s96
    %p100 = scmp.eq.s32.totalorder %s9, 0
    %p101 = por %p99, %p100
    %p102 = scmp.ne.s32.totalorder %s94, %s96
    %p103 = scmp.eq.s32.totalorder %s14, 23
    %p104 = por %p102, %p103
    %p105 = scmp.ne.s32.totalorder %s96, %s97
    %p106 = scmp.eq.s32.totalorder %s14, 0
    %p107 = por %p105, %p106
    %p108 = scmp.ne.s32.totalorder %s96, %s97
    %p109 = scmp.eq.s32.totalorder %s15, 23
    %p110 = por %p108, %p109
    %p112 = scmp.ne.s32.totalorder %s97, %s111
    %p113 = scmp.eq.s32.totalorder %s15, 0
    %p114 = por %p112, %p113
    %s115 = ssub.s32 %s16, %s35
    %s116 = ssub.s32 %s17, %s31
    %s117 = sor.u32 %s115, %s116
    %p118 = scmp.eq.s32.totalorder %s117, 0
    %s120 = sadd.s32 %s119, 1
    %s121 = scalar_select %p118, %s119, %s120
    %p124 = pneg %p118
    %p125 = scmp.eq.s32.totalorder %s9, 23
    %p126 = por %p124, %p125
    %p127 = scmp.ne.s32.totalorder %s119, %s122
    %p128 = scmp.eq.s32.totalorder %s9, 0
    %p129 = por %p127, %p128
    %p130 = scmp.ne.s32.totalorder %s119, %s122
    %p131 = scmp.eq.s32.totalorder %s14, 23
    %p132 = por %p130, %p131
    %p133 = scmp.ne.s32.totalorder %s122, %s123
    %p134 = scmp.eq.s32.totalorder %s14, 0
    %p135 = por %p133, %p134
    %p136 = scmp.ne.s32.totalorder %s122, %s123
    %p137 = scmp.eq.s32.totalorder %s15, 23
    %p138 = por %p136, %p137
    %p140 = scmp.ne.s32.totalorder %s123, %s139
    %p141 = scmp.eq.s32.totalorder %s15, 0
    %p142 = por %p140, %p141
    %p143 = scmp.le.s32.totalorder 1, %s9
    %p144 = scmp.lt.s32.totalorder %s9, 25
    %p145 = pnand %p143, %p144
    %p146 = pneg %p145
    // Predicated region
    $region9: #{multi_aggregation_forward.3} parent=5 // pred_check
      _
    $region10: #{multi_aggregation_forward.3} parent=5 // pred_check_branch
      %148 = sbr.rel (%p145) target = $region12
    $region11: #{multi_aggregation_forward.3} parent=5 // pred_region
      %s149 = ssub.s32 %s9, 1
      // Predicated region
      $region13: #{multi_aggregation_forward.3} parent=11 // pred_check
        %p150 = pneg %p107
      $region14: #{multi_aggregation_forward.3} parent=11 // pred_check_branch
        %152 = sbr.rel (%p150) target = $region16
      $region15: #{multi_aggregation_forward.3} parent=11 // pred_region
        _
      $region16: #{multi_aggregation_forward.3} parent=11 // pred_fallthru
        _
    $region12: #{multi_aggregation_forward.3} parent=5 // pred_fallthru
      _
    %p153 = scmp.lt.s32.totalorder %s9, 24
    // Predicated region
    $region17: #{multi_aggregation_forward.3} parent=5 // pred_check
      %p154 = pneg %p153
    $region18: #{multi_aggregation_forward.3} parent=5 // pred_check_branch
      %156 = sbr.rel (%p154) target = $region20
    $region19: #{multi_aggregation_forward.3} parent=5 // pred_region
      // Predicated region
      $region21: #{multi_aggregation_forward.3} parent=19 // pred_check
        %p157 = pneg %p54
      $region22: #{multi_aggregation_forward.3} parent=19 // pred_check_branch
        %159 = sbr.rel (%p157) target = $region24
      $region23: #{multi_aggregation_forward.3} parent=19 // pred_region
        %s160 = smul.u32 %s17, 2
        %s161 = sadd.s32 %s160, %s18
        %p162 = scmp.lt.s32.totalorder %s16, 1
        %s163 = scalar_select %p162, %s16, 1
        %p164 = scmp.lt.s32.totalorder %s161, 9
        %s165 = scalar_select %p164, %s161, 9
        %s166 = smul.addr %s165, 13
        %s167 = smul.addr %s163, 130
        %s168 = sadd.s32 %s166, %s167
        %s169 = smul.addr %s168, 4
        %s170 = scalar_lea.vmem %s0, %s169
        %s171 = smul.u32 %s17, 2
        %s172 = sadd.s32 %s171, %s18
      $region24: #{multi_aggregation_forward.3} parent=19 // pred_fallthru
        _
      // Predicated region
      $region25: #{multi_aggregation_forward.3} parent=19 // pred_check
        %p173 = pneg %p80
      $region26: #{multi_aggregation_forward.3} parent=19 // pred_check_branch
        %175 = sbr.rel (%p173) target = $region28
      $region27: #{multi_aggregation_forward.3} parent=19 // pred_region
        %p176 = scmp.lt.s32.totalorder %s18, 2
        %s177 = scalar_select %p176, %s18, 2
        %s178 = smul.addr %s177, 5
        %s179 = smul.addr %s178, 4
        %s180 = scalar_lea.vmem %s1, %s179
      $region28: #{multi_aggregation_forward.3} parent=19 // pred_fallthru
        _
    $region20: #{multi_aggregation_forward.3} parent=5 // pred_fallthru
      _
    %p181 = scmp.le.s32.totalorder 1, %s9
    %p182 = scmp.lt.s32.totalorder %s9, 25
    %p183 = pnand %p181, %p182
    %p184 = pneg %p183
    // Predicated region
    $region29: #{multi_aggregation_forward.3} parent=5 // pred_check
      _
    $region30: #{multi_aggregation_forward.3} parent=5 // pred_check_branch
      %186 = sbr.rel (%p183) target = $region32
    $region31: #{multi_aggregation_forward.3} parent=5 // pred_region
      %s187 = ssub.s32 %s9, 1
      %s188 = smul.u32 %s20, 2
      %s189 = sadd.s32 %s188, %s21
      %p190 = scmp.lt.s32.totalorder %s19, 1
      %s191 = scalar_select %p190, %s19, 1
      %p192 = scmp.lt.s32.totalorder %s189, 9
      %s193 = scalar_select %p192, %s189, 9
      %s194 = smul.addr %s193, 13
      %s195 = smul.addr %s191, 130
      %s196 = sadd.s32 %s194, %s195
      %s197 = smul.addr %s196, 4
      %s198 = scalar_lea.vmem %s0, %s197
      %p199 = pneg %p60
      %p200 = pneg %p57
      %p201 = scmp.lt.s32.totalorder %s21, 2
      %s202 = scalar_select %p201, %s21, 2
      %s203 = smul.addr %s202, 5
      %s204 = smul.addr %s203, 4
      %s205 = scalar_lea.vmem %s1, %s204
      %p206 = pneg %p86
      %p207 = pneg %p83
      %p208 = pneg %p107
      %p209 = pneg %p104
      %p210 = pneg %p135
      %p211 = pneg %p132
      %p212 = scmp.lt.s32.totalorder %s19, 1
      %s213 = scalar_select %p212, %s19, 1
      %p214 = scmp.lt.s32.totalorder %s20, 3
      %s215 = scalar_select %p214, %s20, 3
      %s216 = smul.addr %s215, 5
      %s217 = smul.addr %s213, 20
      %s218 = sadd.s32 %s216, %s217
      %s219 = smul.addr %s218, 4
      %s220 = scalar_lea.vmem %s3, %s219
      %s221 = smul.u32 %s20, 2
      %s222 = sadd.s32 %s221, %s21
      %p223 = scmp.lt.s32.totalorder %s19, 1
      %s224 = scalar_select %p223, %s19, 1
      %p225 = scmp.lt.s32.totalorder %s222, 9
      %s226 = scalar_select %p225, %s222, 9
      %s227 = smul.addr %s226, 13
      %s228 = smul.addr %s224, 130
      %s229 = sadd.s32 %s227, %s228
      %s230 = smul.addr %s229, 4
      %s231 = scalar_lea.vmem %s0, %s230
      %s232 = smul.u32 %s20, 2
      %s233 = sadd.s32 %s232, %s21
      %p234 = scmp.lt.s32.totalorder %s21, 2
      %s235 = scalar_select %p234, %s21, 2
      %s236 = smul.addr %s235, 5
      %s237 = smul.addr %s236, 4
      %s238 = scalar_lea.vmem %s1, %s237
      %p239 = scmp.lt.s32.totalorder %s19, 1
      %s240 = scalar_select %p239, %s19, 1
      %p241 = scmp.lt.s32.totalorder %s20, 3
      %s242 = scalar_select %p241, %s20, 3
      %s243 = smul.addr %s242, 5
      %s244 = smul.addr %s240, 20
      %s245 = sadd.s32 %s243, %s244
      %s246 = smul.addr %s245, 4
      %s247 = scalar_lea.vmem %s3, %s246
      %p249 = scmp.eq.s32.totalorder %s21, 0
      // Predicated region
      $region33: #{multi_aggregation_forward.3} parent=31 // pred_check
        %p250 = pneg %p249
      $region34: #{multi_aggregation_forward.3} parent=31 // pred_check_branch
        %252 = sbr.rel (%p250) target = $region36
      $region35: #{multi_aggregation_forward.3} parent=31 // pred_region
        %vm253 = vcmask 64512
        %254 = vst.msk [vmem:[#allocation2] sm:$0xff] %vm253, 0.0
        %255 = vst.msk [vmem:[#allocation2 + $0x8] sm:$0xff] %vm253, 0.0
        %256 = vst.msk [vmem:[#allocation2 + $0x10] sm:$0xff] %vm253, 0.0
        %257 = vst.msk [vmem:[#allocation2 + $0x18] sm:$0xff] %vm253, 0.0
        %258 = vst.msk [vmem:[#allocation2 + $0x20] sm:$0xff] %vm253, 0.0
      $region36: #{multi_aggregation_forward.3} parent=31 // pred_fallthru
        _
      %v259 = vld [vmem:[#allocation2] sm:$0xff]
      %v260 = vld [vmem:[#allocation2 + $0x8] sm:$0xff]
      %v261 = vld [vmem:[#allocation2 + $0x10] sm:$0xff]
      %v262 = vld [vmem:[#allocation2 + $0x18] sm:$0xff]
      %v263 = vld [vmem:[#allocation2 + $0x20] sm:$0xff]
      %v264 = vld [vmem:[%s231] sm:$0xf]
      %v265 = vld [vmem:[%s231 + $0x4] sm:$0xf]
      %v266 = vld [vmem:[%s231 + $0x8] sm:$0xf]
      %v267 = vld [vmem:[%s231 + $0xc] sm:$0xf]
      %v268 = vld [vmem:[%s231 + $0x10] sm:$0xf]
      %v269 = vld [vmem:[%s238] sm:$0x3]
      %v275 = vunpack.c.l.b16 %v264
      %v276 = vunpack.c.l.b16 %v265
      %v277 = vunpack.c.l.b16 %v266
      %v278 = vunpack.c.l.b16 %v267
      %v279 = vunpack.c.l.b16 %v268
      %v280 = vpack.c.b16 %v276, %v275
      %v281 = vpack.c.b16 %v278, %v277
      %v282 = vpack.c.b16 %v279, %v279
      %vm283 = vcmask 31744
      %v285 = vsel %vm283, %v280, 0
      %v288 = vsel %vm283, %v281, 0
      %v291 = vsel %vm283, %v282, 0
      %vm293 = vcmask 1041408
      %v295 = vsel %vm293, %v269, 0
      %297 = vmatprep.subr.bf16.mxu0 0
      %298 = vmatpush1.bf16.msra.mxu0 %v295
      %299 = vmatprep.subr.bf16.mxu0 0
      %300 = vmatpush1.bf16.msra.mxu0 0
      %301 = vmatprep.subr.bf16.mxu0 0
      %302 = vmatpush1.bf16.msra.mxu0 0
      %303 = vmatprep.subr.bf16.mxu0 0
      %304 = vmatpush1.bf16.msra.mxu0 0
      %305 = vmatprep.subr.bf16.mxu0 0
      %306 = vmatpush1.bf16.msra.mxu0 0
      %307 = vmatprep.subr.bf16.mxu0 0
      %308 = vmatpush1.bf16.msra.mxu0 0
      %309 = vmatprep.subr.bf16.mxu0 0
      %310 = vmatpush1.bf16.msra.mxu0 0
      %311 = vmatprep.subr.bf16.mxu0 0
      %312 = vmatpush1.bf16.msra.mxu0 0
      %313 = vmatprep.subr.bf16.mxu0 0
      %314 = vmatpush1.bf16.msra.mxu0 0
      %315 = vmatprep.subr.bf16.mxu0 0
      %316 = vmatpush1.bf16.msra.mxu0 0
      %317 = vmatprep.subr.bf16.mxu0 0
      %318 = vmatpush1.bf16.msra.mxu0 0
      %319 = vmatprep.subr.bf16.mxu0 0
      %320 = vmatpush1.bf16.msra.mxu0 0
      %321 = vmatprep.subr.bf16.mxu0 0
      %322 = vmatpush1.bf16.msra.mxu0 0
      %323 = vmatprep.subr.bf16.mxu0 0
      %324 = vmatpush1.bf16.msra.mxu0 0
      %325 = vmatprep.subr.bf16.mxu0 0
      %326 = vmatpush1.bf16.msra.mxu0 0
      %327 = vmatprep.subr.bf16.mxu0 0
      %328 = vmatpush1.bf16.msra.mxu0 0
      %329 = vmatprep.mubr.bf16.mxu0 0
      %330 = vmatmul.mubr.bf16.gmra.mrb[0].mxu0 %v285
      %v331 = vpop.f32.mrb[0].mxu0
      %v332 = vadd.f32 0.0, %v331
      %v333 = vpop.f32.mrb[0].mxu0
      %v334 = vpop.f32.mrb[0].mxu0
      %v335 = vadd.f32 0.0, %v334
      %v336 = vpop.f32.mrb[0].mxu0
      %337 = vmatprep.mubr.bf16.mxu0 0
      %338 = vmatmul.mubr.bf16.gmra.mrb[0].mxu0 %v288
      %v339 = vpop.f32.mrb[0].mxu0
      %v340 = vadd.f32 0.0, %v339
      %v341 = vpop.f32.mrb[0].mxu0
      %v342 = vpop.f32.mrb[0].mxu0
      %v343 = vadd.f32 0.0, %v342
      %v344 = vpop.f32.mrb[0].mxu0
      %345 = vmatprep.mubr.bf16.mxu0 0
      %346 = vmatmul.mubr.bf16.gmra.mrb[0].mxu0 %v291
      %v347 = vpop.f32.mrb[0].mxu0
      %v348 = vadd.f32 0.0, %v347
      %v349 = vpop.f32.mrb[0].mxu0
      %v350 = vpop.f32.mrb[0].mxu0
      %v351 = vpop.f32.mrb[0].mxu0
      %352 = vdwg.mxu0
      %v353 = vadd.f32 %v259, %v332
      %v354 = vadd.f32 %v260, %v335
      %v355 = vadd.f32 %v261, %v340
      %v356 = vadd.f32 %v262, %v343
      %v357 = vadd.f32 %v263, %v348
      %v358 = vld [vmem:[%s231 + $0x18] sm:$0xe]
      %v359 = vld [vmem:[%s231 + $0x1c] sm:$0xf]
      %v360 = vld [vmem:[%s231 + $0x20] sm:$0xf]
      %v361 = vld [vmem:[%s231 + $0x24] sm:$0xf]
      %v362 = vld [vmem:[%s231 + $0x28] sm:$0xf]
      %v363 = vld [vmem:[%s231 + $0x2c] sm:$0x3]
      %v364 = vld [vmem:[%s238] sm:$0xc]
      %v371 = vunpack.c.l.b16 %v358
      %v372 = vunpack.c.l.b16 %v359
      %v373 = vunpack.c.l.b16 %v360
      %v374 = vunpack.c.l.b16 %v361
      %v375 = vunpack.c.l.b16 %v362
      %v376 = vunpack.c.l.b16 %v363
      %v377 = vpack.c.b16 %v372, %v371
      %v378 = vpack.c.b16 %v374, %v373
      %v379 = vpack.c.b16 %v376, %v375
      %vm380 = vsmask.f32 6400
      %v382 = vshrl.u32 %v377, 16
      %v384 = vrot.slane %v382, 1
      %v385 = vshll.u32 %v377, 16
      %v387 = vrot.slane %v385, 2
      %v388 = vor.u32 %v384, %v387
      %v390 = vshrl.u32 %v378, 16
      %v392 = vrot.slane %v390, 1
      %v393 = vshll.u32 %v378, 16
      %v395 = vrot.slane %v393, 2
      %v396 = vor.u32 %v392, %v395
      %v397 = vsel %vm380, %v388, %v396
      %v399 = vshrl.u32 %v379, 16
      %v401 = vrot.slane %v399, 1
      %v402 = vshll.u32 %v379, 16
      %v404 = vrot.slane %v402, 2
      %v405 = vor.u32 %v401, %v404
      %v406 = vsel %vm380, %v396, %v405
      %v408 = vunpack.c.l.b16 %v364
      %v409 = vpack.c.b16 %v408, %v408
      %v410 = vrot.slane %v409, 2
      %v412 = vsel %vm283, %v397, 0
      %v415 = vsel %vm283, %v406, 0
      %v418 = vsel %vm283, %v405, 0
      %v421 = vsel %vm293, %v410, 0
      %423 = vmatprep.subr.bf16.mxu0 0
      %424 = vmatpush1.bf16.msra.mxu0 %v421
      %425 = vmatprep.subr.bf16.mxu0 0
      %426 = vmatpush1.bf16.msra.mxu0 0
      %427 = vmatprep.subr.bf16.mxu0 0
      %428 = vmatpush1.bf16.msra.mxu0 0
      %429 = vmatprep.subr.bf16.mxu0 0
      %430 = vmatpush1.bf16.msra.mxu0 0
      %431 = vmatprep.subr.bf16.mxu0 0
      %432 = vmatpush1.bf16.msra.mxu0 0
      %433 = vmatprep.subr.bf16.mxu0 0
      %434 = vmatpush1.bf16.msra.mxu0 0
      %435 = vmatprep.subr.bf16.mxu0 0
      %436 = vmatpush1.bf16.msra.mxu0 0
      %437 = vmatprep.subr.bf16.mxu0 0
      %438 = vmatpush1.bf16.msra.mxu0 0
      %439 = vmatprep.subr.bf16.mxu0 0
      %440 = vmatpush1.bf16.msra.mxu0 0
      %441 = vmatprep.subr.bf16.mxu0 0
      %442 = vmatpush1.bf16.msra.mxu0 0
      %443 = vmatprep.subr.bf16.mxu0 0
      %444 = vmatpush1.bf16.msra.mxu0 0
      %445 = vmatprep.subr.bf16.mxu0 0
      %446 = vmatpush1.bf16.msra.mxu0 0
      %447 = vmatprep.subr.bf16.mxu0 0
      %448 = vmatpush1.bf16.msra.mxu0 0
      %449 = vmatprep.subr.bf16.mxu0 0
      %450 = vmatpush1.bf16.msra.mxu0 0
      %451 = vmatprep.subr.bf16.mxu0 0
      %452 = vmatpush1.bf16.msra.mxu0 0
      %453 = vmatprep.subr.bf16.mxu0 0
      %454 = vmatpush1.bf16.msra.mxu0 0
      %455 = vmatprep.mubr.bf16.mxu0 0
      %456 = vmatmul.mubr.bf16.gmra.mrb[0].mxu0 %v412
      %v457 = vpop.f32.mrb[0].mxu0
      %v458 = vadd.f32 0.0, %v457
      %v459 = vpop.f32.mrb[0].mxu0
      %v460 = vpop.f32.mrb[0].mxu0
      %v461 = vadd.f32 0.0, %v460
      %v462 = vpop.f32.mrb[0].mxu0
      %463 = vmatprep.mubr.bf16.mxu0 0
      %464 = vmatmul.mubr.bf16.gmra.mrb[0].mxu0 %v415
      %v465 = vpop.f32.mrb[0].mxu0
      %v466 = vadd.f32 0.0, %v465
      %v467 = vpop.f32.mrb[0].mxu0
      %v468 = vpop.f32.mrb[0].mxu0
      %v469 = vadd.f32 0.0, %v468
      %v470 = vpop.f32.mrb[0].mxu0
      %471 = vmatprep.mubr.bf16.mxu0 0
      %472 = vmatmul.mubr.bf16.gmra.mrb[0].mxu0 %v418
      %v473 = vpop.f32.mrb[0].mxu0
      %v474 = vadd.f32 0.0, %v473
      %v475 = vpop.f32.mrb[0].mxu0
      %v476 = vpop.f32.mrb[0].mxu0
      %v477 = vpop.f32.mrb[0].mxu0
      %478 = vdwg.mxu0
      %v479 = vadd.f32 %v353, %v458
      %v480 = vadd.f32 %v354, %v461
      %v481 = vadd.f32 %v355, %v466
      %v482 = vadd.f32 %v356, %v469
      %v483 = vadd.f32 %v357, %v474
      %v484 = vld [vmem:[%s231] sm:$0xf]
      %v485 = vld [vmem:[%s231 + $0x4] sm:$0xf]
      %v486 = vld [vmem:[%s231 + $0x8] sm:$0xf]
      %v487 = vld [vmem:[%s231 + $0xc] sm:$0xf]
      %v488 = vld [vmem:[%s231 + $0x10] sm:$0xf]
      %v489 = vld [vmem:[%s231 + $0x14] sm:$0x1]
      %v490 = vld [vmem:[%s238 + $0x4] sm:$0x3]
      %v497 = vunpack.c.l.b16 %v484
      %v498 = vunpack.c.l.b16 %v485
      %v499 = vunpack.c.l.b16 %v486
      %v500 = vunpack.c.l.b16 %v487
      %v501 = vunpack.c.l.b16 %v488
      %v502 = vunpack.c.l.b16 %v489
      %v503 = vpack.c.b16 %v498, %v497
      %v504 = vpack.c.b16 %v500, %v499
      %v505 = vpack.c.b16 %v502, %v501
      %vm506 = vsmask.f32 7424
      %v508 = vshrl.u32 %v503, 16
      %v510 = vshll.u32 %v503, 16
      %v512 = vrot.slane %v510, 1
      %v513 = vor.u32 %v508, %v512
      %v515 = vshll.u32 %v504, 16
      %v517 = vrot.slane %v515, 1
      %v518 = vsel %vm506, %v513, %v517
      %v519 = vshrl.u32 %v504, 16
      %v521 = vor.u32 %v519, %v517
      %v523 = vshll.u32 %v505, 16
      %v525 = vrot.slane %v523, 1
      %v526 = vsel %vm506, %v521, %v525
      %v527 = vshrl.u32 %v505, 16
      %v529 = vor.u32 %v527, %v525
      %v531 = vsel %vm283, %v518, 0
      %v534 = vsel %vm283, %v526, 0
      %v537 = vsel %vm283, %v529, 0
      %v540 = vsel %vm293, %v490, 0
      %542 = vmatprep.subr.bf16.mxu0 0
      %543 = vmatpush1.bf16.msra.mxu0 %v540
      %544 = vmatprep.subr.bf16.mxu0 0
      %545 = vmatpush1.bf16.msra.mxu0 0
      %546 = vmatprep.subr.bf16.mxu0 0
      %547 = vmatpush1.bf16.msra.mxu0 0
      %548 = vmatprep.subr.bf16.mxu0 0
      %549 = vmatpush1.bf16.msra.mxu0 0
      %550 = vmatprep.subr.bf16.mxu0 0
      %551 = vmatpush1.bf16.msra.mxu0 0
      %552 = vmatprep.subr.bf16.mxu0 0
      %553 = vmatpush1.bf16.msra.mxu0 0
      %554 = vmatprep.subr.bf16.mxu0 0
      %555 = vmatpush1.bf16.msra.mxu0 0
      %556 = vmatprep.subr.bf16.mxu0 0
      %557 = vmatpush1.bf16.msra.mxu0 0
      %558 = vmatprep.subr.bf16.mxu0 0
      %559 = vmatpush1.bf16.msra.mxu0 0
      %560 = vmatprep.subr.bf16.mxu0 0
      %561 = vmatpush1.bf16.msra.mxu0 0
      %562 = vmatprep.subr.bf16.mxu0 0
      %563 = vmatpush1.bf16.msra.mxu0 0
      %564 = vmatprep.subr.bf16.mxu0 0
      %565 = vmatpush1.bf16.msra.mxu0 0
      %566 = vmatprep.subr.bf16.mxu0 0
      %567 = vmatpush1.bf16.msra.mxu0 0
      %568 = vmatprep.subr.bf16.mxu0 0
      %569 = vmatpush1.bf16.msra.mxu0 0
      %570 = vmatprep.subr.bf16.mxu0 0
      %571 = vmatpush1.bf16.msra.mxu0 0
      %572 = vmatprep.subr.bf16.mxu0 0
      %573 = vmatpush1.bf16.msra.mxu0 0
      %574 = vmatprep.mubr.bf16.mxu0 0
      %575 = vmatmul.mubr.bf16.gmra.mrb[0].mxu0 %v531
      %v576 = vpop.f32.mrb[0].mxu0
      %v577 = vadd.f32 0.0, %v576
      %v578 = vpop.f32.mrb[0].mxu0
      %v579 = vpop.f32.mrb[0].mxu0
      %v580 = vadd.f32 0.0, %v579
      %v581 = vpop.f32.mrb[0].mxu0
      %582 = vmatprep.mubr.bf16.mxu0 0
      %583 = vmatmul.mubr.bf16.gmra.mrb[0].mxu0 %v534
      %v584 = vpop.f32.mrb[0].mxu0
      %v585 = vadd.f32 0.0, %v584
      %v586 = vpop.f32.mrb[0].mxu0
      %v587 = vpop.f32.mrb[0].mxu0
      %v588 = vadd.f32 0.0, %v587
      %v589 = vpop.f32.mrb[0].mxu0
      %590 = vmatprep.mubr.bf16.mxu0 0
      %591 = vmatmul.mubr.bf16.gmra.mrb[0].mxu0 %v537
      %v592 = vpop.f32.mrb[0].mxu0
      %v593 = vadd.f32 0.0, %v592
      %v594 = vpop.f32.mrb[0].mxu0
      %v595 = vpop.f32.mrb[0].mxu0
      %v596 = vpop.f32.mrb[0].mxu0
      %597 = vdwg.mxu0
      %v598 = vadd.f32 %v479, %v577
      %v599 = vadd.f32 %v480, %v580
      %v600 = vadd.f32 %v481, %v585
      %v601 = vadd.f32 %v482, %v588
      %v602 = vadd.f32 %v483, %v593
      %v603 = vld [vmem:[%s231] sm:$0xc]
      %v604 = vld [vmem:[%s231 + $0x14] sm:$0x7]
      %v605 = vld [vmem:[%s238 + $0x4] sm:$0xc]
      %v608 = vunpack.c.l.b16 %v603
      %v609 = vunpack.c.l.b16 %v604
      %v610 = vpack.c.b16 %v498, %v608
      %v611 = vpack.c.b16 %v609, %v501
      %vm612 = vsmask.f32 5376
      %v614 = vshrl.u32 %v610, 16
      %v616 = vrot.slane %v614, 2
      %v617 = vshll.u32 %v610, 16
      %v619 = vrot.slane %v617, 3
      %v620 = vor.u32 %v616, %v619
      %v621 = vrot.slane %v519, 2
      %v622 = vrot.slane %v515, 3
      %v623 = vor.u32 %v621, %v622
      %v624 = vsel %vm612, %v620, %v623
      %v626 = vshrl.u32 %v611, 16
      %v628 = vrot.slane %v626, 2
      %v629 = vshll.u32 %v611, 16
      %v631 = vrot.slane %v629, 3
      %v632 = vor.u32 %v628, %v631
      %v633 = vsel %vm612, %v623, %v632
      %v635 = vunpack.c.l.b16 %v605
      %v636 = vpack.c.b16 %v635, %v635
      %v637 = vrot.slane %v636, 2
      %v639 = vsel %vm283, %v624, 0
      %v642 = vsel %vm283, %v633, 0
      %v645 = vsel %vm283, %v632, 0
      %v648 = vsel %vm293, %v637, 0
      %650 = vmatprep.subr.bf16.mxu0 0
      %651 = vmatpush1.bf16.msra.mxu0 %v648
      %652 = vmatprep.subr.bf16.mxu0 0
      %653 = vmatpush1.bf16.msra.mxu0 0
      %654 = vmatprep.subr.bf16.mxu0 0
      %655 = vmatpush1.bf16.msra.mxu0 0
      %656 = vmatprep.subr.bf16.mxu0 0
      %657 = vmatpush1.bf16.msra.mxu0 0
      %658 = vmatprep.subr.bf16.mxu0 0
      %659 = vmatpush1.bf16.msra.mxu0 0
      %660 = vmatprep.subr.bf16.mxu0 0
      %661 = vmatpush1.bf16.msra.mxu0 0
      %662 = vmatprep.subr.bf16.mxu0 0
      %663 = vmatpush1.bf16.msra.mxu0 0
      %664 = vmatprep.subr.bf16.mxu0 0
      %665 = vmatpush1.bf16.msra.mxu0 0
      %666 = vmatprep.subr.bf16.mxu0 0
      %667 = vmatpush1.bf16.msra.mxu0 0
      %668 = vmatprep.subr.bf16.mxu0 0
      %669 = vmatpush1.bf16.msra.mxu0 0
      %670 = vmatprep.subr.bf16.mxu0 0
      %671 = vmatpush1.bf16.msra.mxu0 0
      %672 = vmatprep.subr.bf16.mxu0 0
      %673 = vmatpush1.bf16.msra.mxu0 0
      %674 = vmatprep.subr.bf16.mxu0 0
      %675 = vmatpush1.bf16.msra.mxu0 0
      %676 = vmatprep.subr.bf16.mxu0 0
      %677 = vmatpush1.bf16.msra.mxu0 0
      %678 = vmatprep.subr.bf16.mxu0 0
      %679 = vmatpush1.bf16.msra.mxu0 0
      %680 = vmatprep.subr.bf16.mxu0 0
      %681 = vmatpush1.bf16.msra.mxu0 0
      %682 = vmatprep.mubr.bf16.mxu0 0
      %683 = vmatmul.mubr.bf16.gmra.mrb[0].mxu0 %v639
      %v684 = vpop.f32.mrb[0].mxu0
      %v685 = vadd.f32 0.0, %v684
      %v686 = vpop.f32.mrb[0].mxu0
      %v687 = vpop.f32.mrb[0].mxu0
      %v688 = vadd.f32 0.0, %v687
      %v689 = vpop.f32.mrb[0].mxu0
      %690 = vmatprep.mubr.bf16.mxu0 0
      %691 = vmatmul.mubr.bf16.gmra.mrb[0].mxu0 %v642
      %v692 = vpop.f32.mrb[0].mxu0
      %v693 = vadd.f32 0.0, %v692
      %v694 = vpop.f32.mrb[0].mxu0
      %v695 = vpop.f32.mrb[0].mxu0
      %v696 = vadd.f32 0.0, %v695
      %v697 = vpop.f32.mrb[0].mxu0
      %698 = vmatprep.mubr.bf16.mxu0 0
      %699 = vmatmul.mubr.bf16.gmra.mrb[0].mxu0 %v645
      %v700 = vpop.f32.mrb[0].mxu0
      %v701 = vadd.f32 0.0, %v700
      %v702 = vpop.f32.mrb[0].mxu0
      %v703 = vpop.f32.mrb[0].mxu0
      %v704 = vpop.f32.mrb[0].mxu0
      %705 = vdwg.mxu0
      %v706 = vadd.f32 %v598, %v685
      %v707 = vadd.f32 %v599, %v688
      %v708 = vadd.f32 %v600, %v693
      %v709 = vadd.f32 %v601, %v696
      %v710 = vadd.f32 %v602, %v701
      %v711 = vld [vmem:[%s231 + $0x2c] sm:$0xf]
      %v712 = vld [vmem:[%s238 + $0x8] sm:$0x3]
      %v714 = vunpack.c.l.b16 %v711
      %v715 = vpack.c.b16 %v373, %v372
      %v716 = vpack.c.b16 %v375, %v374
      %v717 = vpack.c.b16 %v714, %v714
      %v719 = vsel %vm283, %v715, 0
      %v722 = vsel %vm283, %v716, 0
      %v725 = vsel %vm283, %v717, 0
      %v728 = vsel %vm293, %v712, 0
      %730 = vmatprep.subr.bf16.mxu0 0
      %731 = vmatpush1.bf16.msra.mxu0 %v728
      %732 = vmatprep.subr.bf16.mxu0 0
      %733 = vmatpush1.bf16.msra.mxu0 0
      %734 = vmatprep.subr.bf16.mxu0 0
      %735 = vmatpush1.bf16.msra.mxu0 0
      %736 = vmatprep.subr.bf16.mxu0 0
      %737 = vmatpush1.bf16.msra.mxu0 0
      %738 = vmatprep.subr.bf16.mxu0 0
      %739 = vmatpush1.bf16.msra.mxu0 0
      %740 = vmatprep.subr.bf16.mxu0 0
      %741 = vmatpush1.bf16.msra.mxu0 0
      %742 = vmatprep.subr.bf16.mxu0 0
      %743 = vmatpush1.bf16.msra.mxu0 0
      %744 = vmatprep.subr.bf16.mxu0 0
      %745 = vmatpush1.bf16.msra.mxu0 0
      %746 = vmatprep.subr.bf16.mxu0 0
      %747 = vmatpush1.bf16.msra.mxu0 0
      %748 = vmatprep.subr.bf16.mxu0 0
      %749 = vmatpush1.bf16.msra.mxu0 0
      %750 = vmatprep.subr.bf16.mxu0 0
      %751 = vmatpush1.bf16.msra.mxu0 0
      %752 = vmatprep.subr.bf16.mxu0 0
      %753 = vmatpush1.bf16.msra.mxu0 0
      %754 = vmatprep.subr.bf16.mxu0 0
      %755 = vmatpush1.bf16.msra.mxu0 0
      %756 = vmatprep.subr.bf16.mxu0 0
      %757 = vmatpush1.bf16.msra.mxu0 0
      %758 = vmatprep.subr.bf16.mxu0 0
      %759 = vmatpush1.bf16.msra.mxu0 0
      %760 = vmatprep.subr.bf16.mxu0 0
      %761 = vmatpush1.bf16.msra.mxu0 0
      %762 = vmatprep.mubr.bf16.mxu0 0
      %763 = vmatmul.mubr.bf16.gmra.mrb[0].mxu0 %v719
      %v764 = vpop.f32.mrb[0].mxu0
      %v765 = vadd.f32 0.0, %v764
      %v766 = vpop.f32.mrb[0].mxu0
      %v767 = vpop.f32.mrb[0].mxu0
      %v768 = vadd.f32 0.0, %v767
      %v769 = vpop.f32.mrb[0].mxu0
      %770 = vmatprep.mubr.bf16.mxu0 0
      %771 = vmatmul.mubr.bf16.gmra.mrb[0].mxu0 %v722
      %v772 = vpop.f32.mrb[0].mxu0
      %v773 = vadd.f32 0.0, %v772
      %v774 = vpop.f32.mrb[0].mxu0
      %v775 = vpop.f32.mrb[0].mxu0
      %v776 = vadd.f32 0.0, %v775
      %v777 = vpop.f32.mrb[0].mxu0
      %778 = vmatprep.mubr.bf16.mxu0 0
      %779 = vmatmul.mubr.bf16.gmra.mrb[0].mxu0 %v725
      %v780 = vpop.f32.mrb[0].mxu0
      %v781 = vadd.f32 0.0, %v780
      %v782 = vpop.f32.mrb[0].mxu0
      %v783 = vpop.f32.mrb[0].mxu0
      %v784 = vpop.f32.mrb[0].mxu0
      %785 = vdwg.mxu0
      %v786 = vadd.f32 %v706, %v765
      %v787 = vadd.f32 %v707, %v768
      %v788 = vadd.f32 %v708, %v773
      %v789 = vadd.f32 %v709, %v776
      %v790 = vadd.f32 %v710, %v781
      %v791 = vld [vmem:[%s231] sm:$0x8]
      %v792 = vld [vmem:[%s238 + $0x8] sm:$0xc]
      %v794 = vunpack.c.l.b16 %v791
      %v795 = vpack.c.b16 %v498, %v794
      %vm796 = vcmask 1044480
      %v797 = vrot.slane %v795, 3
      %v798 = vrot.slane %v504, 3
      %v799 = vsel %vm796, %v797, %v798
      %v800 = vrot.slane %v611, 3
      %v801 = vsel %vm796, %v798, %v800
      %v803 = vunpack.c.l.b16 %v792
      %v804 = vpack.c.b16 %v803, %v803
      %v805 = vrot.slane %v804, 2
      %v807 = vsel %vm283, %v799, 0
      %v810 = vsel %vm283, %v801, 0
      %v813 = vsel %vm283, %v800, 0
      %v816 = vsel %vm293, %v805, 0
      %818 = vmatprep.subr.bf16.mxu0 0
      %819 = vmatpush1.bf16.msra.mxu0 %v816
      %820 = vmatprep.subr.bf16.mxu0 0
      %821 = vmatpush1.bf16.msra.mxu0 0
      %822 = vmatprep.subr.bf16.mxu0 0
      %823 = vmatpush1.bf16.msra.mxu0 0
      %824 = vmatprep.subr.bf16.mxu0 0
      %825 = vmatpush1.bf16.msra.mxu0 0
      %826 = vmatprep.subr.bf16.mxu0 0
      %827 = vmatpush1.bf16.msra.mxu0 0
      %828 = vmatprep.subr.bf16.mxu0 0
      %829 = vmatpush1.bf16.msra.mxu0 0
      %830 = vmatprep.subr.bf16.mxu0 0
      %831 = vmatpush1.bf16.msra.mxu0 0
      %832 = vmatprep.subr.bf16.mxu0 0
      %833 = vmatpush1.bf16.msra.mxu0 0
      %834 = vmatprep.subr.bf16.mxu0 0
      %835 = vmatpush1.bf16.msra.mxu0 0
      %836 = vmatprep.subr.bf16.mxu0 0
      %837 = vmatpush1.bf16.msra.mxu0 0
      %838 = vmatprep.subr.bf16.mxu0 0
      %839 = vmatpush1.bf16.msra.mxu0 0
      %840 = vmatprep.subr.bf16.mxu0 0
      %841 = vmatpush1.bf16.msra.mxu0 0
      %842 = vmatprep.subr.bf16.mxu0 0
      %843 = vmatpush1.bf16.msra.mxu0 0
      %844 = vmatprep.subr.bf16.mxu0 0
      %845 = vmatpush1.bf16.msra.mxu0 0
      %846 = vmatprep.subr.bf16.mxu0 0
      %847 = vmatpush1.bf16.msra.mxu0 0
      %848 = vmatprep.subr.bf16.mxu0 0
      %849 = vmatpush1.bf16.msra.mxu0 0
      %850 = vmatprep.mubr.bf16.mxu0 0
      %851 = vmatmul.mubr.bf16.gmra.mrb[0].mxu0 %v807
      %v852 = vpop.f32.mrb[0].mxu0
      %v853 = vadd.f32 0.0, %v852
      %v854 = vpop.f32.mrb[0].mxu0
      %v855 = vpop.f32.mrb[0].mxu0
      %v856 = vadd.f32 0.0, %v855
      %v857 = vpop.f32.mrb[0].mxu0
      %858 = vmatprep.mubr.bf16.mxu0 0
      %859 = vmatmul.mubr.bf16.gmra.mrb[0].mxu0 %v810
      %v860 = vpop.f32.mrb[0].mxu0
      %v861 = vadd.f32 0.0, %v860
      %v862 = vpop.f32.mrb[0].mxu0
      %v863 = vpop.f32.mrb[0].mxu0
      %v864 = vadd.f32 0.0, %v863
      %v865 = vpop.f32.mrb[0].mxu0
      %866 = vmatprep.mubr.bf16.mxu0 0
      %867 = vmatmul.mubr.bf16.gmra.mrb[0].mxu0 %v813
      %v868 = vpop.f32.mrb[0].mxu0
      %v869 = vadd.f32 0.0, %v868
      %v870 = vpop.f32.mrb[0].mxu0
      %v871 = vpop.f32.mrb[0].mxu0
      %v872 = vpop.f32.mrb[0].mxu0
      %873 = vdwg.mxu0
      %v874 = vadd.f32 %v786, %v853
      %v875 = vadd.f32 %v787, %v856
      %v876 = vadd.f32 %v788, %v861
      %v877 = vadd.f32 %v789, %v864
      %v878 = vadd.f32 %v790, %v869
      %v879 = vld [vmem:[%s231 + $0x4] sm:$0xe]
      %v880 = vld [vmem:[%s231 + $0x8] sm:$0xf]
      %v881 = vld [vmem:[%s231 + $0xc] sm:$0xf]
      %v882 = vld [vmem:[%s231 + $0x10] sm:$0xf]
      %v883 = vld [vmem:[%s231 + $0x14] sm:$0xf]
      %v884 = vld [vmem:[%s231 + $0x18] sm:$0x1]
      %v885 = vld [vmem:[%s238 + $0xc] sm:$0x3]
      %v892 = vunpack.c.l.b16 %v879
      %v893 = vunpack.c.l.b16 %v880
      %v894 = vunpack.c.l.b16 %v881
      %v895 = vunpack.c.l.b16 %v882
      %v896 = vunpack.c.l.b16 %v883
      %v897 = vunpack.c.l.b16 %v884
      %v898 = vpack.c.b16 %v893, %v892
      %v899 = vpack.c.b16 %v895, %v894
      %v900 = vpack.c.b16 %v897, %v896
      %vm901 = vcmask 1046528
      %v902 = vrot.slane %v898, 1
      %v903 = vrot.slane %v899, 1
      %v904 = vsel %vm901, %v902, %v903
      %v905 = vrot.slane %v900, 1
      %v906 = vsel %vm901, %v903, %v905
      %v908 = vsel %vm283, %v904, 0
      %v911 = vsel %vm283, %v906, 0
      %v914 = vsel %vm283, %v905, 0
      %v917 = vsel %vm293, %v885, 0
      %919 = vmatprep.subr.bf16.mxu0 0
      %920 = vmatpush1.bf16.msra.mxu0 %v917
      %921 = vmatprep.subr.bf16.mxu0 0
      %922 = vmatpush1.bf16.msra.mxu0 0
      %923 = vmatprep.subr.bf16.mxu0 0
      %924 = vmatpush1.bf16.msra.mxu0 0
      %925 = vmatprep.subr.bf16.mxu0 0
      %926 = vmatpush1.bf16.msra.mxu0 0
      %927 = vmatprep.subr.bf16.mxu0 0
      %928 = vmatpush1.bf16.msra.mxu0 0
      %929 = vmatprep.subr.bf16.mxu0 0
      %930 = vmatpush1.bf16.msra.mxu0 0
      %931 = vmatprep.subr.bf16.mxu0 0
      %932 = vmatpush1.bf16.msra.mxu0 0
      %933 = vmatprep.subr.bf16.mxu0 0
      %934 = vmatpush1.bf16.msra.mxu0 0
      %935 = vmatprep.subr.bf16.mxu0 0
      %936 = vmatpush1.bf16.msra.mxu0 0
      %937 = vmatprep.subr.bf16.mxu0 0
      %938 = vmatpush1.bf16.msra.mxu0 0
      %939 = vmatprep.subr.bf16.mxu0 0
      %940 = vmatpush1.bf16.msra.mxu0 0
      %941 = vmatprep.subr.bf16.mxu0 0
      %942 = vmatpush1.bf16.msra.mxu0 0
      %943 = vmatprep.subr.bf16.mxu0 0
      %944 = vmatpush1.bf16.msra.mxu0 0
      %945 = vmatprep.subr.bf16.mxu0 0
      %946 = vmatpush1.bf16.msra.mxu0 0
      %947 = vmatprep.subr.bf16.mxu0 0
      %948 = vmatpush1.bf16.msra.mxu0 0
      %949 = vmatprep.subr.bf16.mxu0 0
      %950 = vmatpush1.bf16.msra.mxu0 0
      %951 = vmatprep.mubr.bf16.mxu0 0
      %952 = vmatmul.mubr.bf16.gmra.mrb[0].mxu0 %v908
      %v953 = vpop.f32.mrb[0].mxu0
      %v954 = vadd.f32 0.0, %v953
      %v955 = vpop.f32.mrb[0].mxu0
      %v956 = vpop.f32.mrb[0].mxu0
      %v957 = vadd.f32 0.0, %v956
      %v958 = vpop.f32.mrb[0].mxu0
      %959 = vmatprep.mubr.bf16.mxu0 0
      %960 = vmatmul.mubr.bf16.gmra.mrb[0].mxu0 %v911
      %v961 = vpop.f32.mrb[0].mxu0
      %v962 = vadd.f32 0.0, %v961
      %v963 = vpop.f32.mrb[0].mxu0
      %v964 = vpop.f32.mrb[0].mxu0
      %v965 = vadd.f32 0.0, %v964
      %v966 = vpop.f32.mrb[0].mxu0
      %967 = vmatprep.mubr.bf16.mxu0 0
      %968 = vmatmul.mubr.bf16.gmra.mrb[0].mxu0 %v914
      %v969 = vpop.f32.mrb[0].mxu0
      %v970 = vadd.f32 0.0, %v969
      %v971 = vpop.f32.mrb[0].mxu0
      %v972 = vpop.f32.mrb[0].mxu0
      %v973 = vpop.f32.mrb[0].mxu0
      %974 = vdwg.mxu0
      %v975 = vadd.f32 %v874, %v954
      %v976 = vadd.f32 %v875, %v957
      %v977 = vadd.f32 %v876, %v962
      %v978 = vadd.f32 %v877, %v965
      %v979 = vadd.f32 %v878, %v970
      %v980 = vld [vmem:[%s231 + $0x1c] sm:$0xc]
      %v981 = vld [vmem:[%s231 + $0x20] sm:$0xf]
      %v982 = vld [vmem:[%s231 + $0x24] sm:$0xf]
      %v983 = vld [vmem:[%s231 + $0x28] sm:$0xf]
      %v984 = vld [vmem:[%s231 + $0x2c] sm:$0xf]
      %v985 = vld [vmem:[%s231 + $0x30] sm:$0x7]
      %v986 = vld [vmem:[%s238 + $0xc] sm:$0xc]
      %v993 = vunpack.c.l.b16 %v980
      %v994 = vunpack.c.l.b16 %v981
      %v995 = vunpack.c.l.b16 %v982
      %v996 = vunpack.c.l.b16 %v983
      %v997 = vunpack.c.l.b16 %v984
      %v998 = vunpack.c.l.b16 %v985
      %v999 = vpack.c.b16 %v994, %v993
      %v1000 = vpack.c.b16 %v996, %v995
      %v1001 = vpack.c.b16 %v998, %v997
      %v1003 = vshrl.u32 %v999, 16
      %v1005 = vrot.slane %v1003, 2
      %v1006 = vshll.u32 %v999, 16
      %v1008 = vrot.slane %v1006, 3
      %v1009 = vor.u32 %v1005, %v1008
      %v1011 = vshrl.u32 %v1000, 16
      %v1013 = vrot.slane %v1011, 2
      %v1014 = vshll.u32 %v1000, 16
      %v1016 = vrot.slane %v1014, 3
      %v1017 = vor.u32 %v1013, %v1016
      %v1018 = vsel %vm612, %v1009, %v1017
      %v1020 = vshrl.u32 %v1001, 16
      %v1022 = vrot.slane %v1020, 2
      %v1023 = vshll.u32 %v1001, 16
      %v1025 = vrot.slane %v1023, 3
      %v1026 = vor.u32 %v1022, %v1025
      %v1027 = vsel %vm612, %v1017, %v1026
      %v1029 = vunpack.c.l.b16 %v986
      %v1030 = vpack.c.b16 %v1029, %v1029
      %v1031 = vrot.slane %v1030, 2
      %v1033 = vsel %vm283, %v1018, 0
      %v1036 = vsel %vm283, %v1027, 0
      %v1039 = vsel %vm283, %v1026, 0
      %v1042 = vsel %vm293, %v1031, 0
      %1044 = vmatprep.subr.bf16.mxu0 0
      %1045 = vmatpush1.bf16.msra.mxu0 %v1042
      %1046 = vmatprep.subr.bf16.mxu0 0
      %1047 = vmatpush1.bf16.msra.mxu0 0
      %1048 = vmatprep.subr.bf16.mxu0 0
      %1049 = vmatpush1.bf16.msra.mxu0 0
      %1050 = vmatprep.subr.bf16.mxu0 0
      %1051 = vmatpush1.bf16.msra.mxu0 0
      %1052 = vmatprep.subr.bf16.mxu0 0
      %1053 = vmatpush1.bf16.msra.mxu0 0
      %1054 = vmatprep.subr.bf16.mxu0 0
      %1055 = vmatpush1.bf16.msra.mxu0 0
      %1056 = vmatprep.subr.bf16.mxu0 0
      %1057 = vmatpush1.bf16.msra.mxu0 0
      %1058 = vmatprep.subr.bf16.mxu0 0
      %1059 = vmatpush1.bf16.msra.mxu0 0
      %1060 = vmatprep.subr.bf16.mxu0 0
      %1061 = vmatpush1.bf16.msra.mxu0 0
      %1062 = vmatprep.subr.bf16.mxu0 0
      %1063 = vmatpush1.bf16.msra.mxu0 0
      %1064 = vmatprep.subr.bf16.mxu0 0
      %1065 = vmatpush1.bf16.msra.mxu0 0
      %1066 = vmatprep.subr.bf16.mxu0 0
      %1067 = vmatpush1.bf16.msra.mxu0 0
      %1068 = vmatprep.subr.bf16.mxu0 0
      %1069 = vmatpush1.bf16.msra.mxu0 0
      %1070 = vmatprep.subr.bf16.mxu0 0
      %1071 = vmatpush1.bf16.msra.mxu0 0
      %1072 = vmatprep.subr.bf16.mxu0 0
      %1073 = vmatpush1.bf16.msra.mxu0 0
      %1074 = vmatprep.subr.bf16.mxu0 0
      %1075 = vmatpush1.bf16.msra.mxu0 0
      %1076 = vmatprep.mubr.bf16.mxu0 0
      %1077 = vmatmul.mubr.bf16.gmra.mrb[0].mxu0 %v1033
      %v1078 = vpop.f32.mrb[0].mxu0
      %v1079 = vadd.f32 0.0, %v1078
      %v1080 = vpop.f32.mrb[0].mxu0
      %v1081 = vpop.f32.mrb[0].mxu0
      %v1082 = vadd.f32 0.0, %v1081
      %v1083 = vpop.f32.mrb[0].mxu0
      %1084 = vmatprep.mubr.bf16.mxu0 0
      %1085 = vmatmul.mubr.bf16.gmra.mrb[0].mxu0 %v1036
      %v1086 = vpop.f32.mrb[0].mxu0
      %v1087 = vadd.f32 0.0, %v1086
      %v1088 = vpop.f32.mrb[0].mxu0
      %v1089 = vpop.f32.mrb[0].mxu0
      %v1090 = vadd.f32 0.0, %v1089
      %v1091 = vpop.f32.mrb[0].mxu0
      %1092 = vmatprep.mubr.bf16.mxu0 0
      %1093 = vmatmul.mubr.bf16.gmra.mrb[0].mxu0 %v1039
      %v1094 = vpop.f32.mrb[0].mxu0
      %v1095 = vadd.f32 0.0, %v1094
      %v1096 = vpop.f32.mrb[0].mxu0
      %v1097 = vpop.f32.mrb[0].mxu0
      %v1098 = vpop.f32.mrb[0].mxu0
      %1099 = vdwg.mxu0
      %v1100 = vadd.f32 %v975, %v1079
      %v1101 = vadd.f32 %v976, %v1082
      %v1102 = vadd.f32 %v977, %v1087
      %v1103 = vadd.f32 %v978, %v1090
      %v1104 = vadd.f32 %v979, %v1095
      %v1105 = vld [vmem:[%s231 + $0x18] sm:$0x3]
      %v1106 = vld [vmem:[%s238 + $0x10] sm:$0x3]
      %v1108 = vunpack.c.l.b16 %v1105
      %v1109 = vpack.c.b16 %v1108, %v896
      %v1111 = vshrl.u32 %v898, 16
      %v1113 = vrot.slane %v1111, 1
      %v1114 = vshll.u32 %v898, 16
      %v1116 = vrot.slane %v1114, 2
      %v1117 = vor.u32 %v1113, %v1116
      %v1119 = vshrl.u32 %v899, 16
      %v1121 = vrot.slane %v1119, 1
      %v1122 = vshll.u32 %v899, 16
      %v1124 = vrot.slane %v1122, 2
      %v1125 = vor.u32 %v1121, %v1124
      %v1126 = vsel %vm380, %v1117, %v1125
      %v1128 = vshrl.u32 %v1109, 16
      %v1130 = vrot.slane %v1128, 1
      %v1131 = vshll.u32 %v1109, 16
      %v1133 = vrot.slane %v1131, 2
      %v1134 = vor.u32 %v1130, %v1133
      %v1135 = vsel %vm380, %v1125, %v1134
      %v1137 = vsel %vm283, %v1126, 0
      %v1140 = vsel %vm283, %v1135, 0
      %v1143 = vsel %vm283, %v1134, 0
      %v1146 = vsel %vm293, %v1106, 0
      %1148 = vmatprep.subr.bf16.mxu0 0
      %1149 = vmatpush1.bf16.msra.mxu0 %v1146
      %1150 = vmatprep.subr.bf16.mxu0 0
      %1151 = vmatpush1.bf16.msra.mxu0 0
      %1152 = vmatprep.subr.bf16.mxu0 0
      %1153 = vmatpush1.bf16.msra.mxu0 0
      %1154 = vmatprep.subr.bf16.mxu0 0
      %1155 = vmatpush1.bf16.msra.mxu0 0
      %1156 = vmatprep.subr.bf16.mxu0 0
      %1157 = vmatpush1.bf16.msra.mxu0 0
      %1158 = vmatprep.subr.bf16.mxu0 0
      %1159 = vmatpush1.bf16.msra.mxu0 0
      %1160 = vmatprep.subr.bf16.mxu0 0
      %1161 = vmatpush1.bf16.msra.mxu0 0
      %1162 = vmatprep.subr.bf16.mxu0 0
      %1163 = vmatpush1.bf16.msra.mxu0 0
      %1164 = vmatprep.subr.bf16.mxu0 0
      %1165 = vmatpush1.bf16.msra.mxu0 0
      %1166 = vmatprep.subr.bf16.mxu0 0
      %1167 = vmatpush1.bf16.msra.mxu0 0
      %1168 = vmatprep.subr.bf16.mxu0 0
      %1169 = vmatpush1.bf16.msra.mxu0 0
      %1170 = vmatprep.subr.bf16.mxu0 0
      %1171 = vmatpush1.bf16.msra.mxu0 0
      %1172 = vmatprep.subr.bf16.mxu0 0
      %1173 = vmatpush1.bf16.msra.mxu0 0
      %1174 = vmatprep.subr.bf16.mxu0 0
      %1175 = vmatpush1.bf16.msra.mxu0 0
      %1176 = vmatprep.subr.bf16.mxu0 0
      %1177 = vmatpush1.bf16.msra.mxu0 0
      %1178 = vmatprep.subr.bf16.mxu0 0
      %1179 = vmatpush1.bf16.msra.mxu0 0
      %1180 = vmatprep.mubr.bf16.mxu0 0
      %1181 = vmatmul.mubr.bf16.gmra.mrb[0].mxu0 %v1137
      %v1182 = vpop.f32.mrb[0].mxu0
      %v1183 = vadd.f32 0.0, %v1182
      %v1184 = vpop.f32.mrb[0].mxu0
      %v1185 = vpop.f32.mrb[0].mxu0
      %v1186 = vadd.f32 0.0, %v1185
      %v1187 = vpop.f32.mrb[0].mxu0
      %1188 = vmatprep.mubr.bf16.mxu0 0
      %1189 = vmatmul.mubr.bf16.gmra.mrb[0].mxu0 %v1140
      %v1190 = vpop.f32.mrb[0].mxu0
      %v1191 = vadd.f32 0.0, %v1190
      %v1192 = vpop.f32.mrb[0].mxu0
      %v1193 = vpop.f32.mrb[0].mxu0
      %v1194 = vadd.f32 0.0, %v1193
      %v1195 = vpop.f32.mrb[0].mxu0
      %1196 = vmatprep.mubr.bf16.mxu0 0
      %1197 = vmatmul.mubr.bf16.gmra.mrb[0].mxu0 %v1143
      %v1198 = vpop.f32.mrb[0].mxu0
      %v1199 = vadd.f32 0.0, %v1198
      %v1200 = vpop.f32.mrb[0].mxu0
      %v1201 = vpop.f32.mrb[0].mxu0
      %v1202 = vpop.f32.mrb[0].mxu0
      %1203 = vdwg.mxu0
      %v1204 = vadd.f32 %v1100, %v1183
      %v1205 = vadd.f32 %v1101, %v1186
      %v1206 = vadd.f32 %v1102, %v1191
      %v1207 = vadd.f32 %v1103, %v1194
      %v1208 = vadd.f32 %v1104, %v1199
      %vm1209 = vcmask 64512
      %1210 = vst.msk [vmem:[#allocation2] sm:$0xff] %vm1209, %v1204
      %1211 = vst.msk [vmem:[#allocation2 + $0x8] sm:$0xff] %vm1209, %v1205
      %1212 = vst.msk [vmem:[#allocation2 + $0x10] sm:$0xff] %vm1209, %v1206
      %1213 = vst.msk [vmem:[#allocation2 + $0x18] sm:$0xff] %vm1209, %v1207
      %1214 = vst.msk [vmem:[#allocation2 + $0x20] sm:$0xff] %vm1209, %v1208
      %p1215 = scmp.eq.s32.totalorder %s21, 2
      // Predicated region
      $region37: #{multi_aggregation_forward.3} parent=31 // pred_check
        %p1216 = pneg %p1215
      $region38: #{multi_aggregation_forward.3} parent=31 // pred_check_branch
        %1218 = sbr.rel (%p1216) target = $region40
      $region39: #{multi_aggregation_forward.3} parent=31 // pred_region
        %v1219 = vld [vmem:[#allocation2] sm:$0xff]
        %v1220 = vld [vmem:[#allocation2 + $0x8] sm:$0xff]
        %v1221 = vld [vmem:[#allocation2 + $0x10] sm:$0xff]
        %v1222 = vld [vmem:[#allocation2 + $0x18] sm:$0xff]
        %v1223 = vld [vmem:[#allocation2 + $0x20] sm:$0xff]
        %v1224 = vld [vmem:[%s2] sm:$0x1]
        %v1226 = vlaneseq
        %v1227 = vshrl.u32 %v1226, 7
        %v1228 = vsub.s32 0, %v1227
        %v1229 = vrot.slane %v1224, %v1228
        %v1231 = vadd.f32 %v1219, %v1229
        %v1232 = vadd.f32 %v1220, %v1229
        %v1233 = vadd.f32 %v1221, %v1229
        %v1234 = vadd.f32 %v1222, %v1229
        %v1235 = vadd.f32 %v1223, %v1229
        %v1236 = vmax.f32 %v1231, 0.0
        %v1237 = vmax.f32 %v1232, 0.0
        %v1238 = vmax.f32 %v1233, 0.0
        %v1239 = vmax.f32 %v1234, 0.0
        %v1240 = vmax.f32 %v1235, 0.0
        %v1241 = vpack.c.bf16 %v1237, %v1236
        %v1242 = vpack.c.bf16 %v1239, %v1238
        %v1243 = vpack.c.bf16 %v1240, %v1240
        %v1247 = vunpack.c.l.b16 %v1241
        %v1248 = vunpack.c.h.b16 %v1241
        %v1249 = vunpack.c.l.b16 %v1242
        %v1250 = vunpack.c.h.b16 %v1242
        %v1251 = vunpack.c.l.b16 %v1243
        %v1252 = vpack.c.b16 %v1247, %v1247
        %v1253 = vpack.c.b16 %v1248, %v1248
        %v1254 = vpack.c.b16 %v1249, %v1249
        %v1255 = vpack.c.b16 %v1250, %v1250
        %v1256 = vpack.c.b16 %v1251, %v1251
        %vm1262 = vcmask 60416
        %1263 = vst.msk [vmem:[%s247] sm:$0xf] %vm1262, %v1252
        %1264 = vst.msk [vmem:[%s247 + $0x4] sm:$0xf] %vm1262, %v1253
        %1265 = vst.msk [vmem:[%s247 + $0x8] sm:$0xf] %vm1262, %v1254
        %1266 = vst.msk [vmem:[%s247 + $0xc] sm:$0xf] %vm1262, %v1255
        %1267 = vst.msk [vmem:[%s247 + $0x10] sm:$0xf] %vm1262, %v1256
      $region40: #{multi_aggregation_forward.3} parent=31 // pred_fallthru
        _
      %p1268 = scmp.lt.s32.totalorder %s19, 1
      %s1269 = scalar_select %p1268, %s19, 1
      %p1270 = scmp.lt.s32.totalorder %s20, 3
      %s1271 = scalar_select %p1270, %s20, 3
      %s1272 = smul.addr %s1271, 5
      %s1273 = smul.addr %s1269, 20
      %s1274 = sadd.s32 %s1272, %s1273
      %s1275 = smul.addr %s1274, 4
      %s1276 = scalar_lea.vmem %s3, %s1275
      // Predicated region
      $region41: #{multi_aggregation_forward.3} parent=31 // pred_check
        %p1277 = pneg %p132
      $region42: #{multi_aggregation_forward.3} parent=31 // pred_check_branch
        %1279 = sbr.rel (%p1277) target = $region44
      $region43: #{multi_aggregation_forward.3} parent=31 // pred_region
        _
      $region44: #{multi_aggregation_forward.3} parent=31 // pred_fallthru
        _
    $region32: #{multi_aggregation_forward.3} parent=5 // pred_fallthru
      _
    %p1280 = scmp.le.s32.totalorder 2, %s9
    // Predicated region
    $region45: #{multi_aggregation_forward.3} parent=5 // pred_check
      %p1281 = pneg %p1280
    $region46: #{multi_aggregation_forward.3} parent=5 // pred_check_branch
      %1283 = sbr.rel (%p1281) target = $region48
    $region47: #{multi_aggregation_forward.3} parent=5 // pred_region
      %s1284 = ssub.s32 %s9, 2
      // Predicated region
      $region49: #{multi_aggregation_forward.3} parent=47 // pred_check
        %p1285 = pneg %p138
      $region50: #{multi_aggregation_forward.3} parent=47 // pred_check_branch
        %1287 = sbr.rel (%p1285) target = $region52
      $region51: #{multi_aggregation_forward.3} parent=47 // pred_region
        %p1288 = scmp.lt.s32.totalorder %s22, 1
        %s1289 = scalar_select %p1288, %s22, 1
        %p1290 = scmp.lt.s32.totalorder %s23, 3
        %s1291 = scalar_select %p1290, %s23, 3
        %s1292 = smul.addr %s1291, 5
        %s1293 = smul.addr %s1289, 20
        %s1294 = sadd.s32 %s1292, %s1293
        %s1295 = smul.addr %s1294, 4
        %s1296 = scalar_lea.vmem %s3, %s1295
      $region52: #{multi_aggregation_forward.3} parent=47 // pred_fallthru
        _
    $region48: #{multi_aggregation_forward.3} parent=5 // pred_fallthru
      _
  $region6: #{multi_aggregation_forward.3} parent=0 // loop_footer
    %s13 = sadd.s32 1, %s9
  $region7: #{multi_aggregation_forward.3} parent=0 // loop_footer_branch
    %8 = sbr.rel target = $region3
  $region8: #{multi_aggregation_forward.3} parent=0 // loop_exit
    _

// kernel: multi_aggregation_forward.4
$region0: #{multi_aggregation_forward.4}
  #allocation0 [shape = 'u32[]', space=smem, size = 0x4, offset = 0x4, fixed_abs, tag = 'smem constant byte address 0x4 - core index']
  #allocation1 [shape = 'u32[144,128]{1,0:T(1,128)}', space=vmem, size = 0x12000, scoped, tag = 'internal scratch']
  #allocation2 [shape = 'f32[24,8]{1,0:T(8,128)}', space=vmem, size = 0x3000, scoped, tag = 'scratch operand']
  %s0 = inlined_call_operand.vmem [shape: bf16[2,6,38,8], index: 0, kind: input, shape index: {}]
  %s1 = inlined_call_operand.vmem [shape: bf16[3,72,8], index: 1, kind: input, shape index: {}]
  %s2 = inlined_call_operand.vmem [shape: f32[1,8], index: 2, kind: input, shape index: {}]
  %s3 = inlined_call_operand.vmem [shape: bf16[2,4,24,8], index: 3, kind: output, shape index: {}]
  %s4 = sld [smem:[#allocation0]]
  $region53: #{multi_aggregation_forward.4} parent=0
    _
  %s6 = ssub.s32 1, %s4
  %s7 = scalar_select 0, %s6, %s4
  loop: start=0, step=1, limit=26
  $region2: #{multi_aggregation_forward.4} parent=0 // loop_pre_header
    _
  $region3: #{multi_aggregation_forward.4} parent=0 // loop_header
    %s9 = sphi 0, %s13
    %p10 = scmp.ge.s32.totalorder %s9, 26
    %s16 = sphi 0, %s35
    %s17 = sphi 0, %s31
    %s18 = sphi 0, %s27
    %s19 = sphi 0, %s16
    %s20 = sphi 0, %s17
    %s21 = sphi 0, %s18
    %s22 = sphi 0, %s19
    %s23 = sphi 0, %s20
    %s24 = sphi 0, %s21
    %s42 = sphi 0, %s44
    %s45 = sphi 0, %s42
    %s46 = sphi 0, %s45
    %s62 = sphi 0, %s46
    %s68 = sphi 0, %s70
    %s71 = sphi 0, %s68
    %s72 = sphi 0, %s71
    %s88 = sphi 0, %s72
    %s92 = sphi 0, %s92
    %s94 = sphi 0, %s92
    %s95 = sphi 0, %s94
    %s109 = sphi 0, %s95
    %s117 = sphi 0, %s119
    %s120 = sphi 0, %s117
    %s121 = sphi 0, %s120
    %s137 = sphi 0, %s121
  $region4: #{multi_aggregation_forward.4} parent=0 // loop_header_branch
    %12 = sbr.rel (%p10) target = $region8
  $region5: #{multi_aggregation_forward.4} parent=0 // loop_body
    %s14 = ssub.s32 %s9, 1
    %s15 = ssub.s32 %s9, 2
    %s25 = sadd.s32 1, %s18
    %p26 = scmp.ge.s32.totalorder %s25, 3
    %s27 = scalar_select %p26, 0, %s25
    %s28 = sadd.s32 1, %s17
    %s29 = scalar_select %p26, %s28, %s17
    %p30 = scmp.ge.s32.totalorder %s29, 4
    %s31 = scalar_select %p30, 0, %s29
    %s32 = sadd.s32 1, %s16
    %s33 = scalar_select %p30, %s32, %s16
    %p34 = scmp.ge.s32.totalorder %s33, 2
    %s35 = scalar_select %p34, 0, %s33
    %s36 = sadd.s32 %s17, %s18
    %s37 = sadd.s32 %s31, %s27
    %s38 = ssub.s32 %s16, %s35
    %s39 = ssub.s32 %s36, %s37
    %s40 = sor.u32 %s38, %s39
    %p41 = scmp.eq.s32.totalorder %s40, 0
    %s43 = sadd.s32 %s42, 1
    %s44 = scalar_select %p41, %s42, %s43
    %p47 = pneg %p41
    %p48 = scmp.eq.s32.totalorder %s9, 23
    %p49 = por %p47, %p48
    %p50 = scmp.ne.s32.totalorder %s42, %s45
    %p51 = scmp.eq.s32.totalorder %s9, 0
    %p52 = por %p50, %p51
    %p53 = scmp.ne.s32.totalorder %s42, %s45
    %p54 = scmp.eq.s32.totalorder %s14, 23
    %p55 = por %p53, %p54
    %p56 = scmp.ne.s32.totalorder %s45, %s46
    %p57 = scmp.eq.s32.totalorder %s14, 0
    %p58 = por %p56, %p57
    %p59 = scmp.ne.s32.totalorder %s45, %s46
    %p60 = scmp.eq.s32.totalorder %s15, 23
    %p61 = por %p59, %p60
    %p63 = scmp.ne.s32.totalorder %s46, %s62
    %p64 = scmp.eq.s32.totalorder %s15, 0
    %p65 = por %p63, %p64
    %s66 = ssub.s32 %s18, %s27
    %p67 = scmp.eq.s32.totalorder %s66, 0
    %s69 = sadd.s32 %s68, 1
    %s70 = scalar_select %p67, %s68, %s69
    %p73 = pneg %p67
    %p74 = scmp.eq.s32.totalorder %s9, 23
    %p75 = por %p73, %p74
    %p76 = scmp.ne.s32.totalorder %s68, %s71
    %p77 = scmp.eq.s32.totalorder %s9, 0
    %p78 = por %p76, %p77
    %p79 = scmp.ne.s32.totalorder %s68, %s71
    %p80 = scmp.eq.s32.totalorder %s14, 23
    %p81 = por %p79, %p80
    %p82 = scmp.ne.s32.totalorder %s71, %s72
    %p83 = scmp.eq.s32.totalorder %s14, 0
    %p84 = por %p82, %p83
    %p85 = scmp.ne.s32.totalorder %s71, %s72
    %p86 = scmp.eq.s32.totalorder %s15, 23
    %p87 = por %p85, %p86
    %p89 = scmp.ne.s32.totalorder %s72, %s88
    %p90 = scmp.eq.s32.totalorder %s15, 0
    %p91 = por %p89, %p90
    %s93 = sadd.s32 %s92, 1
    %p96 = scmp.eq.s32.totalorder %s9, 23
    %p97 = scmp.ne.s32.totalorder %s92, %s94
    %p98 = scmp.eq.s32.totalorder %s9, 0
    %p99 = por %p97, %p98
    %p100 = scmp.ne.s32.totalorder %s92, %s94
    %p101 = scmp.eq.s32.totalorder %s14, 23
    %p102 = por %p100, %p101
    %p103 = scmp.ne.s32.totalorder %s94, %s95
    %p104 = scmp.eq.s32.totalorder %s14, 0
    %p105 = por %p103, %p104
    %p106 = scmp.ne.s32.totalorder %s94, %s95
    %p107 = scmp.eq.s32.totalorder %s15, 23
    %p108 = por %p106, %p107
    %p110 = scmp.ne.s32.totalorder %s95, %s109
    %p111 = scmp.eq.s32.totalorder %s15, 0
    %p112 = por %p110, %p111
    %s113 = ssub.s32 %s16, %s35
    %s114 = ssub.s32 %s17, %s31
    %s115 = sor.u32 %s113, %s114
    %p116 = scmp.eq.s32.totalorder %s115, 0
    %s118 = sadd.s32 %s117, 1
    %s119 = scalar_select %p116, %s117, %s118
    %p122 = pneg %p116
    %p123 = scmp.eq.s32.totalorder %s9, 23
    %p124 = por %p122, %p123
    %p125 = scmp.ne.s32.totalorder %s117, %s120
    %p126 = scmp.eq.s32.totalorder %s9, 0
    %p127 = por %p125, %p126
    %p128 = scmp.ne.s32.totalorder %s117, %s120
    %p129 = scmp.eq.s32.totalorder %s14, 23
    %p130 = por %p128, %p129
    %p131 = scmp.ne.s32.totalorder %s120, %s121
    %p132 = scmp.eq.s32.totalorder %s14, 0
    %p133 = por %p131, %p132
    %p134 = scmp.ne.s32.totalorder %s120, %s121
    %p135 = scmp.eq.s32.totalorder %s15, 23
    %p136 = por %p134, %p135
    %p138 = scmp.ne.s32.totalorder %s121, %s137
    %p139 = scmp.eq.s32.totalorder %s15, 0
    %p140 = por %p138, %p139
    %p141 = scmp.le.s32.totalorder 1, %s9
    %p142 = scmp.lt.s32.totalorder %s9, 25
    %p143 = pnand %p141, %p142
    %p144 = pneg %p143
    // Predicated region
    $region9: #{multi_aggregation_forward.4} parent=5 // pred_check
      _
    $region10: #{multi_aggregation_forward.4} parent=5 // pred_check_branch
      %146 = sbr.rel (%p143) target = $region12
    $region11: #{multi_aggregation_forward.4} parent=5 // pred_region
      %s147 = ssub.s32 %s9, 1
      // Predicated region
      $region13: #{multi_aggregation_forward.4} parent=11 // pred_check
        %p148 = pneg %p105
      $region14: #{multi_aggregation_forward.4} parent=11 // pred_check_branch
        %150 = sbr.rel (%p148) target = $region16
      $region15: #{multi_aggregation_forward.4} parent=11 // pred_region
        _
      $region16: #{multi_aggregation_forward.4} parent=11 // pred_fallthru
        _
    $region12: #{multi_aggregation_forward.4} parent=5 // pred_fallthru
      _
    %p151 = scmp.lt.s32.totalorder %s9, 24
    // Predicated region
    $region17: #{multi_aggregation_forward.4} parent=5 // pred_check
      %p152 = pneg %p151
    $region18: #{multi_aggregation_forward.4} parent=5 // pred_check_branch
      %154 = sbr.rel (%p152) target = $region20
    $region19: #{multi_aggregation_forward.4} parent=5 // pred_region
      // Predicated region
      $region21: #{multi_aggregation_forward.4} parent=19 // pred_check
        %p155 = pneg %p52
      $region22: #{multi_aggregation_forward.4} parent=19 // pred_check_branch
        %157 = sbr.rel (%p155) target = $region24
      $region23: #{multi_aggregation_forward.4} parent=19 // pred_region
        %s158 = sadd.s32 %s17, %s18
        %p159 = scmp.lt.s32.totalorder %s16, 1
        %s160 = scalar_select %p159, %s16, 1
        %p161 = scmp.lt.s32.totalorder %s158, 5
        %s162 = scalar_select %p161, %s158, 5
        %s163 = smul.addr %s162, 5
        %s164 = smul.addr %s160, 30
        %s165 = sadd.s32 %s163, %s164
        %s166 = smul.addr %s165, 4
        %s167 = scalar_lea.vmem %s0, %s166
        %s168 = sadd.s32 %s17, %s18
      $region24: #{multi_aggregation_forward.4} parent=19 // pred_fallthru
        _
      // Predicated region
      $region25: #{multi_aggregation_forward.4} parent=19 // pred_check
        %p169 = pneg %p78
      $region26: #{multi_aggregation_forward.4} parent=19 // pred_check_branch
        %171 = sbr.rel (%p169) target = $region28
      $region27: #{multi_aggregation_forward.4} parent=19 // pred_region
        %p172 = scmp.lt.s32.totalorder %s18, 2
        %s173 = scalar_select %p172, %s18, 2
        %s174 = smul.addr %s173, 9
        %s175 = smul.addr %s174, 4
        %s176 = scalar_lea.vmem %s1, %s175
      $region28: #{multi_aggregation_forward.4} parent=19 // pred_fallthru
        _
    $region20: #{multi_aggregation_forward.4} parent=5 // pred_fallthru
      _
    %p177 = scmp.le.s32.totalorder 1, %s9
    %p178 = scmp.lt.s32.totalorder %s9, 25
    %p179 = pnand %p177, %p178
    %p180 = pneg %p179
    // Predicated region
    $region29: #{multi_aggregation_forward.4} parent=5 // pred_check
      _
    $region30: #{multi_aggregation_forward.4} parent=5 // pred_check_branch
      %182 = sbr.rel (%p179) target = $region32
    $region31: #{multi_aggregation_forward.4} parent=5 // pred_region
      %s183 = ssub.s32 %s9, 1
      %s184 = sadd.s32 %s20, %s21
      %p185 = scmp.lt.s32.totalorder %s19, 1
      %s186 = scalar_select %p185, %s19, 1
      %p187 = scmp.lt.s32.totalorder %s184, 5
      %s188 = scalar_select %p187, %s184, 5
      %s189 = smul.addr %s188, 5
      %s190 = smul.addr %s186, 30
      %s191 = sadd.s32 %s189, %s190
      %s192 = smul.addr %s191, 4
      %s193 = scalar_lea.vmem %s0, %s192
      %p194 = pneg %p58
      %p195 = pneg %p55
      %p196 = scmp.lt.s32.totalorder %s21, 2
      %s197 = scalar_select %p196, %s21, 2
      %s198 = smul.addr %s197, 9
      %s199 = smul.addr %s198, 4
      %s200 = scalar_lea.vmem %s1, %s199
      %p201 = pneg %p84
      %p202 = pneg %p81
      %p203 = pneg %p105
      %p204 = pneg %p102
      %p205 = pneg %p133
      %p206 = pneg %p130
      %p207 = scmp.lt.s32.totalorder %s19, 1
      %s208 = scalar_select %p207, %s19, 1
      %p209 = scmp.lt.s32.totalorder %s20, 3
      %s210 = scalar_select %p209, %s20, 3
      %s211 = smul.addr %s210, 3
      %s212 = smul.addr %s208, 12
      %s213 = sadd.s32 %s211, %s212
      %s214 = smul.addr %s213, 4
      %s215 = scalar_lea.vmem %s3, %s214
      %s216 = sadd.s32 %s20, %s21
      %p217 = scmp.lt.s32.totalorder %s19, 1
      %s218 = scalar_select %p217, %s19, 1
      %p219 = scmp.lt.s32.totalorder %s216, 5
      %s220 = scalar_select %p219, %s216, 5
      %s221 = smul.addr %s220, 5
      %s222 = smul.addr %s218, 30
      %s223 = sadd.s32 %s221, %s222
      %s224 = smul.addr %s223, 4
      %s225 = scalar_lea.vmem %s0, %s224
      %s226 = sadd.s32 %s20, %s21
      %p227 = scmp.lt.s32.totalorder %s21, 2
      %s228 = scalar_select %p227, %s21, 2
      %s229 = smul.addr %s228, 9
      %s230 = smul.addr %s229, 4
      %s231 = scalar_lea.vmem %s1, %s230
      %p232 = scmp.lt.s32.totalorder %s19, 1
      %s233 = scalar_select %p232, %s19, 1
      %p234 = scmp.lt.s32.totalorder %s20, 3
      %s235 = scalar_select %p234, %s20, 3
      %s236 = smul.addr %s235, 3
      %s237 = smul.addr %s233, 12
      %s238 = sadd.s32 %s236, %s237
      %s239 = smul.addr %s238, 4
      %s240 = scalar_lea.vmem %s3, %s239
      %p242 = scmp.eq.s32.totalorder %s21, 0
      // Predicated region
      $region33: #{multi_aggregation_forward.4} parent=31 // pred_check
        %p243 = pneg %p242
      $region34: #{multi_aggregation_forward.4} parent=31 // pred_check_branch
        %245 = sbr.rel (%p243) target = $region36
      $region35: #{multi_aggregation_forward.4} parent=31 // pred_region
        %vm246 = vcmask 64512
        %247 = vst.msk [vmem:[#allocation2] sm:$0xff] %vm246, 0.0
        %248 = vst.msk [vmem:[#allocation2 + $0x8] sm:$0xff] %vm246, 0.0
        %249 = vst.msk [vmem:[#allocation2 + $0x10] sm:$0xff] %vm246, 0.0
      $region36: #{multi_aggregation_forward.4} parent=31 // pred_fallthru
        _
      %v250 = vld [vmem:[#allocation2] sm:$0xff]
      %v251 = vld [vmem:[#allocation2 + $0x8] sm:$0xff]
      %v252 = vld [vmem:[#allocation2 + $0x10] sm:$0xff]
      %v253 = vld [vmem:[%s225] sm:$0xf]
      %v254 = vld [vmem:[%s225 + $0x4] sm:$0xf]
      %v255 = vld [vmem:[%s225 + $0x8] sm:$0xf]
      %v256 = vld [vmem:[%s231] sm:$0xf]
      %v260 = vunpack.c.l.b16 %v253
      %v261 = vunpack.c.l.b16 %v254
      %v262 = vunpack.c.l.b16 %v255
      %v263 = vpack.c.b16 %v261, %v260
      %v264 = vpack.c.b16 %v262, %v262
      %vm265 = vcmask 64512
      %v267 = vsel %vm265, %v263, 0
      %v270 = vsel %vm265, %v264, 0
      %vm272 = vcmask 1043456
      %v274 = vsel %vm272, %v256, 0
      %276 = vmatprep.subr.bf16.mxu0 0
      %277 = vmatpush1.bf16.msra.mxu0 %v274
      %278 = vmatprep.subr.bf16.mxu0 0
      %279 = vmatpush1.bf16.msra.mxu0 0
      %280 = vmatprep.subr.bf16.mxu0 0
      %281 = vmatpush1.bf16.msra.mxu0 0
      %282 = vmatprep.subr.bf16.mxu0 0
      %283 = vmatpush1.bf16.msra.mxu0 0
      %284 = vmatprep.subr.bf16.mxu0 0
      %285 = vmatpush1.bf16.msra.mxu0 0
      %286 = vmatprep.subr.bf16.mxu0 0
      %287 = vmatpush1.bf16.msra.mxu0 0
      %288 = vmatprep.subr.bf16.mxu0 0
      %289 = vmatpush1.bf16.msra.mxu0 0
      %290 = vmatprep.subr.bf16.mxu0 0
      %291 = vmatpush1.bf16.msra.mxu0 0
      %292 = vmatprep.subr.bf16.mxu0 0
      %293 = vmatpush1.bf16.msra.mxu0 0
      %294 = vmatprep.subr.bf16.mxu0 0
      %295 = vmatpush1.bf16.msra.mxu0 0
      %296 = vmatprep.subr.bf16.mxu0 0
      %297 = vmatpush1.bf16.msra.mxu0 0
      %298 = vmatprep.subr.bf16.mxu0 0
      %299 = vmatpush1.bf16.msra.mxu0 0
      %300 = vmatprep.subr.bf16.mxu0 0
      %301 = vmatpush1.bf16.msra.mxu0 0
      %302 = vmatprep.subr.bf16.mxu0 0
      %303 = vmatpush1.bf16.msra.mxu0 0
      %304 = vmatprep.subr.bf16.mxu0 0
      %305 = vmatpush1.bf16.msra.mxu0 0
      %306 = vmatprep.subr.bf16.mxu0 0
      %307 = vmatpush1.bf16.msra.mxu0 0
      %308 = vmatprep.mubr.bf16.mxu0 0
      %309 = vmatmul.mubr.bf16.gmra.mrb[0].mxu0 %v267
      %v310 = vpop.f32.mrb[0].mxu0
      %v311 = vadd.f32 0.0, %v310
      %v312 = vpop.f32.mrb[0].mxu0
      %v313 = vpop.f32.mrb[0].mxu0
      %v314 = vadd.f32 0.0, %v313
      %v315 = vpop.f32.mrb[0].mxu0
      %316 = vmatprep.mubr.bf16.mxu0 0
      %317 = vmatmul.mubr.bf16.gmra.mrb[0].mxu0 %v270
      %v318 = vpop.f32.mrb[0].mxu0
      %v319 = vadd.f32 0.0, %v318
      %v320 = vpop.f32.mrb[0].mxu0
      %v321 = vpop.f32.mrb[0].mxu0
      %v322 = vpop.f32.mrb[0].mxu0
      %323 = vdwg.mxu0
      %v324 = vadd.f32 %v250, %v311
      %v325 = vadd.f32 %v251, %v314
      %v326 = vadd.f32 %v252, %v319
      %v327 = vld [vmem:[%s225] sm:$0xf]
      %v328 = vld [vmem:[%s225 + $0x4] sm:$0xf]
      %v329 = vld [vmem:[%s225 + $0x8] sm:$0xf]
      %v330 = vld [vmem:[%s225 + $0xc] sm:$0x1]
      %v331 = vld [vmem:[%s231 + $0x4] sm:$0xf]
      %v336 = vunpack.c.l.b16 %v327
      %v337 = vunpack.c.l.b16 %v328
      %v338 = vunpack.c.l.b16 %v329
      %v339 = vunpack.c.l.b16 %v330
      %v340 = vpack.c.b16 %v337, %v336
      %v341 = vpack.c.b16 %v339, %v338
      %vm342 = vsmask.f32 7424
      %v344 = vshrl.u32 %v340, 16
      %v346 = vshll.u32 %v340, 16
      %v348 = vrot.slane %v346, 1
      %v349 = vor.u32 %v344, %v348
      %v351 = vshll.u32 %v341, 16
      %v353 = vrot.slane %v351, 1
      %v354 = vsel %vm342, %v349, %v353
      %v355 = vshrl.u32 %v341, 16
      %v357 = vor.u32 %v355, %v353
      %v359 = vsel %vm265, %v354, 0
      %v362 = vsel %vm265, %v357, 0
      %v365 = vsel %vm272, %v331, 0
      %367 = vmatprep.subr.bf16.mxu0 0
      %368 = vmatpush1.bf16.msra.mxu0 %v365
      %369 = vmatprep.subr.bf16.mxu0 0
      %370 = vmatpush1.bf16.msra.mxu0 0
      %371 = vmatprep.subr.bf16.mxu0 0
      %372 = vmatpush1.bf16.msra.mxu0 0
      %373 = vmatprep.subr.bf16.mxu0 0
      %374 = vmatpush1.bf16.msra.mxu0 0
      %375 = vmatprep.subr.bf16.mxu0 0
      %376 = vmatpush1.bf16.msra.mxu0 0
      %377 = vmatprep.subr.bf16.mxu0 0
      %378 = vmatpush1.bf16.msra.mxu0 0
      %379 = vmatprep.subr.bf16.mxu0 0
      %380 = vmatpush1.bf16.msra.mxu0 0
      %381 = vmatprep.subr.bf16.mxu0 0
      %382 = vmatpush1.bf16.msra.mxu0 0
      %383 = vmatprep.subr.bf16.mxu0 0
      %384 = vmatpush1.bf16.msra.mxu0 0
      %385 = vmatprep.subr.bf16.mxu0 0
      %386 = vmatpush1.bf16.msra.mxu0 0
      %387 = vmatprep.subr.bf16.mxu0 0
      %388 = vmatpush1.bf16.msra.mxu0 0
      %389 = vmatprep.subr.bf16.mxu0 0
      %390 = vmatpush1.bf16.msra.mxu0 0
      %391 = vmatprep.subr.bf16.mxu0 0
      %392 = vmatpush1.bf16.msra.mxu0 0
      %393 = vmatprep.subr.bf16.mxu0 0
      %394 = vmatpush1.bf16.msra.mxu0 0
      %395 = vmatprep.subr.bf16.mxu0 0
      %396 = vmatpush1.bf16.msra.mxu0 0
      %397 = vmatprep.subr.bf16.mxu0 0
      %398 = vmatpush1.bf16.msra.mxu0 0
      %399 = vmatprep.mubr.bf16.mxu0 0
      %400 = vmatmul.mubr.bf16.gmra.mrb[0].mxu0 %v359
      %v401 = vpop.f32.mrb[0].mxu0
      %v402 = vadd.f32 0.0, %v401
      %v403 = vpop.f32.mrb[0].mxu0
      %v404 = vpop.f32.mrb[0].mxu0
      %v405 = vadd.f32 0.0, %v404
      %v406 = vpop.f32.mrb[0].mxu0
      %407 = vmatprep.mubr.bf16.mxu0 0
      %408 = vmatmul.mubr.bf16.gmra.mrb[0].mxu0 %v362
      %v409 = vpop.f32.mrb[0].mxu0
      %v410 = vadd.f32 0.0, %v409
      %v411 = vpop.f32.mrb[0].mxu0
      %v412 = vpop.f32.mrb[0].mxu0
      %v413 = vpop.f32.mrb[0].mxu0
      %414 = vdwg.mxu0
      %v415 = vadd.f32 %v324, %v402
      %v416 = vadd.f32 %v325, %v405
      %v417 = vadd.f32 %v326, %v410
      %v418 = vld [vmem:[%s225] sm:$0xe]
      %v419 = vld [vmem:[%s231 + $0x8] sm:$0xf]
      %v421 = vunpack.c.l.b16 %v418
      %v422 = vpack.c.b16 %v337, %v421
      %vm423 = vcmask 1046528
      %v424 = vrot.slane %v422, 1
      %v425 = vrot.slane %v341, 1
      %v426 = vsel %vm423, %v424, %v425
      %v428 = vsel %vm265, %v426, 0
      %v431 = vsel %vm265, %v425, 0
      %v434 = vsel %vm272, %v419, 0
      %436 = vmatprep.subr.bf16.mxu0 0
      %437 = vmatpush1.bf16.msra.mxu0 %v434
      %438 = vmatprep.subr.bf16.mxu0 0
      %439 = vmatpush1.bf16.msra.mxu0 0
      %440 = vmatprep.subr.bf16.mxu0 0
      %441 = vmatpush1.bf16.msra.mxu0 0
      %442 = vmatprep.subr.bf16.mxu0 0
      %443 = vmatpush1.bf16.msra.mxu0 0
      %444 = vmatprep.subr.bf16.mxu0 0
      %445 = vmatpush1.bf16.msra.mxu0 0
      %446 = vmatprep.subr.bf16.mxu0 0
      %447 = vmatpush1.bf16.msra.mxu0 0
      %448 = vmatprep.subr.bf16.mxu0 0
      %449 = vmatpush1.bf16.msra.mxu0 0
      %450 = vmatprep.subr.bf16.mxu0 0
      %451 = vmatpush1.bf16.msra.mxu0 0
      %452 = vmatprep.subr.bf16.mxu0 0
      %453 = vmatpush1.bf16.msra.mxu0 0
      %454 = vmatprep.subr.bf16.mxu0 0
      %455 = vmatpush1.bf16.msra.mxu0 0
      %456 = vmatprep.subr.bf16.mxu0 0
      %457 = vmatpush1.bf16.msra.mxu0 0
      %458 = vmatprep.subr.bf16.mxu0 0
      %459 = vmatpush1.bf16.msra.mxu0 0
      %460 = vmatprep.subr.bf16.mxu0 0
      %461 = vmatpush1.bf16.msra.mxu0 0
      %462 = vmatprep.subr.bf16.mxu0 0
      %463 = vmatpush1.bf16.msra.mxu0 0
      %464 = vmatprep.subr.bf16.mxu0 0
      %465 = vmatpush1.bf16.msra.mxu0 0
      %466 = vmatprep.subr.bf16.mxu0 0
      %467 = vmatpush1.bf16.msra.mxu0 0
      %468 = vmatprep.mubr.bf16.mxu0 0
      %469 = vmatmul.mubr.bf16.gmra.mrb[0].mxu0 %v428
      %v470 = vpop.f32.mrb[0].mxu0
      %v471 = vadd.f32 0.0, %v470
      %v472 = vpop.f32.mrb[0].mxu0
      %v473 = vpop.f32.mrb[0].mxu0
      %v474 = vadd.f32 0.0, %v473
      %v475 = vpop.f32.mrb[0].mxu0
      %476 = vmatprep.mubr.bf16.mxu0 0
      %477 = vmatmul.mubr.bf16.gmra.mrb[0].mxu0 %v431
      %v478 = vpop.f32.mrb[0].mxu0
      %v479 = vadd.f32 0.0, %v478
      %v480 = vpop.f32.mrb[0].mxu0
      %v481 = vpop.f32.mrb[0].mxu0
      %v482 = vpop.f32.mrb[0].mxu0
      %483 = vdwg.mxu0
      %v484 = vadd.f32 %v415, %v471
      %v485 = vadd.f32 %v416, %v474
      %v486 = vadd.f32 %v417, %v479
      %v487 = vld [vmem:[%s225] sm:$0x8]
      %v488 = vld [vmem:[%s225 + $0xc] sm:$0x7]
      %v489 = vld [vmem:[%s231 + $0xc] sm:$0xf]
      %v492 = vunpack.c.l.b16 %v487
      %v493 = vunpack.c.l.b16 %v488
      %v494 = vpack.c.b16 %v337, %v492
      %v495 = vpack.c.b16 %v493, %v338
      %vm496 = vcmask 1044480
      %v497 = vrot.slane %v494, 3
      %v498 = vrot.slane %v495, 3
      %v499 = vsel %vm496, %v497, %v498
      %v501 = vsel %vm265, %v499, 0
      %v504 = vsel %vm265, %v498, 0
      %v507 = vsel %vm272, %v489, 0
      %509 = vmatprep.subr.bf16.mxu0 0
      %510 = vmatpush1.bf16.msra.mxu0 %v507
      %511 = vmatprep.subr.bf16.mxu0 0
      %512 = vmatpush1.bf16.msra.mxu0 0
      %513 = vmatprep.subr.bf16.mxu0 0
      %514 = vmatpush1.bf16.msra.mxu0 0
      %515 = vmatprep.subr.bf16.mxu0 0
      %516 = vmatpush1.bf16.msra.mxu0 0
      %517 = vmatprep.subr.bf16.mxu0 0
      %518 = vmatpush1.bf16.msra.mxu0 0
      %519 = vmatprep.subr.bf16.mxu0 0
      %520 = vmatpush1.bf16.msra.mxu0 0
      %521 = vmatprep.subr.bf16.mxu0 0
      %522 = vmatpush1.bf16.msra.mxu0 0
      %523 = vmatprep.subr.bf16.mxu0 0
      %524 = vmatpush1.bf16.msra.mxu0 0
      %525 = vmatprep.subr.bf16.mxu0 0
      %526 = vmatpush1.bf16.msra.mxu0 0
      %527 = vmatprep.subr.bf16.mxu0 0
      %528 = vmatpush1.bf16.msra.mxu0 0
      %529 = vmatprep.subr.bf16.mxu0 0
      %530 = vmatpush1.bf16.msra.mxu0 0
      %531 = vmatprep.subr.bf16.mxu0 0
      %532 = vmatpush1.bf16.msra.mxu0 0
      %533 = vmatprep.subr.bf16.mxu0 0
      %534 = vmatpush1.bf16.msra.mxu0 0
      %535 = vmatprep.subr.bf16.mxu0 0
      %536 = vmatpush1.bf16.msra.mxu0 0
      %537 = vmatprep.subr.bf16.mxu0 0
      %538 = vmatpush1.bf16.msra.mxu0 0
      %539 = vmatprep.subr.bf16.mxu0 0
      %540 = vmatpush1.bf16.msra.mxu0 0
      %541 = vmatprep.mubr.bf16.mxu0 0
      %542 = vmatmul.mubr.bf16.gmra.mrb[0].mxu0 %v501
      %v543 = vpop.f32.mrb[0].mxu0
      %v544 = vadd.f32 0.0, %v543
      %v545 = vpop.f32.mrb[0].mxu0
      %v546 = vpop.f32.mrb[0].mxu0
      %v547 = vadd.f32 0.0, %v546
      %v548 = vpop.f32.mrb[0].mxu0
      %549 = vmatprep.mubr.bf16.mxu0 0
      %550 = vmatmul.mubr.bf16.gmra.mrb[0].mxu0 %v504
      %v551 = vpop.f32.mrb[0].mxu0
      %v552 = vadd.f32 0.0, %v551
      %v553 = vpop.f32.mrb[0].mxu0
      %v554 = vpop.f32.mrb[0].mxu0
      %v555 = vpop.f32.mrb[0].mxu0
      %556 = vdwg.mxu0
      %v557 = vadd.f32 %v484, %v544
      %v558 = vadd.f32 %v485, %v547
      %v559 = vadd.f32 %v486, %v552
      %v560 = vld [vmem:[%s225 + $0xc] sm:$0xf]
      %v561 = vld [vmem:[%s231 + $0x10] sm:$0xf]
      %v563 = vunpack.c.l.b16 %v560
      %v564 = vpack.c.b16 %v563, %v338
      %vm565 = vsmask.f32 4352
      %v567 = vshrl.u32 %v494, 16
      %v569 = vrot.slane %v567, 3
      %v570 = vshll.u32 %v494, 16
      %v572 = vrot.slane %v570, 4
      %v573 = vor.u32 %v569, %v572
      %v575 = vshrl.u32 %v564, 16
      %v577 = vrot.slane %v575, 3
      %v578 = vshll.u32 %v564, 16
      %v580 = vrot.slane %v578, 4
      %v581 = vor.u32 %v577, %v580
      %v582 = vsel %vm565, %v573, %v581
      %v584 = vsel %vm265, %v582, 0
      %v587 = vsel %vm265, %v581, 0
      %v590 = vsel %vm272, %v561, 0
      %592 = vmatprep.subr.bf16.mxu0 0
      %593 = vmatpush1.bf16.msra.mxu0 %v590
      %594 = vmatprep.subr.bf16.mxu0 0
      %595 = vmatpush1.bf16.msra.mxu0 0
      %596 = vmatprep.subr.bf16.mxu0 0
      %597 = vmatpush1.bf16.msra.mxu0 0
      %598 = vmatprep.subr.bf16.mxu0 0
      %599 = vmatpush1.bf16.msra.mxu0 0
      %600 = vmatprep.subr.bf16.mxu0 0
      %601 = vmatpush1.bf16.msra.mxu0 0
      %602 = vmatprep.subr.bf16.mxu0 0
      %603 = vmatpush1.bf16.msra.mxu0 0
      %604 = vmatprep.subr.bf16.mxu0 0
      %605 = vmatpush1.bf16.msra.mxu0 0
      %606 = vmatprep.subr.bf16.mxu0 0
      %607 = vmatpush1.bf16.msra.mxu0 0
      %608 = vmatprep.subr.bf16.mxu0 0
      %609 = vmatpush1.bf16.msra.mxu0 0
      %610 = vmatprep.subr.bf16.mxu0 0
      %611 = vmatpush1.bf16.msra.mxu0 0
      %612 = vmatprep.subr.bf16.mxu0 0
      %613 = vmatpush1.bf16.msra.mxu0 0
      %614 = vmatprep.subr.bf16.mxu0 0
      %615 = vmatpush1.bf16.msra.mxu0 0
      %616 = vmatprep.subr.bf16.mxu0 0
      %617 = vmatpush1.bf16.msra.mxu0 0
      %618 = vmatprep.subr.bf16.mxu0 0
      %619 = vmatpush1.bf16.msra.mxu0 0
      %620 = vmatprep.subr.bf16.mxu0 0
      %621 = vmatpush1.bf16.msra.mxu0 0
      %622 = vmatprep.subr.bf16.mxu0 0
      %623 = vmatpush1.bf16.msra.mxu0 0
      %624 = vmatprep.mubr.bf16.mxu0 0
      %625 = vmatmul.mubr.bf16.gmra.mrb[0].mxu0 %v584
      %v626 = vpop.f32.mrb[0].mxu0
      %v627 = vadd.f32 0.0, %v626
      %v628 = vpop.f32.mrb[0].mxu0
      %v629 = vpop.f32.mrb[0].mxu0
      %v630 = vadd.f32 0.0, %v629
      %v631 = vpop.f32.mrb[0].mxu0
      %632 = vmatprep.mubr.bf16.mxu0 0
      %633 = vmatmul.mubr.bf16.gmra.mrb[0].mxu0 %v587
      %v634 = vpop.f32.mrb[0].mxu0
      %v635 = vadd.f32 0.0, %v634
      %v636 = vpop.f32.mrb[0].mxu0
      %v637 = vpop.f32.mrb[0].mxu0
      %v638 = vpop.f32.mrb[0].mxu0
      %639 = vdwg.mxu0
      %v640 = vadd.f32 %v557, %v627
      %v641 = vadd.f32 %v558, %v630
      %v642 = vadd.f32 %v559, %v635
      %v643 = vld [vmem:[%s231 + $0x14] sm:$0xf]
      %v644 = vpack.c.b16 %v338, %v337
      %v645 = vpack.c.b16 %v563, %v563
      %v647 = vsel %vm265, %v644, 0
      %v650 = vsel %vm265, %v645, 0
      %v653 = vsel %vm272, %v643, 0
      %655 = vmatprep.subr.bf16.mxu0 0
      %656 = vmatpush1.bf16.msra.mxu0 %v653
      %657 = vmatprep.subr.bf16.mxu0 0
      %658 = vmatpush1.bf16.msra.mxu0 0
      %659 = vmatprep.subr.bf16.mxu0 0
      %660 = vmatpush1.bf16.msra.mxu0 0
      %661 = vmatprep.subr.bf16.mxu0 0
      %662 = vmatpush1.bf16.msra.mxu0 0
      %663 = vmatprep.subr.bf16.mxu0 0
      %664 = vmatpush1.bf16.msra.mxu0 0
      %665 = vmatprep.subr.bf16.mxu0 0
      %666 = vmatpush1.bf16.msra.mxu0 0
      %667 = vmatprep.subr.bf16.mxu0 0
      %668 = vmatpush1.bf16.msra.mxu0 0
      %669 = vmatprep.subr.bf16.mxu0 0
      %670 = vmatpush1.bf16.msra.mxu0 0
      %671 = vmatprep.subr.bf16.mxu0 0
      %672 = vmatpush1.bf16.msra.mxu0 0
      %673 = vmatprep.subr.bf16.mxu0 0
      %674 = vmatpush1.bf16.msra.mxu0 0
      %675 = vmatprep.subr.bf16.mxu0 0
      %676 = vmatpush1.bf16.msra.mxu0 0
      %677 = vmatprep.subr.bf16.mxu0 0
      %678 = vmatpush1.bf16.msra.mxu0 0
      %679 = vmatprep.subr.bf16.mxu0 0
      %680 = vmatpush1.bf16.msra.mxu0 0
      %681 = vmatprep.subr.bf16.mxu0 0
      %682 = vmatpush1.bf16.msra.mxu0 0
      %683 = vmatprep.subr.bf16.mxu0 0
      %684 = vmatpush1.bf16.msra.mxu0 0
      %685 = vmatprep.subr.bf16.mxu0 0
      %686 = vmatpush1.bf16.msra.mxu0 0
      %687 = vmatprep.mubr.bf16.mxu0 0
      %688 = vmatmul.mubr.bf16.gmra.mrb[0].mxu0 %v647
      %v689 = vpop.f32.mrb[0].mxu0
      %v690 = vadd.f32 0.0, %v689
      %v691 = vpop.f32.mrb[0].mxu0
      %v692 = vpop.f32.mrb[0].mxu0
      %v693 = vadd.f32 0.0, %v692
      %v694 = vpop.f32.mrb[0].mxu0
      %695 = vmatprep.mubr.bf16.mxu0 0
      %696 = vmatmul.mubr.bf16.gmra.mrb[0].mxu0 %v650
      %v697 = vpop.f32.mrb[0].mxu0
      %v698 = vadd.f32 0.0, %v697
      %v699 = vpop.f32.mrb[0].mxu0
      %v700 = vpop.f32.mrb[0].mxu0
      %v701 = vpop.f32.mrb[0].mxu0
      %702 = vdwg.mxu0
      %v703 = vadd.f32 %v640, %v690
      %v704 = vadd.f32 %v641, %v693
      %v705 = vadd.f32 %v642, %v698
      %v706 = vld [vmem:[%s225 + $0x4] sm:$0xc]
      %v707 = vld [vmem:[%s225 + $0x8] sm:$0xf]
      %v708 = vld [vmem:[%s225 + $0xc] sm:$0xf]
      %v709 = vld [vmem:[%s225 + $0x10] sm:$0x3]
      %v710 = vld [vmem:[%s231 + $0x18] sm:$0xf]
      %v715 = vunpack.c.l.b16 %v706
      %v716 = vunpack.c.l.b16 %v707
      %v717 = vunpack.c.l.b16 %v708
      %v718 = vunpack.c.l.b16 %v709
      %v719 = vpack.c.b16 %v716, %v715
      %v720 = vpack.c.b16 %v718, %v717
      %vm721 = vcmask 1045504
      %v722 = vrot.slane %v719, 2
      %v723 = vrot.slane %v720, 2
      %v724 = vsel %vm721, %v722, %v723
      %v726 = vsel %vm265, %v724, 0
      %v729 = vsel %vm265, %v723, 0
      %v732 = vsel %vm272, %v710, 0
      %734 = vmatprep.subr.bf16.mxu0 0
      %735 = vmatpush1.bf16.msra.mxu0 %v732
      %736 = vmatprep.subr.bf16.mxu0 0
      %737 = vmatpush1.bf16.msra.mxu0 0
      %738 = vmatprep.subr.bf16.mxu0 0
      %739 = vmatpush1.bf16.msra.mxu0 0
      %740 = vmatprep.subr.bf16.mxu0 0
      %741 = vmatpush1.bf16.msra.mxu0 0
      %742 = vmatprep.subr.bf16.mxu0 0
      %743 = vmatpush1.bf16.msra.mxu0 0
      %744 = vmatprep.subr.bf16.mxu0 0
      %745 = vmatpush1.bf16.msra.mxu0 0
      %746 = vmatprep.subr.bf16.mxu0 0
      %747 = vmatpush1.bf16.msra.mxu0 0
      %748 = vmatprep.subr.bf16.mxu0 0
      %749 = vmatpush1.bf16.msra.mxu0 0
      %750 = vmatprep.subr.bf16.mxu0 0
      %751 = vmatpush1.bf16.msra.mxu0 0
      %752 = vmatprep.subr.bf16.mxu0 0
      %753 = vmatpush1.bf16.msra.mxu0 0
      %754 = vmatprep.subr.bf16.mxu0 0
      %755 = vmatpush1.bf16.msra.mxu0 0
      %756 = vmatprep.subr.bf16.mxu0 0
      %757 = vmatpush1.bf16.msra.mxu0 0
      %758 = vmatprep.subr.bf16.mxu0 0
      %759 = vmatpush1.bf16.msra.mxu0 0
      %760 = vmatprep.subr.bf16.mxu0 0
      %761 = vmatpush1.bf16.msra.mxu0 0
      %762 = vmatprep.subr.bf16.mxu0 0
      %763 = vmatpush1.bf16.msra.mxu0 0
      %764 = vmatprep.subr.bf16.mxu0 0
      %765 = vmatpush1.bf16.msra.mxu0 0
      %766 = vmatprep.mubr.bf16.mxu0 0
      %767 = vmatmul.mubr.bf16.gmra.mrb[0].mxu0 %v726
      %v768 = vpop.f32.mrb[0].mxu0
      %v769 = vadd.f32 0.0, %v768
      %v770 = vpop.f32.mrb[0].mxu0
      %v771 = vpop.f32.mrb[0].mxu0
      %v772 = vadd.f32 0.0, %v771
      %v773 = vpop.f32.mrb[0].mxu0
      %774 = vmatprep.mubr.bf16.mxu0 0
      %775 = vmatmul.mubr.bf16.gmra.mrb[0].mxu0 %v729
      %v776 = vpop.f32.mrb[0].mxu0
      %v777 = vadd.f32 0.0, %v776
      %v778 = vpop.f32.mrb[0].mxu0
      %v779 = vpop.f32.mrb[0].mxu0
      %v780 = vpop.f32.mrb[0].mxu0
      %781 = vdwg.mxu0
      %v782 = vadd.f32 %v703, %v769
      %v783 = vadd.f32 %v704, %v772
      %v784 = vadd.f32 %v705, %v777
      %v785 = vld [vmem:[%s225 + $0x10] sm:$0x7]
      %v786 = vld [vmem:[%s231 + $0x1c] sm:$0xf]
      %v788 = vunpack.c.l.b16 %v785
      %v789 = vpack.c.b16 %v788, %v717
      %vm790 = vsmask.f32 5376
      %v792 = vshrl.u32 %v719, 16
      %v794 = vrot.slane %v792, 2
      %v795 = vshll.u32 %v719, 16
      %v797 = vrot.slane %v795, 3
      %v798 = vor.u32 %v794, %v797
      %v800 = vshrl.u32 %v789, 16
      %v802 = vrot.slane %v800, 2
      %v803 = vshll.u32 %v789, 16
      %v805 = vrot.slane %v803, 3
      %v806 = vor.u32 %v802, %v805
      %v807 = vsel %vm790, %v798, %v806
      %v809 = vsel %vm265, %v807, 0
      %v812 = vsel %vm265, %v806, 0
      %v815 = vsel %vm272, %v786, 0
      %817 = vmatprep.subr.bf16.mxu0 0
      %818 = vmatpush1.bf16.msra.mxu0 %v815
      %819 = vmatprep.subr.bf16.mxu0 0
      %820 = vmatpush1.bf16.msra.mxu0 0
      %821 = vmatprep.subr.bf16.mxu0 0
      %822 = vmatpush1.bf16.msra.mxu0 0
      %823 = vmatprep.subr.bf16.mxu0 0
      %824 = vmatpush1.bf16.msra.mxu0 0
      %825 = vmatprep.subr.bf16.mxu0 0
      %826 = vmatpush1.bf16.msra.mxu0 0
      %827 = vmatprep.subr.bf16.mxu0 0
      %828 = vmatpush1.bf16.msra.mxu0 0
      %829 = vmatprep.subr.bf16.mxu0 0
      %830 = vmatpush1.bf16.msra.mxu0 0
      %831 = vmatprep.subr.bf16.mxu0 0
      %832 = vmatpush1.bf16.msra.mxu0 0
      %833 = vmatprep.subr.bf16.mxu0 0
      %834 = vmatpush1.bf16.msra.mxu0 0
      %835 = vmatprep.subr.bf16.mxu0 0
      %836 = vmatpush1.bf16.msra.mxu0 0
      %837 = vmatprep.subr.bf16.mxu0 0
      %838 = vmatpush1.bf16.msra.mxu0 0
      %839 = vmatprep.subr.bf16.mxu0 0
      %840 = vmatpush1.bf16.msra.mxu0 0
      %841 = vmatprep.subr.bf16.mxu0 0
      %842 = vmatpush1.bf16.msra.mxu0 0
      %843 = vmatprep.subr.bf16.mxu0 0
      %844 = vmatpush1.bf16.msra.mxu0 0
      %845 = vmatprep.subr.bf16.mxu0 0
      %846 = vmatpush1.bf16.msra.mxu0 0
      %847 = vmatprep.subr.bf16.mxu0 0
      %848 = vmatpush1.bf16.msra.mxu0 0
      %849 = vmatprep.mubr.bf16.mxu0 0
      %850 = vmatmul.mubr.bf16.gmra.mrb[0].mxu0 %v809
      %v851 = vpop.f32.mrb[0].mxu0
      %v852 = vadd.f32 0.0, %v851
      %v853 = vpop.f32.mrb[0].mxu0
      %v854 = vpop.f32.mrb[0].mxu0
      %v855 = vadd.f32 0.0, %v854
      %v856 = vpop.f32.mrb[0].mxu0
      %857 = vmatprep.mubr.bf16.mxu0 0
      %858 = vmatmul.mubr.bf16.gmra.mrb[0].mxu0 %v812
      %v859 = vpop.f32.mrb[0].mxu0
      %v860 = vadd.f32 0.0, %v859
      %v861 = vpop.f32.mrb[0].mxu0
      %v862 = vpop.f32.mrb[0].mxu0
      %v863 = vpop.f32.mrb[0].mxu0
      %864 = vdwg.mxu0
      %v865 = vadd.f32 %v782, %v852
      %v866 = vadd.f32 %v783, %v855
      %v867 = vadd.f32 %v784, %v860
      %v868 = vld [vmem:[%s225 + $0x4] sm:$0x8]
      %v869 = vld [vmem:[%s231 + $0x20] sm:$0xf]
      %v871 = vunpack.c.l.b16 %v868
      %v872 = vpack.c.b16 %v716, %v871
      %v873 = vrot.slane %v872, 3
      %v874 = vrot.slane %v789, 3
      %v875 = vsel %vm496, %v873, %v874
      %v877 = vsel %vm265, %v875, 0
      %v880 = vsel %vm265, %v874, 0
      %v883 = vsel %vm272, %v869, 0
      %885 = vmatprep.subr.bf16.mxu0 0
      %886 = vmatpush1.bf16.msra.mxu0 %v883
      %887 = vmatprep.subr.bf16.mxu0 0
      %888 = vmatpush1.bf16.msra.mxu0 0
      %889 = vmatprep.subr.bf16.mxu0 0
      %890 = vmatpush1.bf16.msra.mxu0 0
      %891 = vmatprep.subr.bf16.mxu0 0
      %892 = vmatpush1.bf16.msra.mxu0 0
      %893 = vmatprep.subr.bf16.mxu0 0
      %894 = vmatpush1.bf16.msra.mxu0 0
      %895 = vmatprep.subr.bf16.mxu0 0
      %896 = vmatpush1.bf16.msra.mxu0 0
      %897 = vmatprep.subr.bf16.mxu0 0
      %898 = vmatpush1.bf16.msra.mxu0 0
      %899 = vmatprep.subr.bf16.mxu0 0
      %900 = vmatpush1.bf16.msra.mxu0 0
      %901 = vmatprep.subr.bf16.mxu0 0
      %902 = vmatpush1.bf16.msra.mxu0 0
      %903 = vmatprep.subr.bf16.mxu0 0
      %904 = vmatpush1.bf16.msra.mxu0 0
      %905 = vmatprep.subr.bf16.mxu0 0
      %906 = vmatpush1.bf16.msra.mxu0 0
      %907 = vmatprep.subr.bf16.mxu0 0
      %908 = vmatpush1.bf16.msra.mxu0 0
      %909 = vmatprep.subr.bf16.mxu0 0
      %910 = vmatpush1.bf16.msra.mxu0 0
      %911 = vmatprep.subr.bf16.mxu0 0
      %912 = vmatpush1.bf16.msra.mxu0 0
      %913 = vmatprep.subr.bf16.mxu0 0
      %914 = vmatpush1.bf16.msra.mxu0 0
      %915 = vmatprep.subr.bf16.mxu0 0
      %916 = vmatpush1.bf16.msra.mxu0 0
      %917 = vmatprep.mubr.bf16.mxu0 0
      %918 = vmatmul.mubr.bf16.gmra.mrb[0].mxu0 %v877
      %v919 = vpop.f32.mrb[0].mxu0
      %v920 = vadd.f32 0.0, %v919
      %v921 = vpop.f32.mrb[0].mxu0
      %v922 = vpop.f32.mrb[0].mxu0
      %v923 = vadd.f32 0.0, %v922
      %v924 = vpop.f32.mrb[0].mxu0
      %925 = vmatprep.mubr.bf16.mxu0 0
      %926 = vmatmul.mubr.bf16.gmra.mrb[0].mxu0 %v880
      %v927 = vpop.f32.mrb[0].mxu0
      %v928 = vadd.f32 0.0, %v927
      %v929 = vpop.f32.mrb[0].mxu0
      %v930 = vpop.f32.mrb[0].mxu0
      %v931 = vpop.f32.mrb[0].mxu0
      %932 = vdwg.mxu0
      %v933 = vadd.f32 %v865, %v920
      %v934 = vadd.f32 %v866, %v923
      %v935 = vadd.f32 %v867, %v928
      %936 = vst.msk [vmem:[#allocation2] sm:$0xff] %vm265, %v933
      %937 = vst.msk [vmem:[#allocation2 + $0x8] sm:$0xff] %vm265, %v934
      %938 = vst.msk [vmem:[#allocation2 + $0x10] sm:$0xff] %vm265, %v935
      %p939 = scmp.eq.s32.totalorder %s21, 2
      // Predicated region
      $region37: #{multi_aggregation_forward.4} parent=31 // pred_check
        %p940 = pneg %p939
      $region38: #{multi_aggregation_forward.4} parent=31 // pred_check_branch
        %942 = sbr.rel (%p940) target = $region40
      $region39: #{multi_aggregation_forward.4} parent=31 // pred_region
        %v943 = vld [vmem:[#allocation2] sm:$0xff]
        %v944 = vld [vmem:[#allocation2 + $0x8] sm:$0xff]
        %v945 = vld [vmem:[#allocation2 + $0x10] sm:$0xff]
        %v946 = vld [vmem:[%s2] sm:$0x1]
        %v948 = vlaneseq
        %v949 = vshrl.u32 %v948, 7
        %v950 = vsub.s32 0, %v949
        %v951 = vrot.slane %v946, %v950
        %v953 = vadd.f32 %v943, %v951
        %v954 = vadd.f32 %v944, %v951
        %v955 = vadd.f32 %v945, %v951
        %v956 = vmax.f32 %v953, 0.0
        %v957 = vmax.f32 %v954, 0.0
        %v958 = vmax.f32 %v955, 0.0
        %v959 = vpack.c.bf16 %v957, %v956
        %v960 = vpack.c.bf16 %v958, %v958
        %v963 = vunpack.c.l.b16 %v959
        %v964 = vunpack.c.h.b16 %v959
        %v965 = vunpack.c.l.b16 %v960
        %v966 = vpack.c.b16 %v963, %v963
        %v967 = vpack.c.b16 %v964, %v964
        %v968 = vpack.c.b16 %v965, %v965
        %vm972 = vcmask 60416
        %973 = vst.msk [vmem:[%s240] sm:$0xf] %vm972, %v966
        %974 = vst.msk [vmem:[%s240 + $0x4] sm:$0xf] %vm972, %v967
        %975 = vst.msk [vmem:[%s240 + $0x8] sm:$0xf] %vm972, %v968
      $region40: #{multi_aggregation_forward.4} parent=31 // pred_fallthru
        _
      %p976 = scmp.lt.s32.totalorder %s19, 1
      %s977 = scalar_select %p976, %s19, 1
      %p978 = scmp.lt.s32.totalorder %s20, 3
      %s979 = scalar_select %p978, %s20, 3
      %s980 = smul.addr %s979, 3
      %s981 = smul.addr %s977, 12
      %s982 = sadd.s32 %s980, %s981
      %s983 = smul.addr %s982, 4
      %s984 = scalar_lea.vmem %s3, %s983
      // Predicated region
      $region41: #{multi_aggregation_forward.4} parent=31 // pred_check
        %p985 = pneg %p130
      $region42: #{multi_aggregation_forward.4} parent=31 // pred_check_branch
        %987 = sbr.rel (%p985) target = $region44
      $region43: #{multi_aggregation_forward.4} parent=31 // pred_region
        _
      $region44: #{multi_aggregation_forward.4} parent=31 // pred_fallthru
        _
    $region32: #{multi_aggregation_forward.4} parent=5 // pred_fallthru
      _
    %p988 = scmp.le.s32.totalorder 2, %s9
    // Predicated region
    $region45: #{multi_aggregation_forward.4} parent=5 // pred_check
      %p989 = pneg %p988
    $region46: #{multi_aggregation_forward.4} parent=5 // pred_check_branch
      %991 = sbr.rel (%p989) target = $region48
    $region47: #{multi_aggregation_forward.4} parent=5 // pred_region
      %s992 = ssub.s32 %s9, 2
      // Predicated region
      $region49: #{multi_aggregation_forward.4} parent=47 // pred_check
        %p993 = pneg %p136
      $region50: #{multi_aggregation_forward.4} parent=47 // pred_check_branch
        %995 = sbr.rel (%p993) target = $region52
      $region51: #{multi_aggregation_forward.4} parent=47 // pred_region
        %p996 = scmp.lt.s32.totalorder %s22, 1
        %s997 = scalar_select %p996, %s22, 1
        %p998 = scmp.lt.s32.totalorder %s23, 3
        %s999 = scalar_select %p998, %s23, 3
        %s1000 = smul.addr %s999, 3
        %s1001 = smul.addr %s997, 12
        %s1002 = sadd.s32 %s1000, %s1001
        %s1003 = smul.addr %s1002, 4
        %s1004 = scalar_lea.vmem %s3, %s1003
      $region52: #{multi_aggregation_forward.4} parent=47 // pred_fallthru
        _
    $region48: #{multi_aggregation_forward.4} parent=5 // pred_fallthru
      _
  $region6: #{multi_aggregation_forward.4} parent=0 // loop_footer
    %s13 = sadd.s32 1, %s9
  $region7: #{multi_aggregation_forward.4} parent=0 // loop_footer_branch
    %8 = sbr.rel target = $region3
  $region8: #{multi_aggregation_forward.4} parent=0 // loop_exit
    _

// kernel: multi_aggregation_forward.5
$region0: #{multi_aggregation_forward.5}
  #allocation0 [shape = 'u32[]', space=smem, size = 0x4, offset = 0x4, fixed_abs, tag = 'smem constant byte address 0x4 - core index']
  #allocation1 [shape = 'u32[144,128]{1,0:T(1,128)}', space=vmem, size = 0x12000, scoped, tag = 'internal scratch']
  #allocation2 [shape = 'f32[20,32]{1,0:T(8,128)}', space=vmem, size = 0x3000, scoped, tag = 'scratch operand']
  %s0 = inlined_call_operand.vmem [shape: bf16[2,5,26,8], index: 0, kind: input, shape index: {}]
  %s1 = inlined_call_operand.vmem [shape: bf16[2,4,20,32], index: 1, kind: input, shape index: {}]
  %s2 = inlined_call_operand.vmem [shape: bf16[2,32,32], index: 2, kind: input, shape index: {}]
  %s3 = inlined_call_operand.vmem [shape: bf16[32,32], index: 3, kind: input, shape index: {}]
  %s4 = inlined_call_operand.vmem [shape: f32[1,32], index: 4, kind: input, shape index: {}]
  %s5 = inlined_call_operand.vmem [shape: f32[2,4,20,32], index: 5, kind: output, shape index: {}]
  %s6 = sld [smem:[#allocation0]]
  $region61: #{multi_aggregation_forward.5} parent=0
    _
  %s8 = ssub.s32 1, %s6
  %s9 = scalar_select 0, %s8, %s6
  loop: start=0, step=1, limit=18
  $region2: #{multi_aggregation_forward.5} parent=0 // loop_pre_header
    _
  $region3: #{multi_aggregation_forward.5} parent=0 // loop_header
    %s11 = sphi 0, %s15
    %p12 = scmp.ge.s32.totalorder %s11, 18
    %s18 = sphi 0, %s37
    %s19 = sphi 0, %s33
    %s20 = sphi 0, %s29
    %s21 = sphi 0, %s18
    %s22 = sphi 0, %s19
    %s23 = sphi 0, %s20
    %s24 = sphi 0, %s21
    %s25 = sphi 0, %s22
    %s26 = sphi 0, %s23
    %s44 = sphi 0, %s46
    %s47 = sphi 0, %s44
    %s48 = sphi 0, %s47
    %s64 = sphi 0, %s48
    %s72 = sphi 0, %s74
    %s75 = sphi 0, %s72
    %s76 = sphi 0, %s75
    %s92 = sphi 0, %s76
    %s98 = sphi 0, %s100
    %s101 = sphi 0, %s98
    %s102 = sphi 0, %s101
    %s118 = sphi 0, %s102
    %s122 = sphi 0, %s122
    %s124 = sphi 0, %s122
    %s125 = sphi 0, %s124
    %s139 = sphi 0, %s125
    %s143 = sphi 0, %s143
    %s145 = sphi 0, %s143
    %s146 = sphi 0, %s145
    %s160 = sphi 0, %s146
    %s168 = sphi 0, %s170
    %s171 = sphi 0, %s168
    %s172 = sphi 0, %s171
    %s188 = sphi 0, %s172
  $region4: #{multi_aggregation_forward.5} parent=0 // loop_header_branch
    %14 = sbr.rel (%p12) target = $region8
  $region5: #{multi_aggregation_forward.5} parent=0 // loop_body
    %s16 = ssub.s32 %s11, 1
    %s17 = ssub.s32 %s11, 2
    %s27 = sadd.s32 1, %s20
    %p28 = scmp.ge.s32.totalorder %s27, 2
    %s29 = scalar_select %p28, 0, %s27
    %s30 = sadd.s32 1, %s19
    %s31 = scalar_select %p28, %s30, %s19
    %p32 = scmp.ge.s32.totalorder %s31, 4
    %s33 = scalar_select %p32, 0, %s31
    %s34 = sadd.s32 1, %s18
    %s35 = scalar_select %p32, %s34, %s18
    %p36 = scmp.ge.s32.totalorder %s35, 2
    %s37 = scalar_select %p36, 0, %s35
    %s38 = sadd.s32 %s19, %s20
    %s39 = sadd.s32 %s33, %s29
    %s40 = ssub.s32 %s18, %s37
    %s41 = ssub.s32 %s38, %s39
    %s42 = sor.u32 %s40, %s41
    %p43 = scmp.eq.s32.totalorder %s42, 0
    %s45 = sadd.s32 %s44, 1
    %s46 = scalar_select %p43, %s44, %s45
    %p49 = pneg %p43
    %p50 = scmp.eq.s32.totalorder %s11, 15
    %p51 = por %p49, %p50
    %p52 = scmp.ne.s32.totalorder %s44, %s47
    %p53 = scmp.eq.s32.totalorder %s11, 0
    %p54 = por %p52, %p53
    %p55 = scmp.ne.s32.totalorder %s44, %s47
    %p56 = scmp.eq.s32.totalorder %s16, 15
    %p57 = por %p55, %p56
    %p58 = scmp.ne.s32.totalorder %s47, %s48
    %p59 = scmp.eq.s32.totalorder %s16, 0
    %p60 = por %p58, %p59
    %p61 = scmp.ne.s32.totalorder %s47, %s48
    %p62 = scmp.eq.s32.totalorder %s17, 15
    %p63 = por %p61, %p62
    %p65 = scmp.ne.s32.totalorder %s48, %s64
    %p66 = scmp.eq.s32.totalorder %s17, 0
    %p67 = por %p65, %p66
    %s68 = ssub.s32 %s18, %s37
    %s69 = ssub.s32 %s19, %s33
    %s70 = sor.u32 %s68, %s69
    %p71 = scmp.eq.s32.totalorder %s70, 0
    %s73 = sadd.s32 %s72, 1
    %s74 = scalar_select %p71, %s72, %s73
    %p77 = pneg %p71
    %p78 = scmp.eq.s32.totalorder %s11, 15
    %p79 = por %p77, %p78
    %p80 = scmp.ne.s32.totalorder %s72, %s75
    %p81 = scmp.eq.s32.totalorder %s11, 0
    %p82 = por %p80, %p81
    %p83 = scmp.ne.s32.totalorder %s72, %s75
    %p84 = scmp.eq.s32.totalorder %s16, 15
    %p85 = por %p83, %p84
    %p86 = scmp.ne.s32.totalorder %s75, %s76
    %p87 = scmp.eq.s32.totalorder %s16, 0
    %p88 = por %p86, %p87
    %p89 = scmp.ne.s32.totalorder %s75, %s76
    %p90 = scmp.eq.s32.totalorder %s17, 15
    %p91 = por %p89, %p90
    %p93 = scmp.ne.s32.totalorder %s76, %s92
    %p94 = scmp.eq.s32.totalorder %s17, 0
    %p95 = por %p93, %p94
    %s96 = ssub.s32 %s20, %s29
    %p97 = scmp.eq.s32.totalorder %s96, 0
    %s99 = sadd.s32 %s98, 1
    %s100 = scalar_select %p97, %s98, %s99
    %p103 = pneg %p97
    %p104 = scmp.eq.s32.totalorder %s11, 15
    %p105 = por %p103, %p104
    %p106 = scmp.ne.s32.totalorder %s98, %s101
    %p107 = scmp.eq.s32.totalorder %s11, 0
    %p108 = por %p106, %p107
    %p109 = scmp.ne.s32.totalorder %s98, %s101
    %p110 = scmp.eq.s32.totalorder %s16, 15
    %p111 = por %p109, %p110
    %p112 = scmp.ne.s32.totalorder %s101, %s102
    %p113 = scmp.eq.s32.totalorder %s16, 0
    %p114 = por %p112, %p113
    %p115 = scmp.ne.s32.totalorder %s101, %s102
    %p116 = scmp.eq.s32.totalorder %s17, 15
    %p117 = por %p115, %p116
    %p119 = scmp.ne.s32.totalorder %s102, %s118
    %p120 = scmp.eq.s32.totalorder %s17, 0
    %p121 = por %p119, %p120
    %s123 = sadd.s32 %s122, 1
    %p126 = scmp.eq.s32.totalorder %s11, 15
    %p127 = scmp.ne.s32.totalorder %s122, %s124
    %p128 = scmp.eq.s32.totalorder %s11, 0
    %p129 = por %p127, %p128
    %p130 = scmp.ne.s32.totalorder %s122, %s124
    %p131 = scmp.eq.s32.totalorder %s16, 15
    %p132 = por %p130, %p131
    %p133 = scmp.ne.s32.totalorder %s124, %s125
    %p134 = scmp.eq.s32.totalorder %s16, 0
    %p135 = por %p133, %p134
    %p136 = scmp.ne.s32.totalorder %s124, %s125
    %p137 = scmp.eq.s32.totalorder %s17, 15
    %p138 = por %p136, %p137
    %p140 = scmp.ne.s32.totalorder %s125, %s139
    %p141 = scmp.eq.s32.totalorder %s17, 0
    %p142 = por %p140, %p141
    %s144 = sadd.s32 %s143, 1
    %p147 = scmp.eq.s32.totalorder %s11, 15
    %p148 = scmp.ne.s32.totalorder %s143, %s145
    %p149 = scmp.eq.s32.totalorder %s11, 0
    %p150 = por %p148, %p149
    %p151 = scmp.ne.s32.totalorder %s143, %s145
    %p152 = scmp.eq.s32.totalorder %s16, 15
    %p153 = por %p151, %p152
    %p154 = scmp.ne.s32.totalorder %s145, %s146
    %p155 = scmp.eq.s32.totalorder %s16, 0
    %p156 = por %p154, %p155
    %p157 = scmp.ne.s32.totalorder %s145, %s146
    %p158 = scmp.eq.s32.totalorder %s17, 15
    %p159 = por %p157, %p158
    %p161 = scmp.ne.s32.totalorder %s146, %s160
    %p162 = scmp.eq.s32.totalorder %s17, 0
    %p163 = por %p161, %p162
    %s164 = ssub.s32 %s18, %s37
    %s165 = ssub.s32 %s19, %s33
    %s166 = sor.u32 %s164, %s165
    %p167 = scmp.eq.s32.totalorder %s166, 0
    %s169 = sadd.s32 %s168, 1
    %s170 = scalar_select %p167, %s168, %s169
    %p173 = pneg %p167
    %p174 = scmp.eq.s32.totalorder %s11, 15
    %p175 = por %p173, %p174
    %p176 = scmp.ne.s32.totalorder %s168, %s171
    %p177 = scmp.eq.s32.totalorder %s11, 0
    %p178 = por %p176, %p177
    %p179 = scmp.ne.s32.totalorder %s168, %s171
    %p180 = scmp.eq.s32.totalorder %s16, 15
    %p181 = por %p179, %p180
    %p182 = scmp.ne.s32.totalorder %s171, %s172
    %p183 = scmp.eq.s32.totalorder %s16, 0
    %p184 = por %p182, %p183
    %p185 = scmp.ne.s32.totalorder %s171, %s172
    %p186 = scmp.eq.s32.totalorder %s17, 15
    %p187 = por %p185, %p186
    %p189 = scmp.ne.s32.totalorder %s172, %s188
    %p190 = scmp.eq.s32.totalorder %s17, 0
    %p191 = por %p189, %p190
    %p192 = scmp.le.s32.totalorder 1, %s11
    %p193 = scmp.lt.s32.totalorder %s11, 17
    %p194 = pnand %p192, %p193
    %p195 = pneg %p194
    // Predicated region
    $region9: #{multi_aggregation_forward.5} parent=5 // pred_check
      _
    $region10: #{multi_aggregation_forward.5} parent=5 // pred_check_branch
      %197 = sbr.rel (%p194) target = $region12
    $region11: #{multi_aggregation_forward.5} parent=5 // pred_region
      %s198 = ssub.s32 %s11, 1
      // Predicated region
      $region13: #{multi_aggregation_forward.5} parent=11 // pred_check
        %p199 = pneg %p135
      $region14: #{multi_aggregation_forward.5} parent=11 // pred_check_branch
        %201 = sbr.rel (%p199) target = $region16
      $region15: #{multi_aggregation_forward.5} parent=11 // pred_region
        _
      $region16: #{multi_aggregation_forward.5} parent=11 // pred_fallthru
        _
      // Predicated region
      $region17: #{multi_aggregation_forward.5} parent=11 // pred_check
        %p202 = pneg %p156
      $region18: #{multi_aggregation_forward.5} parent=11 // pred_check_branch
        %204 = sbr.rel (%p202) target = $region20
      $region19: #{multi_aggregation_forward.5} parent=11 // pred_region
        _
      $region20: #{multi_aggregation_forward.5} parent=11 // pred_fallthru
        _
    $region12: #{multi_aggregation_forward.5} parent=5 // pred_fallthru
      _
    %p205 = scmp.lt.s32.totalorder %s11, 16
    // Predicated region
    $region21: #{multi_aggregation_forward.5} parent=5 // pred_check
      %p206 = pneg %p205
    $region22: #{multi_aggregation_forward.5} parent=5 // pred_check_branch
      %208 = sbr.rel (%p206) target = $region24
    $region23: #{multi_aggregation_forward.5} parent=5 // pred_region
      // Predicated region
      $region25: #{multi_aggregation_forward.5} parent=23 // pred_check
        %p209 = pneg %p54
      $region26: #{multi_aggregation_forward.5} parent=23 // pred_check_branch
        %211 = sbr.rel (%p209) target = $region28
      $region27: #{multi_aggregation_forward.5} parent=23 // pred_region
        %s212 = sadd.s32 %s19, %s20
        %p213 = scmp.lt.s32.totalorder %s18, 1
        %s214 = scalar_select %p213, %s18, 1
        %p215 = scmp.lt.s32.totalorder %s212, 4
        %s216 = scalar_select %p215, %s212, 4
        %s217 = smul.addr %s216, 4
        %s218 = smul.addr %s214, 20
        %s219 = sadd.s32 %s217, %s218
        %s220 = smul.addr %s219, 4
        %s221 = scalar_lea.vmem %s0, %s220
        %s222 = sadd.s32 %s19, %s20
      $region28: #{multi_aggregation_forward.5} parent=23 // pred_fallthru
        _
      // Predicated region
      $region29: #{multi_aggregation_forward.5} parent=23 // pred_check
        %p223 = pneg %p82
      $region30: #{multi_aggregation_forward.5} parent=23 // pred_check_branch
        %225 = sbr.rel (%p223) target = $region32
      $region31: #{multi_aggregation_forward.5} parent=23 // pred_region
        %p226 = scmp.lt.s32.totalorder %s18, 1
        %s227 = scalar_select %p226, %s18, 1
        %p228 = scmp.lt.s32.totalorder %s19, 3
        %s229 = scalar_select %p228, %s19, 3
        %s230 = smul.addr %s229, 3
        %s231 = smul.addr %s227, 12
        %s232 = sadd.s32 %s230, %s231
        %s233 = smul.addr %s232, 4
        %s234 = scalar_lea.vmem %s1, %s233
      $region32: #{multi_aggregation_forward.5} parent=23 // pred_fallthru
        _
      // Predicated region
      $region33: #{multi_aggregation_forward.5} parent=23 // pred_check
        %p235 = pneg %p108
      $region34: #{multi_aggregation_forward.5} parent=23 // pred_check_branch
        %237 = sbr.rel (%p235) target = $region36
      $region35: #{multi_aggregation_forward.5} parent=23 // pred_region
        %p238 = scmp.lt.s32.totalorder %s20, 1
        %s239 = scalar_select %p238, %s20, 1
        %s240 = smul.addr %s239, 4
        %s241 = smul.addr %s240, 4
        %s242 = scalar_lea.vmem %s2, %s241
      $region36: #{multi_aggregation_forward.5} parent=23 // pred_fallthru
        _
    $region24: #{multi_aggregation_forward.5} parent=5 // pred_fallthru
      _
    %p243 = scmp.le.s32.totalorder 1, %s11
    %p244 = scmp.lt.s32.totalorder %s11, 17
    %p245 = pnand %p243, %p244
    %p246 = pneg %p245
    // Predicated region
    $region37: #{multi_aggregation_forward.5} parent=5 // pred_check
      _
    $region38: #{multi_aggregation_forward.5} parent=5 // pred_check_branch
      %248 = sbr.rel (%p245) target = $region40
    $region39: #{multi_aggregation_forward.5} parent=5 // pred_region
      %s249 = ssub.s32 %s11, 1
      %s250 = sadd.s32 %s22, %s23
      %p251 = scmp.lt.s32.totalorder %s21, 1
      %s252 = scalar_select %p251, %s21, 1
      %p253 = scmp.lt.s32.totalorder %s250, 4
      %s254 = scalar_select %p253, %s250, 4
      %s255 = smul.addr %s254, 4
      %s256 = smul.addr %s252, 20
      %s257 = sadd.s32 %s255, %s256
      %s258 = smul.addr %s257, 4
      %s259 = scalar_lea.vmem %s0, %s258
      %p260 = pneg %p60
      %p261 = pneg %p57
      %p262 = scmp.lt.s32.totalorder %s21, 1
      %s263 = scalar_select %p262, %s21, 1
      %p264 = scmp.lt.s32.totalorder %s22, 3
      %s265 = scalar_select %p264, %s22, 3
      %s266 = smul.addr %s265, 3
      %s267 = smul.addr %s263, 12
      %s268 = sadd.s32 %s266, %s267
      %s269 = smul.addr %s268, 4
      %s270 = scalar_lea.vmem %s1, %s269
      %p271 = pneg %p88
      %p272 = pneg %p85
      %p273 = scmp.lt.s32.totalorder %s23, 1
      %s274 = scalar_select %p273, %s23, 1
      %s275 = smul.addr %s274, 4
      %s276 = smul.addr %s275, 4
      %s277 = scalar_lea.vmem %s2, %s276
      %p278 = pneg %p114
      %p279 = pneg %p111
      %p280 = pneg %p135
      %p281 = pneg %p132
      %p282 = pneg %p156
      %p283 = pneg %p153
      %p284 = pneg %p184
      %p285 = pneg %p181
      %p286 = scmp.lt.s32.totalorder %s21, 1
      %s287 = scalar_select %p286, %s21, 1
      %p288 = scmp.lt.s32.totalorder %s22, 3
      %s289 = scalar_select %p288, %s22, 3
      %s290 = smul.addr %s289, 3
      %s291 = smul.addr %s287, 12
      %s292 = sadd.s32 %s290, %s291
      %s293 = smul.addr %s292, 8
      %s294 = scalar_lea.vmem %s5, %s293
      %s295 = sadd.s32 %s22, %s23
      %p296 = scmp.lt.s32.totalorder %s21, 1
      %s297 = scalar_select %p296, %s21, 1
      %p298 = scmp.lt.s32.totalorder %s295, 4
      %s299 = scalar_select %p298, %s295, 4
      %s300 = smul.addr %s299, 4
      %s301 = smul.addr %s297, 20
      %s302 = sadd.s32 %s300, %s301
      %s303 = smul.addr %s302, 4
      %s304 = scalar_lea.vmem %s0, %s303
      %s305 = sadd.s32 %s22, %s23
      %p306 = scmp.lt.s32.totalorder %s21, 1
      %s307 = scalar_select %p306, %s21, 1
      %p308 = scmp.lt.s32.totalorder %s22, 3
      %s309 = scalar_select %p308, %s22, 3
      %s310 = smul.addr %s309, 3
      %s311 = smul.addr %s307, 12
      %s312 = sadd.s32 %s310, %s311
      %s313 = smul.addr %s312, 4
      %s314 = scalar_lea.vmem %s1, %s313
      %p315 = scmp.lt.s32.totalorder %s23, 1
      %s316 = scalar_select %p315, %s23, 1
      %s317 = smul.addr %s316, 4
      %s318 = smul.addr %s317, 4
      %s319 = scalar_lea.vmem %s2, %s318
      %p320 = scmp.lt.s32.totalorder %s21, 1
      %s321 = scalar_select %p320, %s21, 1
      %p322 = scmp.lt.s32.totalorder %s22, 3
      %s323 = scalar_select %p322, %s22, 3
      %s324 = smul.addr %s323, 3
      %s325 = smul.addr %s321, 12
      %s326 = sadd.s32 %s324, %s325
      %s327 = smul.addr %s326, 8
      %s328 = scalar_lea.vmem %s5, %s327
      %p330 = scmp.eq.s32.totalorder %s23, 0
      // Predicated region
      $region41: #{multi_aggregation_forward.5} parent=39 // pred_check
        %p331 = pneg %p330
      $region42: #{multi_aggregation_forward.5} parent=39 // pred_check_branch
        %333 = sbr.rel (%p331) target = $region44
      $region43: #{multi_aggregation_forward.5} parent=39 // pred_region
        %v334 = vld [vmem:[%s314] sm:$0xf]
        %v335 = vld [vmem:[%s314 + $0x4] sm:$0xf]
        %v336 = vld [vmem:[%s314 + $0x8] sm:$0x3]
        %v337 = vld [vmem:[%s3] sm:$0xf]
        %v338 = vld [vmem:[%s3 + $0x4] sm:$0xf]
        %v339 = vld [vmem:[%s3 + $0x8] sm:$0xf]
        %v340 = vld [vmem:[%s3 + $0xc] sm:$0xf]
        %v344 = vunpack.c.l.b16 %v334
        %v345 = vunpack.c.l.b16 %v335
        %v346 = vunpack.c.l.b16 %v336
        %v347 = vpack.c.b16 %v345, %v344
        %v348 = vpack.c.b16 %v346, %v346
        %v353 = vunpack.c.l.b16 %v337
        %v354 = vunpack.c.l.b16 %v338
        %v355 = vunpack.c.l.b16 %v339
        %v356 = vunpack.c.l.b16 %v340
        %v357 = vpack.c.b16 %v354, %v353
        %v358 = vpack.c.b16 %v356, %v355
        %vm361 = vcmask 261120
        %v363 = vsel %vm361, %v347, 0
        %v366 = vsel %vm361, %v348, 0
        %368 = vmatprep.subr.bf16.mxu0 0
        %369 = vmatpush1.bf16.msra.mxu0 %v357
        %370 = vmatprep.subr.bf16.mxu0 0
        %371 = vmatpush1.bf16.msra.mxu0 %v358
        %372 = vmatprep.subr.bf16.mxu0 0
        %373 = vmatpush1.bf16.msra.mxu0 0
        %374 = vmatprep.subr.bf16.mxu0 0
        %375 = vmatpush1.bf16.msra.mxu0 0
        %376 = vmatprep.subr.bf16.mxu0 0
        %377 = vmatpush1.bf16.msra.mxu0 0
        %378 = vmatprep.subr.bf16.mxu0 0
        %379 = vmatpush1.bf16.msra.mxu0 0
        %380 = vmatprep.subr.bf16.mxu0 0
        %381 = vmatpush1.bf16.msra.mxu0 0
        %382 = vmatprep.subr.bf16.mxu0 0
        %383 = vmatpush1.bf16.msra.mxu0 0
        %384 = vmatprep.subr.bf16.mxu0 0
        %385 = vmatpush1.bf16.msra.mxu0 0
        %386 = vmatprep.subr.bf16.mxu0 0
        %387 = vmatpush1.bf16.msra.mxu0 0
        %388 = vmatprep.subr.bf16.mxu0 0
        %389 = vmatpush1.bf16.msra.mxu0 0
        %390 = vmatprep.subr.bf16.mxu0 0
        %391 = vmatpush1.bf16.msra.mxu0 0
        %392 = vmatprep.subr.bf16.mxu0 0
        %393 = vmatpush1.bf16.msra.mxu0 0
        %394 = vmatprep.subr.bf16.mxu0 0
        %395 = vmatpush1.bf16.msra.mxu0 0
        %396 = vmatprep.subr.bf16.mxu0 0
        %397 = vmatpush1.bf16.msra.mxu0 0
        %398 = vmatprep.subr.bf16.mxu0 0
        %399 = vmatpush1.bf16.msra.mxu0 0
        %400 = vmatprep.mubr.bf16.mxu0 0
        %401 = vmatmul.mubr.bf16.gmra.mrb[0].mxu0 %v363
        %v402 = vpop.f32.mrb[0].mxu0
        %v403 = vadd.f32 0.0, %v402
        %v404 = vpop.f32.mrb[0].mxu0
        %v405 = vpop.f32.mrb[0].mxu0
        %v406 = vadd.f32 0.0, %v405
        %v407 = vpop.f32.mrb[0].mxu0
        %408 = vmatprep.mubr.bf16.mxu0 0
        %409 = vmatmul.mubr.bf16.gmra.mrb[0].mxu0 %v366
        %v410 = vpop.f32.mrb[0].mxu0
        %v411 = vadd.f32 0.0, %v410
        %v412 = vpop.f32.mrb[0].mxu0
        %v413 = vpop.f32.mrb[0].mxu0
        %v414 = vpop.f32.mrb[0].mxu0
        %415 = vdwg.mxu0
        %416 = vst.msk [vmem:[#allocation2] sm:$0xff] %vm361, %v403
        %417 = vst.msk [vmem:[#allocation2 + $0x8] sm:$0xff] %vm361, %v406
        %vm418 = vcmask 257024
        %419 = vst.msk [vmem:[#allocation2 + $0x10] sm:$0xf] %vm418, %v411
      $region44: #{multi_aggregation_forward.5} parent=39 // pred_fallthru
        _
      %v420 = vld [vmem:[#allocation2] sm:$0xff]
      %v421 = vld [vmem:[#allocation2 + $0x8] sm:$0xff]
      %v422 = vld [vmem:[#allocation2 + $0x10] sm:$0xf]
      %v423 = vld [vmem:[%s304] sm:$0xf]
      %v424 = vld [vmem:[%s304 + $0x4] sm:$0xf]
      %v425 = vld [vmem:[%s304 + $0x8] sm:$0x3]
      %v426 = vld [vmem:[%s319] sm:$0xf]
      %v430 = vunpack.c.l.b16 %v423
      %v431 = vunpack.c.l.b16 %v424
      %v432 = vunpack.c.l.b16 %v425
      %v433 = vpack.c.b16 %v431, %v430
      %v434 = vpack.c.b16 %v432, %v432
      %vm435 = vcmask 64512
      %v437 = vsel %vm435, %v433, 0
      %v440 = vsel %vm435, %v434, 0
      %vm442 = vcmask 1043456
      %v444 = vsel %vm442, %v426, 0
      %446 = vmatprep.subr.bf16.mxu0 0
      %447 = vmatpush1.bf16.msra.mxu0 %v444
      %448 = vmatprep.subr.bf16.mxu0 0
      %449 = vmatpush1.bf16.msra.mxu0 0
      %450 = vmatprep.subr.bf16.mxu0 0
      %451 = vmatpush1.bf16.msra.mxu0 0
      %452 = vmatprep.subr.bf16.mxu0 0
      %453 = vmatpush1.bf16.msra.mxu0 0
      %454 = vmatprep.subr.bf16.mxu0 0
      %455 = vmatpush1.bf16.msra.mxu0 0
      %456 = vmatprep.subr.bf16.mxu0 0
      %457 = vmatpush1.bf16.msra.mxu0 0
      %458 = vmatprep.subr.bf16.mxu0 0
      %459 = vmatpush1.bf16.msra.mxu0 0
      %460 = vmatprep.subr.bf16.mxu0 0
      %461 = vmatpush1.bf16.msra.mxu0 0
      %462 = vmatprep.subr.bf16.mxu0 0
      %463 = vmatpush1.bf16.msra.mxu0 0
      %464 = vmatprep.subr.bf16.mxu0 0
      %465 = vmatpush1.bf16.msra.mxu0 0
      %466 = vmatprep.subr.bf16.mxu0 0
      %467 = vmatpush1.bf16.msra.mxu0 0
      %468 = vmatprep.subr.bf16.mxu0 0
      %469 = vmatpush1.bf16.msra.mxu0 0
      %470 = vmatprep.subr.bf16.mxu0 0
      %471 = vmatpush1.bf16.msra.mxu0 0
      %472 = vmatprep.subr.bf16.mxu0 0
      %473 = vmatpush1.bf16.msra.mxu0 0
      %474 = vmatprep.subr.bf16.mxu0 0
      %475 = vmatpush1.bf16.msra.mxu0 0
      %476 = vmatprep.subr.bf16.mxu0 0
      %477 = vmatpush1.bf16.msra.mxu0 0
      %478 = vmatprep.mubr.bf16.mxu0 0
      %479 = vmatmul.mubr.bf16.gmra.mrb[0].mxu0 %v437
      %v480 = vpop.f32.mrb[0].mxu0
      %v481 = vadd.f32 0.0, %v480
      %v482 = vpop.f32.mrb[0].mxu0
      %v483 = vpop.f32.mrb[0].mxu0
      %v484 = vadd.f32 0.0, %v483
      %v485 = vpop.f32.mrb[0].mxu0
      %486 = vmatprep.mubr.bf16.mxu0 0
      %487 = vmatmul.mubr.bf16.gmra.mrb[0].mxu0 %v440
      %v488 = vpop.f32.mrb[0].mxu0
      %v489 = vadd.f32 0.0, %v488
      %v490 = vpop.f32.mrb[0].mxu0
      %v491 = vpop.f32.mrb[0].mxu0
      %v492 = vpop.f32.mrb[0].mxu0
      %493 = vdwg.mxu0
      %v494 = vadd.f32 %v420, %v481
      %v495 = vadd.f32 %v421, %v484
      %v496 = vadd.f32 %v422, %v489
      %v497 = vld [vmem:[%s304 + $0x8] sm:$0x7]
      %v498 = vld [vmem:[%s319 + $0x4] sm:$0xf]
      %v500 = vunpack.c.l.b16 %v497
      %v501 = vpack.c.b16 %v500, %v500
      %vm502 = vsmask.f32 7424
      %v503 = vshrl.u32 %v433, 16
      %v505 = vshll.u32 %v433, 16
      %v507 = vrot.slane %v505, 1
      %v508 = vor.u32 %v503, %v507
      %v510 = vshll.u32 %v501, 16
      %v512 = vrot.slane %v510, 1
      %v513 = vsel %vm502, %v508, %v512
      %v514 = vshrl.u32 %v501, 16
      %v516 = vor.u32 %v514, %v512
      %v518 = vsel %vm435, %v513, 0
      %v521 = vsel %vm435, %v516, 0
      %v524 = vsel %vm442, %v498, 0
      %526 = vmatprep.subr.bf16.mxu0 0
      %527 = vmatpush1.bf16.msra.mxu0 %v524
      %528 = vmatprep.subr.bf16.mxu0 0
      %529 = vmatpush1.bf16.msra.mxu0 0
      %530 = vmatprep.subr.bf16.mxu0 0
      %531 = vmatpush1.bf16.msra.mxu0 0
      %532 = vmatprep.subr.bf16.mxu0 0
      %533 = vmatpush1.bf16.msra.mxu0 0
      %534 = vmatprep.subr.bf16.mxu0 0
      %535 = vmatpush1.bf16.msra.mxu0 0
      %536 = vmatprep.subr.bf16.mxu0 0
      %537 = vmatpush1.bf16.msra.mxu0 0
      %538 = vmatprep.subr.bf16.mxu0 0
      %539 = vmatpush1.bf16.msra.mxu0 0
      %540 = vmatprep.subr.bf16.mxu0 0
      %541 = vmatpush1.bf16.msra.mxu0 0
      %542 = vmatprep.subr.bf16.mxu0 0
      %543 = vmatpush1.bf16.msra.mxu0 0
      %544 = vmatprep.subr.bf16.mxu0 0
      %545 = vmatpush1.bf16.msra.mxu0 0
      %546 = vmatprep.subr.bf16.mxu0 0
      %547 = vmatpush1.bf16.msra.mxu0 0
      %548 = vmatprep.subr.bf16.mxu0 0
      %549 = vmatpush1.bf16.msra.mxu0 0
      %550 = vmatprep.subr.bf16.mxu0 0
      %551 = vmatpush1.bf16.msra.mxu0 0
      %552 = vmatprep.subr.bf16.mxu0 0
      %553 = vmatpush1.bf16.msra.mxu0 0
      %554 = vmatprep.subr.bf16.mxu0 0
      %555 = vmatpush1.bf16.msra.mxu0 0
      %556 = vmatprep.subr.bf16.mxu0 0
      %557 = vmatpush1.bf16.msra.mxu0 0
      %558 = vmatprep.mubr.bf16.mxu0 0
      %559 = vmatmul.mubr.bf16.gmra.mrb[0].mxu0 %v518
      %v560 = vpop.f32.mrb[0].mxu0
      %v561 = vadd.f32 0.0, %v560
      %v562 = vpop.f32.mrb[0].mxu0
      %v563 = vpop.f32.mrb[0].mxu0
      %v564 = vadd.f32 0.0, %v563
      %v565 = vpop.f32.mrb[0].mxu0
      %566 = vmatprep.mubr.bf16.mxu0 0
      %567 = vmatmul.mubr.bf16.gmra.mrb[0].mxu0 %v521
      %v568 = vpop.f32.mrb[0].mxu0
      %v569 = vadd.f32 0.0, %v568
      %v570 = vpop.f32.mrb[0].mxu0
      %v571 = vpop.f32.mrb[0].mxu0
      %v572 = vpop.f32.mrb[0].mxu0
      %573 = vdwg.mxu0
      %v574 = vadd.f32 %v494, %v561
      %v575 = vadd.f32 %v495, %v564
      %v576 = vadd.f32 %v496, %v569
      %v577 = vld [vmem:[%s304] sm:$0xc]
      %v578 = vld [vmem:[%s304 + $0x4] sm:$0xf]
      %v579 = vld [vmem:[%s304 + $0x8] sm:$0xf]
      %v580 = vld [vmem:[%s304 + $0xc] sm:$0x1]
      %v581 = vld [vmem:[%s319 + $0x8] sm:$0xf]
      %v586 = vunpack.c.l.b16 %v577
      %v587 = vunpack.c.l.b16 %v578
      %v588 = vunpack.c.l.b16 %v579
      %v589 = vunpack.c.l.b16 %v580
      %v590 = vpack.c.b16 %v587, %v586
      %v591 = vpack.c.b16 %v589, %v588
      %vm592 = vsmask.f32 5376
      %v594 = vshrl.u32 %v590, 16
      %v596 = vrot.slane %v594, 2
      %v597 = vshll.u32 %v590, 16
      %v599 = vrot.slane %v597, 3
      %v600 = vor.u32 %v596, %v599
      %v602 = vshrl.u32 %v591, 16
      %v604 = vrot.slane %v602, 2
      %v605 = vshll.u32 %v591, 16
      %v607 = vrot.slane %v605, 3
      %v608 = vor.u32 %v604, %v607
      %v609 = vsel %vm592, %v600, %v608
      %v611 = vsel %vm435, %v609, 0
      %v614 = vsel %vm435, %v608, 0
      %v617 = vsel %vm442, %v581, 0
      %619 = vmatprep.subr.bf16.mxu0 0
      %620 = vmatpush1.bf16.msra.mxu0 %v617
      %621 = vmatprep.subr.bf16.mxu0 0
      %622 = vmatpush1.bf16.msra.mxu0 0
      %623 = vmatprep.subr.bf16.mxu0 0
      %624 = vmatpush1.bf16.msra.mxu0 0
      %625 = vmatprep.subr.bf16.mxu0 0
      %626 = vmatpush1.bf16.msra.mxu0 0
      %627 = vmatprep.subr.bf16.mxu0 0
      %628 = vmatpush1.bf16.msra.mxu0 0
      %629 = vmatprep.subr.bf16.mxu0 0
      %630 = vmatpush1.bf16.msra.mxu0 0
      %631 = vmatprep.subr.bf16.mxu0 0
      %632 = vmatpush1.bf16.msra.mxu0 0
      %633 = vmatprep.subr.bf16.mxu0 0
      %634 = vmatpush1.bf16.msra.mxu0 0
      %635 = vmatprep.subr.bf16.mxu0 0
      %636 = vmatpush1.bf16.msra.mxu0 0
      %637 = vmatprep.subr.bf16.mxu0 0
      %638 = vmatpush1.bf16.msra.mxu0 0
      %639 = vmatprep.subr.bf16.mxu0 0
      %640 = vmatpush1.bf16.msra.mxu0 0
      %641 = vmatprep.subr.bf16.mxu0 0
      %642 = vmatpush1.bf16.msra.mxu0 0
      %643 = vmatprep.subr.bf16.mxu0 0
      %644 = vmatpush1.bf16.msra.mxu0 0
      %645 = vmatprep.subr.bf16.mxu0 0
      %646 = vmatpush1.bf16.msra.mxu0 0
      %647 = vmatprep.subr.bf16.mxu0 0
      %648 = vmatpush1.bf16.msra.mxu0 0
      %649 = vmatprep.subr.bf16.mxu0 0
      %650 = vmatpush1.bf16.msra.mxu0 0
      %651 = vmatprep.mubr.bf16.mxu0 0
      %652 = vmatmul.mubr.bf16.gmra.mrb[0].mxu0 %v611
      %v653 = vpop.f32.mrb[0].mxu0
      %v654 = vadd.f32 0.0, %v653
      %v655 = vpop.f32.mrb[0].mxu0
      %v656 = vpop.f32.mrb[0].mxu0
      %v657 = vadd.f32 0.0, %v656
      %v658 = vpop.f32.mrb[0].mxu0
      %659 = vmatprep.mubr.bf16.mxu0 0
      %660 = vmatmul.mubr.bf16.gmra.mrb[0].mxu0 %v614
      %v661 = vpop.f32.mrb[0].mxu0
      %v662 = vadd.f32 0.0, %v661
      %v663 = vpop.f32.mrb[0].mxu0
      %v664 = vpop.f32.mrb[0].mxu0
      %v665 = vpop.f32.mrb[0].mxu0
      %666 = vdwg.mxu0
      %v667 = vadd.f32 %v574, %v654
      %v668 = vadd.f32 %v575, %v657
      %v669 = vadd.f32 %v576, %v662
      %v670 = vld [vmem:[%s304] sm:$0x8]
      %v671 = vld [vmem:[%s319 + $0xc] sm:$0xf]
      %v673 = vunpack.c.l.b16 %v670
      %v674 = vpack.c.b16 %v587, %v673
      %vm675 = vcmask 1044480
      %v676 = vrot.slane %v674, 3
      %v677 = vrot.slane %v591, 3
      %v678 = vsel %vm675, %v676, %v677
      %v680 = vsel %vm435, %v678, 0
      %v683 = vsel %vm435, %v677, 0
      %v686 = vsel %vm442, %v671, 0
      %688 = vmatprep.subr.bf16.mxu0 0
      %689 = vmatpush1.bf16.msra.mxu0 %v686
      %690 = vmatprep.subr.bf16.mxu0 0
      %691 = vmatpush1.bf16.msra.mxu0 0
      %692 = vmatprep.subr.bf16.mxu0 0
      %693 = vmatpush1.bf16.msra.mxu0 0
      %694 = vmatprep.subr.bf16.mxu0 0
      %695 = vmatpush1.bf16.msra.mxu0 0
      %696 = vmatprep.subr.bf16.mxu0 0
      %697 = vmatpush1.bf16.msra.mxu0 0
      %698 = vmatprep.subr.bf16.mxu0 0
      %699 = vmatpush1.bf16.msra.mxu0 0
      %700 = vmatprep.subr.bf16.mxu0 0
      %701 = vmatpush1.bf16.msra.mxu0 0
      %702 = vmatprep.subr.bf16.mxu0 0
      %703 = vmatpush1.bf16.msra.mxu0 0
      %704 = vmatprep.subr.bf16.mxu0 0
      %705 = vmatpush1.bf16.msra.mxu0 0
      %706 = vmatprep.subr.bf16.mxu0 0
      %707 = vmatpush1.bf16.msra.mxu0 0
      %708 = vmatprep.subr.bf16.mxu0 0
      %709 = vmatpush1.bf16.msra.mxu0 0
      %710 = vmatprep.subr.bf16.mxu0 0
      %711 = vmatpush1.bf16.msra.mxu0 0
      %712 = vmatprep.subr.bf16.mxu0 0
      %713 = vmatpush1.bf16.msra.mxu0 0
      %714 = vmatprep.subr.bf16.mxu0 0
      %715 = vmatpush1.bf16.msra.mxu0 0
      %716 = vmatprep.subr.bf16.mxu0 0
      %717 = vmatpush1.bf16.msra.mxu0 0
      %718 = vmatprep.subr.bf16.mxu0 0
      %719 = vmatpush1.bf16.msra.mxu0 0
      %720 = vmatprep.mubr.bf16.mxu0 0
      %721 = vmatmul.mubr.bf16.gmra.mrb[0].mxu0 %v680
      %v722 = vpop.f32.mrb[0].mxu0
      %v723 = vadd.f32 0.0, %v722
      %v724 = vpop.f32.mrb[0].mxu0
      %v725 = vpop.f32.mrb[0].mxu0
      %v726 = vadd.f32 0.0, %v725
      %v727 = vpop.f32.mrb[0].mxu0
      %728 = vmatprep.mubr.bf16.mxu0 0
      %729 = vmatmul.mubr.bf16.gmra.mrb[0].mxu0 %v683
      %v730 = vpop.f32.mrb[0].mxu0
      %v731 = vadd.f32 0.0, %v730
      %v732 = vpop.f32.mrb[0].mxu0
      %v733 = vpop.f32.mrb[0].mxu0
      %v734 = vpop.f32.mrb[0].mxu0
      %735 = vdwg.mxu0
      %v736 = vadd.f32 %v667, %v723
      %v737 = vadd.f32 %v668, %v726
      %v738 = vadd.f32 %v669, %v731
      %vm739 = vcmask 261120
      %740 = vst.msk [vmem:[#allocation2] sm:$0xff] %vm739, %v736
      %741 = vst.msk [vmem:[#allocation2 + $0x8] sm:$0xff] %vm739, %v737
      %vm742 = vcmask 257024
      %743 = vst.msk [vmem:[#allocation2 + $0x10] sm:$0xf] %vm742, %v738
      %p744 = scmp.eq.s32.totalorder %s23, 1
      // Predicated region
      $region45: #{multi_aggregation_forward.5} parent=39 // pred_check
        %p745 = pneg %p744
      $region46: #{multi_aggregation_forward.5} parent=39 // pred_check_branch
        %747 = sbr.rel (%p745) target = $region48
      $region47: #{multi_aggregation_forward.5} parent=39 // pred_region
        %v748 = vld [vmem:[#allocation2] sm:$0xff]
        %v749 = vld [vmem:[#allocation2 + $0x8] sm:$0xff]
        %v750 = vld [vmem:[#allocation2 + $0x10] sm:$0xf]
        %v751 = vld [vmem:[%s4] sm:$0x1]
        %v753 = vlaneseq
        %v754 = vshrl.u32 %v753, 7
        %v755 = vsub.s32 0, %v754
        %v756 = vrot.slane %v751, %v755
        %v758 = vadd.f32 %v748, %v756
        %v759 = vadd.f32 %v749, %v756
        %v760 = vadd.f32 %v750, %v756
        %v761 = vmax.f32 %v758, 0.0
        %v762 = vmax.f32 %v759, 0.0
        %v763 = vmax.f32 %v760, 0.0
        %764 = vst.msk [vmem:[%s328] sm:$0xff] %vm739, %v761
        %765 = vst.msk [vmem:[%s328 + $0x8] sm:$0xff] %vm739, %v762
        %766 = vst.msk [vmem:[%s328 + $0x10] sm:$0xf] %vm742, %v763
      $region48: #{multi_aggregation_forward.5} parent=39 // pred_fallthru
        _
      %p767 = scmp.lt.s32.totalorder %s21, 1
      %s768 = scalar_select %p767, %s21, 1
      %p769 = scmp.lt.s32.totalorder %s22, 3
      %s770 = scalar_select %p769, %s22, 3
      %s771 = smul.addr %s770, 3
      %s772 = smul.addr %s768, 12
      %s773 = sadd.s32 %s771, %s772
      %s774 = smul.addr %s773, 8
      %s775 = scalar_lea.vmem %s5, %s774
      // Predicated region
      $region49: #{multi_aggregation_forward.5} parent=39 // pred_check
        %p776 = pneg %p181
      $region50: #{multi_aggregation_forward.5} parent=39 // pred_check_branch
        %778 = sbr.rel (%p776) target = $region52
      $region51: #{multi_aggregation_forward.5} parent=39 // pred_region
        _
      $region52: #{multi_aggregation_forward.5} parent=39 // pred_fallthru
        _
    $region40: #{multi_aggregation_forward.5} parent=5 // pred_fallthru
      _
    %p779 = scmp.le.s32.totalorder 2, %s11
    // Predicated region
    $region53: #{multi_aggregation_forward.5} parent=5 // pred_check
      %p780 = pneg %p779
    $region54: #{multi_aggregation_forward.5} parent=5 // pred_check_branch
      %782 = sbr.rel (%p780) target = $region56
    $region55: #{multi_aggregation_forward.5} parent=5 // pred_region
      %s783 = ssub.s32 %s11, 2
      // Predicated region
      $region57: #{multi_aggregation_forward.5} parent=55 // pred_check
        %p784 = pneg %p187
      $region58: #{multi_aggregation_forward.5} parent=55 // pred_check_branch
        %786 = sbr.rel (%p784) target = $region60
      $region59: #{multi_aggregation_forward.5} parent=55 // pred_region
        %p787 = scmp.lt.s32.totalorder %s24, 1
        %s788 = scalar_select %p787, %s24, 1
        %p789 = scmp.lt.s32.totalorder %s25, 3
        %s790 = scalar_select %p789, %s25, 3
        %s791 = smul.addr %s790, 3
        %s792 = smul.addr %s788, 12
        %s793 = sadd.s32 %s791, %s792
        %s794 = smul.addr %s793, 8
        %s795 = scalar_lea.vmem %s5, %s794
      $region60: #{multi_aggregation_forward.5} parent=55 // pred_fallthru
        _
    $region56: #{multi_aggregation_forward.5} parent=5 // pred_fallthru
      _
  $region6: #{multi_aggregation_forward.5} parent=0 // loop_footer
    %s15 = sadd.s32 1, %s11
  $region7: #{multi_aggregation_forward.5} parent=0 // loop_footer_branch
    %10 = sbr.rel target = $region3
  $region8: #{multi_aggregation_forward.5} parent=0 // loop_exit
    _

</llo_original>
